<compile_context>
chip_gen: v6e
topology: v6e:2x2x1
jax: 0.10.0
libtpu: 0.0.40
codegen_flags: <defaults>
</compile_context>

<pallas_src>
import jax
import jax.numpy as jnp
from jax.experimental import pallas as pl
from jax.experimental.pallas import tpu as pltpu


def _round_up(x, m):
    return (x + m - 1) // m * m


def mlp_kernel(x_ref, w1_ref, b1_ref, w2_ref, b2_ref, w3_ref, b3_ref, o_ref):
    # Layer 1: Linear (bf16 MXU inputs, f32 accumulation) + bias + ReLU
    h = jnp.dot(x_ref[...], w1_ref[...], preferred_element_type=jnp.float32)
    h = jnp.maximum(h + b1_ref[...], 0.0).astype(jnp.bfloat16)
    # Layer 2: Linear + bias + ReLU
    h = jnp.dot(h, w2_ref[...], preferred_element_type=jnp.float32)
    h = jnp.maximum(h + b2_ref[...], 0.0).astype(jnp.bfloat16)
    # Output layer: Linear + bias (128-wide padded => lane-dense stores)
    out = jnp.dot(h, w3_ref[...], preferred_element_type=jnp.float32) + b3_ref[...]
    o_ref[...] = out.astype(o_ref.dtype)
    # TODO(synk): nn.Dropout with default dropout_list=[0.0, 0.0] (and eval mode)
    # is identity; training-mode dropout would use pltpu.prng_seed +
    # pltpu.prng_random_bits.


def mlp_forward(x, params, *, batch_tile=256):
    """x: (B, *feature_dims). Returns (B, output_dim) float32."""
    B = x.shape[0]
    x2d = x.reshape(B, -1).astype(jnp.float32)  # == x.view(x.size(0), -1)
    (w1, b1), (w2, b2), (w3, b3) = params
    in_dim, h1 = w1.shape
    _, h2 = w2.shape
    _, out_dim = w3.shape
    assert x2d.shape[1] == in_dim

    # Lane/sublane friendly padding (one-time host-side prep per call).
    in_dim_p = _round_up(in_dim, 128)     # 784 -> 896 : dense K vregs / MXU passes
    out_dim_p = _round_up(out_dim, 128)   # 10  -> 128 : lane-dense output stores
    batch_tile = max(16, min(batch_tile, _round_up(B, 16)))  # bf16 packs 16 rows/vreg
    B_p = _round_up(B, batch_tile)

    # bf16 operands for the MXU; zero padding keeps the math identical.
    x_p = jnp.zeros((B_p, in_dim_p), jnp.bfloat16).at[:B, :in_dim].set(
        x2d.astype(jnp.bfloat16))
    w1_p = jnp.zeros((in_dim_p, h1), jnp.bfloat16).at[:in_dim, :].set(
        w1.astype(jnp.bfloat16))
    w2_p = w2.astype(jnp.bfloat16)
    w3_p = jnp.zeros((h2, out_dim_p), jnp.bfloat16).at[:, :out_dim].set(
        w3.astype(jnp.bfloat16))
    b1_p = b1.reshape(1, h1).astype(jnp.float32)
    b2_p = b2.reshape(1, h2).astype(jnp.float32)
    b3_p = jnp.zeros((1, out_dim_p), jnp.float32).at[:, :out_dim].set(
        b3.reshape(1, out_dim).astype(jnp.float32))

    grid = (B_p // batch_tile,)

    def rep(shape):
        # Constant index_map: block fetched once, resident across batch steps.
        return pl.BlockSpec(shape, lambda i: (0, 0))

    out_padded = pl.pallas_call(
        mlp_kernel,
        out_shape=jax.ShapeDtypeStruct((B_p, out_dim_p), jnp.float32),
        grid=grid,
        in_specs=[
            pl.BlockSpec((batch_tile, in_dim_p), lambda i: (i, 0)),
            rep((in_dim_p, h1)), rep((1, h1)),
            rep((h1, h2)), rep((1, h2)),
            rep((h2, out_dim_p)), rep((1, out_dim_p)),
        ],
        out_specs=pl.BlockSpec((batch_tile, out_dim_p), lambda i: (i, 0)),
        compiler_params=pltpu.CompilerParams(
            dimension_semantics=("parallel",),
            vmem_limit_bytes=32 * 1024 * 1024,
        ),
    )(x_p, w1_p, b1_p, w2_p, b2_p, w3_p, b3_p)

    return out_padded[:B, :out_dim]


def init_params(key, input_dim, hidden_dims, output_dim):
    """Deterministic parameter init (uniform, PyTorch-Linear-style bounds)."""
    dims = [input_dim] + list(hidden_dims) + [output_dim]
    params = []
    for i in range(len(dims) - 1):
        fan_in, fan_out = dims[i], dims[i + 1]
        key, kw, kb = jax.random.split(key, 3)
        bound = 1.0 / (fan_in ** 0.5)
        w = jax.random.uniform(kw, (fan_in, fan_out), jnp.float32, -bound, bound)
        b = jax.random.uniform(kb, (1, fan_out), jnp.float32, -bound, bound)
        params.append((w, b))
    return params


if __name__ == "__main__":
    INPUT_DIM = 28 * 28
    HIDDEN_DIMS = [512, 512]
    OUTPUT_DIM = 10
    BATCH = 512  # with batch_tile=256 -> grid (2,) "parallel" steps (v7x: 2 TCs)

    key = jax.random.PRNGKey(0)
    key, kx = jax.random.split(key)
    # Input shaped like MNIST images (B, 1, 28, 28); forward flattens it.
    x = jax.random.normal(kx, (BATCH, 1, 28, 28), jnp.float32)

    params = init_params(key, INPUT_DIM, HIDDEN_DIMS, OUTPUT_DIM)

    out = mlp_forward(x, params)
    out = jax.block_until_ready(out)
    assert out.shape == (BATCH, OUTPUT_DIM)

    # Reference with matching numerics: bf16 operands, f32 accumulation.
    ref = x.reshape(BATCH, -1).astype(jnp.bfloat16)
    for li, (w, b) in enumerate(params):
        ref = jnp.dot(ref, w.astype(jnp.bfloat16),
                      preferred_element_type=jnp.float32) + b
        if li < len(params) - 1:
            ref = jnp.maximum(ref, 0.0).astype(jnp.bfloat16)
    assert jnp.allclose(out, ref, atol=2e-2, rtol=2e-2), (
        float(jnp.max(jnp.abs(out - ref))))

    print("KERNEL_OK")
</pallas_src>

<mosaic_0001>
module attributes {stable_mosaic.version = 11 : i64} {
  func.func @mlp_kernel(%arg0: i32, %arg1: memref<256x896xbf16, #tpu.memory_space<vmem>>, %arg2: memref<896x512xbf16, #tpu.memory_space<vmem>>, %arg3: memref<1x512xf32, #tpu.memory_space<vmem>>, %arg4: memref<512x512xbf16, #tpu.memory_space<vmem>>, %arg5: memref<1x512xf32, #tpu.memory_space<vmem>>, %arg6: memref<512x128xbf16, #tpu.memory_space<vmem>>, %arg7: memref<1x128xf32, #tpu.memory_space<vmem>>, %arg8: memref<256x128xf32, #tpu.memory_space<vmem>>) attributes {dimension_semantics = [#tpu.dimension_semantics<parallel>], iteration_bounds = array<i64: 2>, scalar_prefetch = 0 : i64, scratch_operands = 0 : i64, tpu.core_type = #tpu.core_type<tc>, window_params = [{transform_indices = @transform_0, window_bounds = array<i64: 256, 896>}, {pipeline_mode = #tpu.pipeline_mode<synchronous>, transform_indices = @transform_1, window_bounds = array<i64: 896, 512>}, {pipeline_mode = #tpu.pipeline_mode<synchronous>, transform_indices = @transform_2, window_bounds = array<i64: 1, 512>}, {pipeline_mode = #tpu.pipeline_mode<synchronous>, transform_indices = @transform_3, window_bounds = array<i64: 512, 512>}, {pipeline_mode = #tpu.pipeline_mode<synchronous>, transform_indices = @transform_4, window_bounds = array<i64: 1, 512>}, {pipeline_mode = #tpu.pipeline_mode<synchronous>, transform_indices = @transform_5, window_bounds = array<i64: 512, 128>}, {pipeline_mode = #tpu.pipeline_mode<synchronous>, transform_indices = @transform_6, window_bounds = array<i64: 1, 128>}, {transform_indices = @transform_7, window_bounds = array<i64: 256, 128>}]} {
    %c0 = arith.constant 0 : index
    %c0_0 = arith.constant 0 : index
    %0 = vector.load %arg1[%c0, %c0_0] : memref<256x896xbf16, #tpu.memory_space<vmem>>, vector<256x896xbf16>
    %c0_1 = arith.constant 0 : index
    %c0_2 = arith.constant 0 : index
    %1 = vector.load %arg2[%c0_1, %c0_2] : memref<896x512xbf16, #tpu.memory_space<vmem>>, vector<896x512xbf16>
    %cst = arith.constant dense<0.000000e+00> : vector<256x512xf32>
    %2 = tpu.matmul %0, %1, %cst {dimension_numbers = #tpu.dot_dimension_numbers<[1], [0], [0], [1], [0, 0, 1, 1], [], []>} : vector<256x896xbf16>, vector<896x512xbf16>, vector<256x512xf32> -> vector<256x512xf32>
    %c0_3 = arith.constant 0 : index
    %c0_4 = arith.constant 0 : index
    %3 = vector.load %arg3[%c0_3, %c0_4] : memref<1x512xf32, #tpu.memory_space<vmem>>, vector<1x512xf32>
    %4 = vector.broadcast %3 : vector<1x512xf32> to vector<256x512xf32>
    %5 = arith.addf %2, %4 : vector<256x512xf32>
    %cst_5 = arith.constant 0.000000e+00 : f32
    %6 = vector.broadcast %cst_5 : f32 to vector<256x512xf32>
    %7 = arith.maximumf %5, %6 : vector<256x512xf32>
    %8 = arith.truncf %7 : vector<256x512xf32> to vector<256x512xbf16>
    %c0_6 = arith.constant 0 : index
    %c0_7 = arith.constant 0 : index
    %9 = vector.load %arg4[%c0_6, %c0_7] : memref<512x512xbf16, #tpu.memory_space<vmem>>, vector<512x512xbf16>
    %cst_8 = arith.constant dense<0.000000e+00> : vector<256x512xf32>
    %10 = tpu.matmul %8, %9, %cst_8 {dimension_numbers = #tpu.dot_dimension_numbers<[1], [0], [0], [1], [0, 0, 1, 1], [], []>} : vector<256x512xbf16>, vector<512x512xbf16>, vector<256x512xf32> -> vector<256x512xf32>
    %c0_9 = arith.constant 0 : index
    %c0_10 = arith.constant 0 : index
    %11 = vector.load %arg5[%c0_9, %c0_10] : memref<1x512xf32, #tpu.memory_space<vmem>>, vector<1x512xf32>
    %12 = vector.broadcast %11 : vector<1x512xf32> to vector<256x512xf32>
    %13 = arith.addf %10, %12 : vector<256x512xf32>
    %cst_11 = arith.constant 0.000000e+00 : f32
    %14 = vector.broadcast %cst_11 : f32 to vector<256x512xf32>
    %15 = arith.maximumf %13, %14 : vector<256x512xf32>
    %16 = arith.truncf %15 : vector<256x512xf32> to vector<256x512xbf16>
    %c0_12 = arith.constant 0 : index
    %c0_13 = arith.constant 0 : index
    %17 = vector.load %arg6[%c0_12, %c0_13] : memref<512x128xbf16, #tpu.memory_space<vmem>>, vector<512x128xbf16>
    %cst_14 = arith.constant dense<0.000000e+00> : vector<256x128xf32>
    %18 = tpu.matmul %16, %17, %cst_14 {dimension_numbers = #tpu.dot_dimension_numbers<[1], [0], [0], [1], [0, 0, 1, 1], [], []>} : vector<256x512xbf16>, vector<512x128xbf16>, vector<256x128xf32> -> vector<256x128xf32>
    %c0_15 = arith.constant 0 : index
    %c0_16 = arith.constant 0 : index
    %19 = vector.load %arg7[%c0_15, %c0_16] : memref<1x128xf32, #tpu.memory_space<vmem>>, vector<1x128xf32>
    %20 = vector.broadcast %19 : vector<1x128xf32> to vector<256x128xf32>
    %21 = arith.addf %18, %20 : vector<256x128xf32>
    %c0_17 = arith.constant 0 : index
    %c0_18 = arith.constant 0 : index
    %22 = vector.load %arg8[%c0_17, %c0_18] : memref<256x128xf32, #tpu.memory_space<vmem>>, vector<256x128xf32>
    tpu.vector_store %arg8[%c0_17, %c0_18], %21 {strides = array<i32>} : memref<256x128xf32, #tpu.memory_space<vmem>>, vector<256x128xf32>,
    return
  }
  func.func @transform_0(%arg0: i32) -> (i32, i32) {
    %c0_i32 = arith.constant 0 : i32
    %c0_i32_0 = arith.constant 0 : i32
    return %arg0, %c0_i32 : i32, i32
  }
  func.func @transform_1(%arg0: i32) -> (i32, i32) {
    %c0_i32 = arith.constant 0 : i32
    %c0_i32_0 = arith.constant 0 : i32
    %c0_i32_1 = arith.constant 0 : i32
    return %c0_i32, %c0_i32_0 : i32, i32
  }
  func.func @transform_2(%arg0: i32) -> (i32, i32) {
    %c0_i32 = arith.constant 0 : i32
    %c0_i32_0 = arith.constant 0 : i32
    %c0_i32_1 = arith.constant 0 : i32
    return %c0_i32, %c0_i32_0 : i32, i32
  }
  func.func @transform_3(%arg0: i32) -> (i32, i32) {
    %c0_i32 = arith.constant 0 : i32
    %c0_i32_0 = arith.constant 0 : i32
    %c0_i32_1 = arith.constant 0 : i32
    return %c0_i32, %c0_i32_0 : i32, i32
  }
  func.func @transform_4(%arg0: i32) -> (i32, i32) {
    %c0_i32 = arith.constant 0 : i32
    %c0_i32_0 = arith.constant 0 : i32
    %c0_i32_1 = arith.constant 0 : i32
    return %c0_i32, %c0_i32_0 : i32, i32
  }
  func.func @transform_5(%arg0: i32) -> (i32, i32) {
    %c0_i32 = arith.constant 0 : i32
    %c0_i32_0 = arith.constant 0 : i32
    %c0_i32_1 = arith.constant 0 : i32
    return %c0_i32, %c0_i32_0 : i32, i32
  }
  func.func @transform_6(%arg0: i32) -> (i32, i32) {
    %c0_i32 = arith.constant 0 : i32
    %c0_i32_0 = arith.constant 0 : i32
    %c0_i32_1 = arith.constant 0 : i32
    return %c0_i32, %c0_i32_0 : i32, i32
  }
  func.func @transform_7(%arg0: i32) -> (i32, i32) {
    %c0_i32 = arith.constant 0 : i32
    %c0_i32_0 = arith.constant 0 : i32
    return %arg0, %c0_i32 : i32, i32
  }
}

</mosaic_0001>

<llo_original>
// kernel: tpu_custom_call.1
$region0: #{tpu_custom_call.1}
  #allocation0 [shape = 'u32[]', space=smem, size = 0x4, offset = 0x4, fixed_abs, tag = 'smem constant byte address 0x4 - core index']
  #allocation1 [shape = 'u32[144,128]{1,0:T(1,128)}', space=vmem, size = 0x12000, scoped, tag = 'internal scratch']
  %s0 = inlined_call_operand.hbm [shape: bf16[512,896], index: 0, kind: input, shape index: {}]
  %s1 = inlined_call_operand.hbm [shape: bf16[896,512], index: 1, kind: input, shape index: {}]
  %s2 = inlined_call_operand.hbm [shape: f32[1,512], index: 2, kind: input, shape index: {}]
  %s3 = inlined_call_operand.hbm [shape: bf16[512,512], index: 3, kind: input, shape index: {}]
  %s4 = inlined_call_operand.vmem [shape: f32[1,512], index: 4, kind: input, shape index: {}]
  %s5 = inlined_call_operand.hbm [shape: bf16[512,128], index: 5, kind: input, shape index: {}]
  %s6 = inlined_call_operand.vmem [shape: f32[1,128], index: 6, kind: input, shape index: {}]
  %s7 = inlined_call_operand.hbm [shape: f32[512,128], index: 7, kind: output, shape index: {}]
  %s8 = sld [smem:[#allocation0]]
  $region81: #{tpu_custom_call.1} parent=0
    _
  %s10 = ssub.s32 1, %s8
  %s11 = scalar_select 0, %s10, %s8
  $region1: #{tpu_custom_call.1} parent=0
    #allocation2 [shape = 'u8[917504]{0}', space=vmem, size = 0xe0000, scoped, tag = 'input window, operand 0']
    #allocation3 [shape = 's32[2]{0}', space=sflag, size = 0x8, scoped, tag = 'scoped memory for tpu_custom_call.1']
    #allocation4 [shape = 's32[2]{0}', space=sflag, size = 0x8, scoped, tag = 'scoped memory for tpu_custom_call.1']
    #allocation5 [shape = 'u8[917504]{0}', space=vmem, size = 0xe0000, scoped, tag = 'input window, operand 1, single buffered']
    #allocation6 [shape = 's32[1]{0}', space=sflag, size = 0x4, scoped, tag = 'scoped memory for tpu_custom_call.1']
    #allocation7 [shape = 'u8[2048]{0}', space=vmem, size = 0x800, scoped, tag = 'input window, operand 2, single buffered']
    #allocation8 [shape = 'u8[524288]{0}', space=vmem, size = 0x80000, scoped, tag = 'input window, operand 3, single buffered']
    #allocation9 [shape = 's32[1]{0}', space=sflag, size = 0x4, scoped, tag = 'scoped memory for tpu_custom_call.1']
    #allocation10 [shape = 'u8[131072]{0}', space=vmem, size = 0x20000, scoped, tag = 'input window, operand 5, single buffered']
    #allocation11 [shape = 'u8[262144]{0}', space=vmem, size = 0x40000, scoped, tag = 'output window, operand 0']
    %12 = vsyncpa [#allocation3], 0
    %s13 = scalar_lea.sflag [#allocation3], 1
    %14 = vsyncpa %s13, 0
    %15 = vsyncpa [#allocation6], 0
    %16 = vsyncpa [#allocation9], 0
    %17 = vsyncpa [#allocation4], 0
    %s18 = scalar_lea.sflag [#allocation4], 1
    %19 = vsyncpa %s18, 0
    loop: start=0, step=1, limit=4
    $region2: #{tpu_custom_call.1} parent=1 // loop_pre_header
      _
    $region3: #{tpu_custom_call.1} parent=1 // loop_header
      %s21 = sphi 0, %s25
      %p22 = scmp.ge.s32.totalorder %s21, 4
      %s31 = sphi 0, %s33
      %s34 = sphi 0, %s31
      %s35 = sphi 0, %s34
      %s51 = sphi 0, %s35
      %s55 = sphi 0, %s55
      %s57 = sphi 0, %s55
      %s58 = sphi 0, %s57
      %s72 = sphi 0, %s58
      %s76 = sphi 0, %s76
      %s78 = sphi 0, %s76
      %s79 = sphi 0, %s78
      %s93 = sphi 0, %s79
      %s97 = sphi 0, %s97
      %s99 = sphi 0, %s97
      %s100 = sphi 0, %s99
      %s114 = sphi 0, %s100
      %s118 = sphi 0, %s118
      %s120 = sphi 0, %s118
      %s121 = sphi 0, %s120
      %s135 = sphi 0, %s121
      %s139 = sphi 0, %s139
      %s141 = sphi 0, %s139
      %s142 = sphi 0, %s141
      %s156 = sphi 0, %s142
      %s160 = sphi 0, %s160
      %s162 = sphi 0, %s160
      %s163 = sphi 0, %s162
      %s177 = sphi 0, %s163
      %s183 = sphi 0, %s185
      %s186 = sphi 0, %s183
      %s187 = sphi 0, %s186
      %s203 = sphi 0, %s187
    $region4: #{tpu_custom_call.1} parent=1 // loop_header_branch
      %24 = sbr.rel (%p22) target = $region8
    $region5: #{tpu_custom_call.1} parent=1 // loop_body
      %s26 = ssub.s32 %s21, 1
      %s27 = ssub.s32 %s21, 2
      %s28 = sadd.s32 %s21, 1
      %s29 = ssub.s32 %s21, %s28
      %p30 = scmp.eq.s32.totalorder %s29, 0
      %s32 = sadd.s32 %s31, 1
      %s33 = scalar_select %p30, %s31, %s32
      %p36 = pneg %p30
      %p37 = scmp.eq.s32.totalorder %s21, 1
      %p38 = por %p36, %p37
      %p39 = scmp.ne.s32.totalorder %s31, %s34
      %p40 = scmp.eq.s32.totalorder %s21, 0
      %p41 = por %p39, %p40
      %p42 = scmp.ne.s32.totalorder %s31, %s34
      %p43 = scmp.eq.s32.totalorder %s26, 1
      %p44 = por %p42, %p43
      %p45 = scmp.ne.s32.totalorder %s34, %s35
      %p46 = scmp.eq.s32.totalorder %s26, 0
      %p47 = por %p45, %p46
      %p48 = scmp.ne.s32.totalorder %s34, %s35
      %p49 = scmp.eq.s32.totalorder %s27, 1
      %p50 = por %p48, %p49
      %p52 = scmp.ne.s32.totalorder %s35, %s51
      %p53 = scmp.eq.s32.totalorder %s27, 0
      %p54 = por %p52, %p53
      %s56 = sadd.s32 %s55, 1
      %p59 = scmp.eq.s32.totalorder %s21, 1
      %p60 = scmp.ne.s32.totalorder %s55, %s57
      %p61 = scmp.eq.s32.totalorder %s21, 0
      %p62 = por %p60, %p61
      %p63 = scmp.ne.s32.totalorder %s55, %s57
      %p64 = scmp.eq.s32.totalorder %s26, 1
      %p65 = por %p63, %p64
      %p66 = scmp.ne.s32.totalorder %s57, %s58
      %p67 = scmp.eq.s32.totalorder %s26, 0
      %p68 = por %p66, %p67
      %p69 = scmp.ne.s32.totalorder %s57, %s58
      %p70 = scmp.eq.s32.totalorder %s27, 1
      %p71 = por %p69, %p70
      %p73 = scmp.ne.s32.totalorder %s58, %s72
      %p74 = scmp.eq.s32.totalorder %s27, 0
      %p75 = por %p73, %p74
      %s77 = sadd.s32 %s76, 1
      %p80 = scmp.eq.s32.totalorder %s21, 1
      %p81 = scmp.ne.s32.totalorder %s76, %s78
      %p82 = scmp.eq.s32.totalorder %s21, 0
      %p83 = por %p81, %p82
      %p84 = scmp.ne.s32.totalorder %s76, %s78
      %p85 = scmp.eq.s32.totalorder %s26, 1
      %p86 = por %p84, %p85
      %p87 = scmp.ne.s32.totalorder %s78, %s79
      %p88 = scmp.eq.s32.totalorder %s26, 0
      %p89 = por %p87, %p88
      %p90 = scmp.ne.s32.totalorder %s78, %s79
      %p91 = scmp.eq.s32.totalorder %s27, 1
      %p92 = por %p90, %p91
      %p94 = scmp.ne.s32.totalorder %s79, %s93
      %p95 = scmp.eq.s32.totalorder %s27, 0
      %p96 = por %p94, %p95
      %s98 = sadd.s32 %s97, 1
      %p101 = scmp.eq.s32.totalorder %s21, 1
      %p102 = scmp.ne.s32.totalorder %s97, %s99
      %p103 = scmp.eq.s32.totalorder %s21, 0
      %p104 = por %p102, %p103
      %p105 = scmp.ne.s32.totalorder %s97, %s99
      %p106 = scmp.eq.s32.totalorder %s26, 1
      %p107 = por %p105, %p106
      %p108 = scmp.ne.s32.totalorder %s99, %s100
      %p109 = scmp.eq.s32.totalorder %s26, 0
      %p110 = por %p108, %p109
      %p111 = scmp.ne.s32.totalorder %s99, %s100
      %p112 = scmp.eq.s32.totalorder %s27, 1
      %p113 = por %p111, %p112
      %p115 = scmp.ne.s32.totalorder %s100, %s114
      %p116 = scmp.eq.s32.totalorder %s27, 0
      %p117 = por %p115, %p116
      %s119 = sadd.s32 %s118, 1
      %p122 = scmp.eq.s32.totalorder %s21, 1
      %p123 = scmp.ne.s32.totalorder %s118, %s120
      %p124 = scmp.eq.s32.totalorder %s21, 0
      %p125 = por %p123, %p124
      %p126 = scmp.ne.s32.totalorder %s118, %s120
      %p127 = scmp.eq.s32.totalorder %s26, 1
      %p128 = por %p126, %p127
      %p129 = scmp.ne.s32.totalorder %s120, %s121
      %p130 = scmp.eq.s32.totalorder %s26, 0
      %p131 = por %p129, %p130
      %p132 = scmp.ne.s32.totalorder %s120, %s121
      %p133 = scmp.eq.s32.totalorder %s27, 1
      %p134 = por %p132, %p133
      %p136 = scmp.ne.s32.totalorder %s121, %s135
      %p137 = scmp.eq.s32.totalorder %s27, 0
      %p138 = por %p136, %p137
      %s140 = sadd.s32 %s139, 1
      %p143 = scmp.eq.s32.totalorder %s21, 1
      %p144 = scmp.ne.s32.totalorder %s139, %s141
      %p145 = scmp.eq.s32.totalorder %s21, 0
      %p146 = por %p144, %p145
      %p147 = scmp.ne.s32.totalorder %s139, %s141
      %p148 = scmp.eq.s32.totalorder %s26, 1
      %p149 = por %p147, %p148
      %p150 = scmp.ne.s32.totalorder %s141, %s142
      %p151 = scmp.eq.s32.totalorder %s26, 0
      %p152 = por %p150, %p151
      %p153 = scmp.ne.s32.totalorder %s141, %s142
      %p154 = scmp.eq.s32.totalorder %s27, 1
      %p155 = por %p153, %p154
      %p157 = scmp.ne.s32.totalorder %s142, %s156
      %p158 = scmp.eq.s32.totalorder %s27, 0
      %p159 = por %p157, %p158
      %s161 = sadd.s32 %s160, 1
      %p164 = scmp.eq.s32.totalorder %s21, 1
      %p165 = scmp.ne.s32.totalorder %s160, %s162
      %p166 = scmp.eq.s32.totalorder %s21, 0
      %p167 = por %p165, %p166
      %p168 = scmp.ne.s32.totalorder %s160, %s162
      %p169 = scmp.eq.s32.totalorder %s26, 1
      %p170 = por %p168, %p169
      %p171 = scmp.ne.s32.totalorder %s162, %s163
      %p172 = scmp.eq.s32.totalorder %s26, 0
      %p173 = por %p171, %p172
      %p174 = scmp.ne.s32.totalorder %s162, %s163
      %p175 = scmp.eq.s32.totalorder %s27, 1
      %p176 = por %p174, %p175
      %p178 = scmp.ne.s32.totalorder %s163, %s177
      %p179 = scmp.eq.s32.totalorder %s27, 0
      %p180 = por %p178, %p179
      %s181 = ssub.s32 %s21, %s28
      %p182 = scmp.eq.s32.totalorder %s181, 0
      %s184 = sadd.s32 %s183, 1
      %s185 = scalar_select %p182, %s183, %s184
      %p188 = pneg %p182
      %p189 = scmp.eq.s32.totalorder %s21, 1
      %p190 = por %p188, %p189
      %p191 = scmp.ne.s32.totalorder %s183, %s186
      %p192 = scmp.eq.s32.totalorder %s21, 0
      %p193 = por %p191, %p192
      %p194 = scmp.ne.s32.totalorder %s183, %s186
      %p195 = scmp.eq.s32.totalorder %s26, 1
      %p196 = por %p194, %p195
      %p197 = scmp.ne.s32.totalorder %s186, %s187
      %p198 = scmp.eq.s32.totalorder %s26, 0
      %p199 = por %p197, %p198
      %p200 = scmp.ne.s32.totalorder %s186, %s187
      %p201 = scmp.eq.s32.totalorder %s27, 1
      %p202 = por %p200, %p201
      %p204 = scmp.ne.s32.totalorder %s187, %s203
      %p205 = scmp.eq.s32.totalorder %s27, 0
      %p206 = por %p204, %p205
      %p207 = scmp.le.s32.totalorder 1, %s21
      %p208 = scmp.lt.s32.totalorder %s21, 3
      %p209 = pnand %p207, %p208
      %p210 = pneg %p209
      // Predicated region
      $region9: #{tpu_custom_call.1} parent=5 // pred_check
        _
      $region10: #{tpu_custom_call.1} parent=5 // pred_check_branch
        %212 = sbr.rel (%p209) target = $region12
      $region11: #{tpu_custom_call.1} parent=5 // pred_region
        %s213 = ssub.s32 %s21, 1
        // Predicated region
        $region13: #{tpu_custom_call.1} parent=11 // pred_check
          %p214 = pneg %p68
        $region14: #{tpu_custom_call.1} parent=11 // pred_check_branch
          %216 = sbr.rel (%p214) target = $region16
        $region15: #{tpu_custom_call.1} parent=11 // pred_region
          %s218 = ssub.s32 28672, 28672
          %219 = vsyncadd [#allocation6], %s218
          %s220 = sshll.u32 [#allocation5], 4
          %s221 = int_to_ptr.vmem [resolvable:$true] %s220
          %226 = dma.hbm_to_vmem [thread:$0]  %s1, 28672, %s221, [#allocation6], 256, 256, 16
        $region16: #{tpu_custom_call.1} parent=11 // pred_fallthru
          _
        // Predicated region
        $region17: #{tpu_custom_call.1} parent=11 // pred_check
          %p227 = pneg %p89
        $region18: #{tpu_custom_call.1} parent=11 // pred_check_branch
          %229 = sbr.rel (%p227) target = $region20
        $region19: #{tpu_custom_call.1} parent=11 // pred_region
          %s231 = ssub.s32 64, 64
          %232 = vsyncadd [#allocation6], %s231
          %s234 = sshll.u32 [#allocation7], 4
          %s235 = int_to_ptr.vmem [resolvable:$true] %s234
          %237 = dma.hbm_to_vmem [thread:$0]  %s2, 64, %s235, [#allocation6]
        $region20: #{tpu_custom_call.1} parent=11 // pred_fallthru
          _
        // Predicated region
        $region21: #{tpu_custom_call.1} parent=11 // pred_check
          %p238 = pneg %p110
        $region22: #{tpu_custom_call.1} parent=11 // pred_check_branch
          %240 = sbr.rel (%p238) target = $region24
        $region23: #{tpu_custom_call.1} parent=11 // pred_region
          %s242 = ssub.s32 16384, 16384
          %243 = vsyncadd [#allocation9], %s242
          %s244 = sshll.u32 [#allocation8], 4
          %s245 = int_to_ptr.vmem [resolvable:$true] %s244
          %250 = dma.hbm_to_vmem [thread:$0]  %s3, 16384, %s245, [#allocation9], 256, 256, 16
        $region24: #{tpu_custom_call.1} parent=11 // pred_fallthru
          _
        // Predicated region
        $region25: #{tpu_custom_call.1} parent=11 // pred_check
          %p251 = pneg %p131
        $region26: #{tpu_custom_call.1} parent=11 // pred_check_branch
          %253 = sbr.rel (%p251) target = $region28
        $region27: #{tpu_custom_call.1} parent=11 // pred_region
          _
        $region28: #{tpu_custom_call.1} parent=11 // pred_fallthru
          _
        // Predicated region
        $region29: #{tpu_custom_call.1} parent=11 // pred_check
          %p254 = pneg %p152
        $region30: #{tpu_custom_call.1} parent=11 // pred_check_branch
          %256 = sbr.rel (%p254) target = $region32
        $region31: #{tpu_custom_call.1} parent=11 // pred_region
          %s258 = ssub.s32 4096, 4096
          %259 = vsyncadd [#allocation9], %s258
          %s260 = sshll.u32 [#allocation10], 4
          %s261 = int_to_ptr.vmem [resolvable:$true] %s260
          %266 = dma.hbm_to_vmem [thread:$0]  %s5, 4096, %s261, [#allocation9], 64, 64, 4
        $region32: #{tpu_custom_call.1} parent=11 // pred_fallthru
          _
        // Predicated region
        $region33: #{tpu_custom_call.1} parent=11 // pred_check
          %p267 = pneg %p173
        $region34: #{tpu_custom_call.1} parent=11 // pred_check_branch
          %269 = sbr.rel (%p267) target = $region36
        $region35: #{tpu_custom_call.1} parent=11 // pred_region
          _
        $region36: #{tpu_custom_call.1} parent=11 // pred_fallthru
          _
      $region12: #{tpu_custom_call.1} parent=5 // pred_fallthru
        _
      %p270 = scmp.lt.s32.totalorder %s21, 2
      // Predicated region
      $region37: #{tpu_custom_call.1} parent=5 // pred_check
        %p271 = pneg %p270
      $region38: #{tpu_custom_call.1} parent=5 // pred_check_branch
        %273 = sbr.rel (%p271) target = $region40
      $region39: #{tpu_custom_call.1} parent=5 // pred_region
        // Predicated region
        $region41: #{tpu_custom_call.1} parent=39 // pred_check
          %p274 = pneg %p41
        $region42: #{tpu_custom_call.1} parent=39 // pred_check_branch
          %276 = sbr.rel (%p274) target = $region44
        $region43: #{tpu_custom_call.1} parent=39 // pred_region
          %s277 = sand.u32 %s31, 1
          %s278 = scalar_lea.sflag [#allocation3], %s277
          %s279 = sand.u32 %s31, 1
          %s280 = smul.addr %s279, 896
          %s281 = scalar_lea.vmem [#allocation2], %s280
          %s282 = smul.u32 32, %s21
          %s284 = ssub.s32 14336, 14336
          %285 = vsyncadd %s278, %s284
          %s286 = smul.addr %s282, 7
          %s287 = smul.addr %s286, 64
          %s288 = scalar_lea.hbm %s0, %s287
          %s289 = sshll.u32 %s281, 4
          %s290 = int_to_ptr.vmem [resolvable:$true] %s289
          %295 = dma.hbm_to_vmem [thread:$0]  %s288, 14336, %s290, %s278, 448, 448, 28
        $region44: #{tpu_custom_call.1} parent=39 // pred_fallthru
          _
      $region40: #{tpu_custom_call.1} parent=5 // pred_fallthru
        _
      %p296 = scmp.le.s32.totalorder 1, %s21
      %p297 = scmp.lt.s32.totalorder %s21, 3
      %p298 = pnand %p296, %p297
      %p299 = pneg %p298
      // Predicated region
      $region45: #{tpu_custom_call.1} parent=5 // pred_check
        _
      $region46: #{tpu_custom_call.1} parent=5 // pred_check_branch
        %301 = sbr.rel (%p298) target = $region48
      $region47: #{tpu_custom_call.1} parent=5 // pred_region
        %s302 = ssub.s32 %s21, 1
        %s303 = sand.u32 %s34, 1
        %s304 = scalar_lea.sflag [#allocation3], %s303
        %s305 = sand.u32 %s34, 1
        %s306 = smul.addr %s305, 896
        %s307 = scalar_lea.vmem [#allocation2], %s306
        // Predicated region
        $region49: #{tpu_custom_call.1} parent=47 // pred_check
          %p308 = pneg %p47
        $region50: #{tpu_custom_call.1} parent=47 // pred_check_branch
          %310 = sbr.rel (%p308) target = $region52
        $region51: #{tpu_custom_call.1} parent=47 // pred_region
          %311 = dma.done %s304, 14336
        $region52: #{tpu_custom_call.1} parent=47 // pred_fallthru
          _
        // Predicated region
        $region53: #{tpu_custom_call.1} parent=47 // pred_check
          %p312 = pneg %p68
        $region54: #{tpu_custom_call.1} parent=47 // pred_check_branch
          %314 = sbr.rel (%p312) target = $region56
        $region55: #{tpu_custom_call.1} parent=47 // pred_region
          %315 = dma.done [#allocation6], 28672
        $region56: #{tpu_custom_call.1} parent=47 // pred_fallthru
          _
        // Predicated region
        $region57: #{tpu_custom_call.1} parent=47 // pred_check
          %p316 = pneg %p89
        $region58: #{tpu_custom_call.1} parent=47 // pred_check_branch
          %318 = sbr.rel (%p316) target = $region60
        $region59: #{tpu_custom_call.1} parent=47 // pred_region
          %319 = dma.done [#allocation6], 64
        $region60: #{tpu_custom_call.1} parent=47 // pred_fallthru
          _
        // Predicated region
        $region61: #{tpu_custom_call.1} parent=47 // pred_check
          %p320 = pneg %p110
        $region62: #{tpu_custom_call.1} parent=47 // pred_check_branch
          %322 = sbr.rel (%p320) target = $region64
        $region63: #{tpu_custom_call.1} parent=47 // pred_region
          %323 = dma.done [#allocation9], 16384
        $region64: #{tpu_custom_call.1} parent=47 // pred_fallthru
          _
        // Predicated region
        $region65: #{tpu_custom_call.1} parent=47 // pred_check
          %p324 = pneg %p152
        $region66: #{tpu_custom_call.1} parent=47 // pred_check_branch
          %326 = sbr.rel (%p324) target = $region68
        $region67: #{tpu_custom_call.1} parent=47 // pred_region
          %327 = dma.done [#allocation9], 4096
        $region68: #{tpu_custom_call.1} parent=47 // pred_fallthru
          _
        %s328 = sand.u32 %s34, 1
        %s329 = scalar_lea.sflag [#allocation3], %s328
        %s330 = sand.u32 %s34, 1
        %s331 = smul.addr %s330, 896
        %s332 = scalar_lea.vmem [#allocation2], %s331
        %p333 = pneg %p47
        %p334 = pneg %p44
        %p335 = pneg %p68
        %p336 = pneg %p65
        %p337 = pneg %p89
        %p338 = pneg %p86
        %p339 = pneg %p110
        %p340 = pneg %p107
        %p341 = pneg %p131
        %p342 = pneg %p128
        %p343 = pneg %p152
        %p344 = pneg %p149
        %p345 = pneg %p173
        %p346 = pneg %p170
        %p347 = pneg %p199
        %p348 = pneg %p196
        %s349 = sand.u32 %s186, 1
        %s350 = scalar_lea.sflag [#allocation4], %s349
        %s351 = sand.u32 %s186, 1
        %s352 = smul.addr %s351, 256
        %s353 = scalar_lea.vmem [#allocation11], %s352
        %s354 = smul.u32 32, %s26
        %s355 = smul.u32 32, %s26
        %v357 = vld [vmem:[%s307] sm:$0xff]
        %v358 = vld [vmem:[%s307 + $0x8] sm:$0xff]
        %v359 = vld [vmem:[%s307 + $0x10] sm:$0xff]
        %v360 = vld [vmem:[%s307 + $0x18] sm:$0xf]
        %v361 = vld [vmem:[%s307 + $0x1c] sm:$0xff]
        %v362 = vld [vmem:[%s307 + $0x24] sm:$0xff]
        %v363 = vld [vmem:[%s307 + $0x2c] sm:$0xff]
        %v364 = vld [vmem:[%s307 + $0x34] sm:$0xf]
        %v365 = vld [vmem:[%s307 + $0x38] sm:$0xff]
        %v366 = vld [vmem:[%s307 + $0x40] sm:$0xff]
        %v367 = vld [vmem:[%s307 + $0x48] sm:$0xff]
        %v368 = vld [vmem:[%s307 + $0x50] sm:$0xf]
        %v369 = vld [vmem:[%s307 + $0x54] sm:$0xff]
        %v370 = vld [vmem:[%s307 + $0x5c] sm:$0xff]
        %v371 = vld [vmem:[%s307 + $0x64] sm:$0xff]
        %v372 = vld [vmem:[%s307 + $0x6c] sm:$0xf]
        %v373 = vld [vmem:[%s307 + $0x70] sm:$0xff]
        %v374 = vld [vmem:[%s307 + $0x78] sm:$0xff]
        %v375 = vld [vmem:[%s307 + $0x80] sm:$0xff]
        %v376 = vld [vmem:[%s307 + $0x88] sm:$0xf]
        %v377 = vld [vmem:[%s307 + $0x8c] sm:$0xff]
        %v378 = vld [vmem:[%s307 + $0x94] sm:$0xff]
        %v379 = vld [vmem:[%s307 + $0x9c] sm:$0xff]
        %v380 = vld [vmem:[%s307 + $0xa4] sm:$0xf]
        %v381 = vld [vmem:[%s307 + $0xa8] sm:$0xff]
        %v382 = vld [vmem:[%s307 + $0xb0] sm:$0xff]
        %v383 = vld [vmem:[%s307 + $0xb8] sm:$0xff]
        %v384 = vld [vmem:[%s307 + $0xc0] sm:$0xf]
        %v385 = vld [vmem:[%s307 + $0xc4] sm:$0xff]
        %v386 = vld [vmem:[%s307 + $0xcc] sm:$0xff]
        %v387 = vld [vmem:[%s307 + $0xd4] sm:$0xff]
        %v388 = vld [vmem:[%s307 + $0xdc] sm:$0xf]
        %v389 = vld [vmem:[%s307 + $0xe0] sm:$0xff]
        %v390 = vld [vmem:[%s307 + $0xe8] sm:$0xff]
        %v391 = vld [vmem:[%s307 + $0xf0] sm:$0xff]
        %v392 = vld [vmem:[%s307 + $0xf8] sm:$0xf]
        %v393 = vld [vmem:[%s307 + $0xfc] sm:$0xff]
        %v394 = vld [vmem:[%s307 + $0x104] sm:$0xff]
        %v395 = vld [vmem:[%s307 + $0x10c] sm:$0xff]
        %v396 = vld [vmem:[%s307 + $0x114] sm:$0xf]
        %v397 = vld [vmem:[%s307 + $0x118] sm:$0xff]
        %v398 = vld [vmem:[%s307 + $0x120] sm:$0xff]
        %v399 = vld [vmem:[%s307 + $0x128] sm:$0xff]
        %v400 = vld [vmem:[%s307 + $0x130] sm:$0xf]
        %v401 = vld [vmem:[%s307 + $0x134] sm:$0xff]
        %v402 = vld [vmem:[%s307 + $0x13c] sm:$0xff]
        %v403 = vld [vmem:[%s307 + $0x144] sm:$0xff]
        %v404 = vld [vmem:[%s307 + $0x14c] sm:$0xf]
        %v405 = vld [vmem:[%s307 + $0x150] sm:$0xff]
        %v406 = vld [vmem:[%s307 + $0x158] sm:$0xff]
        %v407 = vld [vmem:[%s307 + $0x160] sm:$0xff]
        %v408 = vld [vmem:[%s307 + $0x168] sm:$0xf]
        %v409 = vld [vmem:[%s307 + $0x16c] sm:$0xff]
        %v410 = vld [vmem:[%s307 + $0x174] sm:$0xff]
        %v411 = vld [vmem:[%s307 + $0x17c] sm:$0xff]
        %v412 = vld [vmem:[%s307 + $0x184] sm:$0xf]
        %v413 = vld [vmem:[%s307 + $0x188] sm:$0xff]
        %v414 = vld [vmem:[%s307 + $0x190] sm:$0xff]
        %v415 = vld [vmem:[%s307 + $0x198] sm:$0xff]
        %v416 = vld [vmem:[%s307 + $0x1a0] sm:$0xf]
        %v417 = vld [vmem:[%s307 + $0x1a4] sm:$0xff]
        %v418 = vld [vmem:[%s307 + $0x1ac] sm:$0xff]
        %v419 = vld [vmem:[%s307 + $0x1b4] sm:$0xff]
        %v420 = vld [vmem:[%s307 + $0x1bc] sm:$0xf]
        %v421 = vld [vmem:[%s307 + $0x1c0] sm:$0xff]
        %v422 = vld [vmem:[%s307 + $0x1c8] sm:$0xff]
        %v423 = vld [vmem:[%s307 + $0x1d0] sm:$0xff]
        %v424 = vld [vmem:[%s307 + $0x1d8] sm:$0xf]
        %v425 = vld [vmem:[%s307 + $0x1dc] sm:$0xff]
        %v426 = vld [vmem:[%s307 + $0x1e4] sm:$0xff]
        %v427 = vld [vmem:[%s307 + $0x1ec] sm:$0xff]
        %v428 = vld [vmem:[%s307 + $0x1f4] sm:$0xf]
        %v429 = vld [vmem:[%s307 + $0x1f8] sm:$0xff]
        %v430 = vld [vmem:[%s307 + $0x200] sm:$0xff]
        %v431 = vld [vmem:[%s307 + $0x208] sm:$0xff]
        %v432 = vld [vmem:[%s307 + $0x210] sm:$0xf]
        %v433 = vld [vmem:[%s307 + $0x214] sm:$0xff]
        %v434 = vld [vmem:[%s307 + $0x21c] sm:$0xff]
        %v435 = vld [vmem:[%s307 + $0x224] sm:$0xff]
        %v436 = vld [vmem:[%s307 + $0x22c] sm:$0xf]
        %v437 = vld [vmem:[%s307 + $0x230] sm:$0xff]
        %v438 = vld [vmem:[%s307 + $0x238] sm:$0xff]
        %v439 = vld [vmem:[%s307 + $0x240] sm:$0xff]
        %v440 = vld [vmem:[%s307 + $0x248] sm:$0xf]
        %v441 = vld [vmem:[%s307 + $0x24c] sm:$0xff]
        %v442 = vld [vmem:[%s307 + $0x254] sm:$0xff]
        %v443 = vld [vmem:[%s307 + $0x25c] sm:$0xff]
        %v444 = vld [vmem:[%s307 + $0x264] sm:$0xf]
        %v445 = vld [vmem:[%s307 + $0x268] sm:$0xff]
        %v446 = vld [vmem:[%s307 + $0x270] sm:$0xff]
        %v447 = vld [vmem:[%s307 + $0x278] sm:$0xff]
        %v448 = vld [vmem:[%s307 + $0x280] sm:$0xf]
        %v449 = vld [vmem:[%s307 + $0x284] sm:$0xff]
        %v450 = vld [vmem:[%s307 + $0x28c] sm:$0xff]
        %v451 = vld [vmem:[%s307 + $0x294] sm:$0xff]
        %v452 = vld [vmem:[%s307 + $0x29c] sm:$0xf]
        %v453 = vld [vmem:[%s307 + $0x2a0] sm:$0xff]
        %v454 = vld [vmem:[%s307 + $0x2a8] sm:$0xff]
        %v455 = vld [vmem:[%s307 + $0x2b0] sm:$0xff]
        %v456 = vld [vmem:[%s307 + $0x2b8] sm:$0xf]
        %v457 = vld [vmem:[%s307 + $0x2bc] sm:$0xff]
        %v458 = vld [vmem:[%s307 + $0x2c4] sm:$0xff]
        %v459 = vld [vmem:[%s307 + $0x2cc] sm:$0xff]
        %v460 = vld [vmem:[%s307 + $0x2d4] sm:$0xf]
        %v461 = vld [vmem:[%s307 + $0x2d8] sm:$0xff]
        %v462 = vld [vmem:[%s307 + $0x2e0] sm:$0xff]
        %v463 = vld [vmem:[%s307 + $0x2e8] sm:$0xff]
        %v464 = vld [vmem:[%s307 + $0x2f0] sm:$0xf]
        %v465 = vld [vmem:[%s307 + $0x2f4] sm:$0xff]
        %v466 = vld [vmem:[%s307 + $0x2fc] sm:$0xff]
        %v467 = vld [vmem:[%s307 + $0x304] sm:$0xff]
        %v468 = vld [vmem:[%s307 + $0x30c] sm:$0xf]
        %v469 = vld [vmem:[%s307 + $0x310] sm:$0xff]
        %v470 = vld [vmem:[%s307 + $0x318] sm:$0xff]
        %v471 = vld [vmem:[%s307 + $0x320] sm:$0xff]
        %v472 = vld [vmem:[%s307 + $0x328] sm:$0xf]
        %v473 = vld [vmem:[%s307 + $0x32c] sm:$0xff]
        %v474 = vld [vmem:[%s307 + $0x334] sm:$0xff]
        %v475 = vld [vmem:[%s307 + $0x33c] sm:$0xff]
        %v476 = vld [vmem:[%s307 + $0x344] sm:$0xf]
        %v477 = vld [vmem:[%s307 + $0x348] sm:$0xff]
        %v478 = vld [vmem:[%s307 + $0x350] sm:$0xff]
        %v479 = vld [vmem:[%s307 + $0x358] sm:$0xff]
        %v480 = vld [vmem:[%s307 + $0x360] sm:$0xf]
        %v481 = vld [vmem:[%s307 + $0x364] sm:$0xff]
        %v482 = vld [vmem:[%s307 + $0x36c] sm:$0xff]
        %v483 = vld [vmem:[%s307 + $0x374] sm:$0xff]
        %v484 = vld [vmem:[%s307 + $0x37c] sm:$0xf]
        %v485 = vld [vmem:[#allocation5] sm:$0xff]
        %v486 = vld [vmem:[#allocation5 + $0x8] sm:$0xff]
        %v487 = vld [vmem:[#allocation5 + $0x10] sm:$0xff]
        %v488 = vld [vmem:[#allocation5 + $0x18] sm:$0xff]
        %v489 = vld [vmem:[#allocation5 + $0x20] sm:$0xff]
        %v490 = vld [vmem:[#allocation5 + $0x28] sm:$0xff]
        %v491 = vld [vmem:[#allocation5 + $0x30] sm:$0xff]
        %v492 = vld [vmem:[#allocation5 + $0x38] sm:$0xff]
        %v493 = vld [vmem:[#allocation5 + $0x40] sm:$0xff]
        %v494 = vld [vmem:[#allocation5 + $0x48] sm:$0xff]
        %v495 = vld [vmem:[#allocation5 + $0x50] sm:$0xff]
        %v496 = vld [vmem:[#allocation5 + $0x58] sm:$0xff]
        %v497 = vld [vmem:[#allocation5 + $0x60] sm:$0xff]
        %v498 = vld [vmem:[#allocation5 + $0x68] sm:$0xff]
        %v499 = vld [vmem:[#allocation5 + $0x70] sm:$0xff]
        %v500 = vld [vmem:[#allocation5 + $0x78] sm:$0xff]
        %v501 = vld [vmem:[#allocation5 + $0x80] sm:$0xff]
        %v502 = vld [vmem:[#allocation5 + $0x88] sm:$0xff]
        %v503 = vld [vmem:[#allocation5 + $0x90] sm:$0xff]
        %v504 = vld [vmem:[#allocation5 + $0x98] sm:$0xff]
        %v505 = vld [vmem:[#allocation5 + $0xa0] sm:$0xff]
        %v506 = vld [vmem:[#allocation5 + $0xa8] sm:$0xff]
        %v507 = vld [vmem:[#allocation5 + $0xb0] sm:$0xff]
        %v508 = vld [vmem:[#allocation5 + $0xb8] sm:$0xff]
        %v509 = vld [vmem:[#allocation5 + $0xc0] sm:$0xff]
        %v510 = vld [vmem:[#allocation5 + $0xc8] sm:$0xff]
        %v511 = vld [vmem:[#allocation5 + $0xd0] sm:$0xff]
        %v512 = vld [vmem:[#allocation5 + $0xd8] sm:$0xff]
        %v513 = vld [vmem:[#allocation5 + $0xe0] sm:$0xff]
        %v514 = vld [vmem:[#allocation5 + $0xe8] sm:$0xff]
        %v515 = vld [vmem:[#allocation5 + $0xf0] sm:$0xff]
        %v516 = vld [vmem:[#allocation5 + $0xf8] sm:$0xff]
        %v517 = vld [vmem:[#allocation5 + $0x100] sm:$0xff]
        %v518 = vld [vmem:[#allocation5 + $0x108] sm:$0xff]
        %v519 = vld [vmem:[#allocation5 + $0x110] sm:$0xff]
        %v520 = vld [vmem:[#allocation5 + $0x118] sm:$0xff]
        %v521 = vld [vmem:[#allocation5 + $0x120] sm:$0xff]
        %v522 = vld [vmem:[#allocation5 + $0x128] sm:$0xff]
        %v523 = vld [vmem:[#allocation5 + $0x130] sm:$0xff]
        %v524 = vld [vmem:[#allocation5 + $0x138] sm:$0xff]
        %v525 = vld [vmem:[#allocation5 + $0x140] sm:$0xff]
        %v526 = vld [vmem:[#allocation5 + $0x148] sm:$0xff]
        %v527 = vld [vmem:[#allocation5 + $0x150] sm:$0xff]
        %v528 = vld [vmem:[#allocation5 + $0x158] sm:$0xff]
        %v529 = vld [vmem:[#allocation5 + $0x160] sm:$0xff]
        %v530 = vld [vmem:[#allocation5 + $0x168] sm:$0xff]
        %v531 = vld [vmem:[#allocation5 + $0x170] sm:$0xff]
        %v532 = vld [vmem:[#allocation5 + $0x178] sm:$0xff]
        %v533 = vld [vmem:[#allocation5 + $0x180] sm:$0xff]
        %v534 = vld [vmem:[#allocation5 + $0x188] sm:$0xff]
        %v535 = vld [vmem:[#allocation5 + $0x190] sm:$0xff]
        %v536 = vld [vmem:[#allocation5 + $0x198] sm:$0xff]
        %v537 = vld [vmem:[#allocation5 + $0x1a0] sm:$0xff]
        %v538 = vld [vmem:[#allocation5 + $0x1a8] sm:$0xff]
        %v539 = vld [vmem:[#allocation5 + $0x1b0] sm:$0xff]
        %v540 = vld [vmem:[#allocation5 + $0x1b8] sm:$0xff]
        %v541 = vld [vmem:[#allocation5 + $0x1c0] sm:$0xff]
        %v542 = vld [vmem:[#allocation5 + $0x1c8] sm:$0xff]
        %v543 = vld [vmem:[#allocation5 + $0x1d0] sm:$0xff]
        %v544 = vld [vmem:[#allocation5 + $0x1d8] sm:$0xff]
        %v545 = vld [vmem:[#allocation5 + $0x1e0] sm:$0xff]
        %v546 = vld [vmem:[#allocation5 + $0x1e8] sm:$0xff]
        %v547 = vld [vmem:[#allocation5 + $0x1f0] sm:$0xff]
        %v548 = vld [vmem:[#allocation5 + $0x1f8] sm:$0xff]
        %v549 = vld [vmem:[#allocation5 + $0x200] sm:$0xff]
        %v550 = vld [vmem:[#allocation5 + $0x208] sm:$0xff]
        %v551 = vld [vmem:[#allocation5 + $0x210] sm:$0xff]
        %v552 = vld [vmem:[#allocation5 + $0x218] sm:$0xff]
        %v553 = vld [vmem:[#allocation5 + $0x220] sm:$0xff]
        %v554 = vld [vmem:[#allocation5 + $0x228] sm:$0xff]
        %v555 = vld [vmem:[#allocation5 + $0x230] sm:$0xff]
        %v556 = vld [vmem:[#allocation5 + $0x238] sm:$0xff]
        %v557 = vld [vmem:[#allocation5 + $0x240] sm:$0xff]
        %v558 = vld [vmem:[#allocation5 + $0x248] sm:$0xff]
        %v559 = vld [vmem:[#allocation5 + $0x250] sm:$0xff]
        %v560 = vld [vmem:[#allocation5 + $0x258] sm:$0xff]
        %v561 = vld [vmem:[#allocation5 + $0x260] sm:$0xff]
        %v562 = vld [vmem:[#allocation5 + $0x268] sm:$0xff]
        %v563 = vld [vmem:[#allocation5 + $0x270] sm:$0xff]
        %v564 = vld [vmem:[#allocation5 + $0x278] sm:$0xff]
        %v565 = vld [vmem:[#allocation5 + $0x280] sm:$0xff]
        %v566 = vld [vmem:[#allocation5 + $0x288] sm:$0xff]
        %v567 = vld [vmem:[#allocation5 + $0x290] sm:$0xff]
        %v568 = vld [vmem:[#allocation5 + $0x298] sm:$0xff]
        %v569 = vld [vmem:[#allocation5 + $0x2a0] sm:$0xff]
        %v570 = vld [vmem:[#allocation5 + $0x2a8] sm:$0xff]
        %v571 = vld [vmem:[#allocation5 + $0x2b0] sm:$0xff]
        %v572 = vld [vmem:[#allocation5 + $0x2b8] sm:$0xff]
        %v573 = vld [vmem:[#allocation5 + $0x2c0] sm:$0xff]
        %v574 = vld [vmem:[#allocation5 + $0x2c8] sm:$0xff]
        %v575 = vld [vmem:[#allocation5 + $0x2d0] sm:$0xff]
        %v576 = vld [vmem:[#allocation5 + $0x2d8] sm:$0xff]
        %v577 = vld [vmem:[#allocation5 + $0x2e0] sm:$0xff]
        %v578 = vld [vmem:[#allocation5 + $0x2e8] sm:$0xff]
        %v579 = vld [vmem:[#allocation5 + $0x2f0] sm:$0xff]
        %v580 = vld [vmem:[#allocation5 + $0x2f8] sm:$0xff]
        %v581 = vld [vmem:[#allocation5 + $0x300] sm:$0xff]
        %v582 = vld [vmem:[#allocation5 + $0x308] sm:$0xff]
        %v583 = vld [vmem:[#allocation5 + $0x310] sm:$0xff]
        %v584 = vld [vmem:[#allocation5 + $0x318] sm:$0xff]
        %v585 = vld [vmem:[#allocation5 + $0x320] sm:$0xff]
        %v586 = vld [vmem:[#allocation5 + $0x328] sm:$0xff]
        %v587 = vld [vmem:[#allocation5 + $0x330] sm:$0xff]
        %v588 = vld [vmem:[#allocation5 + $0x338] sm:$0xff]
        %v589 = vld [vmem:[#allocation5 + $0x340] sm:$0xff]
        %v590 = vld [vmem:[#allocation5 + $0x348] sm:$0xff]
        %v591 = vld [vmem:[#allocation5 + $0x350] sm:$0xff]
        %v592 = vld [vmem:[#allocation5 + $0x358] sm:$0xff]
        %v593 = vld [vmem:[#allocation5 + $0x360] sm:$0xff]
        %v594 = vld [vmem:[#allocation5 + $0x368] sm:$0xff]
        %v595 = vld [vmem:[#allocation5 + $0x370] sm:$0xff]
        %v596 = vld [vmem:[#allocation5 + $0x378] sm:$0xff]
        %v597 = vld [vmem:[#allocation5 + $0x380] sm:$0xff]
        %v598 = vld [vmem:[#allocation5 + $0x388] sm:$0xff]
        %v599 = vld [vmem:[#allocation5 + $0x390] sm:$0xff]
        %v600 = vld [vmem:[#allocation5 + $0x398] sm:$0xff]
        %v601 = vld [vmem:[#allocation5 + $0x3a0] sm:$0xff]
        %v602 = vld [vmem:[#allocation5 + $0x3a8] sm:$0xff]
        %v603 = vld [vmem:[#allocation5 + $0x3b0] sm:$0xff]
        %v604 = vld [vmem:[#allocation5 + $0x3b8] sm:$0xff]
        %v605 = vld [vmem:[#allocation5 + $0x3c0] sm:$0xff]
        %v606 = vld [vmem:[#allocation5 + $0x3c8] sm:$0xff]
        %v607 = vld [vmem:[#allocation5 + $0x3d0] sm:$0xff]
        %v608 = vld [vmem:[#allocation5 + $0x3d8] sm:$0xff]
        %v609 = vld [vmem:[#allocation5 + $0x3e0] sm:$0xff]
        %v610 = vld [vmem:[#allocation5 + $0x3e8] sm:$0xff]
        %v611 = vld [vmem:[#allocation5 + $0x3f0] sm:$0xff]
        %v612 = vld [vmem:[#allocation5 + $0x3f8] sm:$0xff]
        %v613 = vld [vmem:[#allocation5 + $0x400] sm:$0xff]
        %v614 = vld [vmem:[#allocation5 + $0x408] sm:$0xff]
        %v615 = vld [vmem:[#allocation5 + $0x410] sm:$0xff]
        %v616 = vld [vmem:[#allocation5 + $0x418] sm:$0xff]
        %v617 = vld [vmem:[#allocation5 + $0x420] sm:$0xff]
        %v618 = vld [vmem:[#allocation5 + $0x428] sm:$0xff]
        %v619 = vld [vmem:[#allocation5 + $0x430] sm:$0xff]
        %v620 = vld [vmem:[#allocation5 + $0x438] sm:$0xff]
        %v621 = vld [vmem:[#allocation5 + $0x440] sm:$0xff]
        %v622 = vld [vmem:[#allocation5 + $0x448] sm:$0xff]
        %v623 = vld [vmem:[#allocation5 + $0x450] sm:$0xff]
        %v624 = vld [vmem:[#allocation5 + $0x458] sm:$0xff]
        %v625 = vld [vmem:[#allocation5 + $0x460] sm:$0xff]
        %v626 = vld [vmem:[#allocation5 + $0x468] sm:$0xff]
        %v627 = vld [vmem:[#allocation5 + $0x470] sm:$0xff]
        %v628 = vld [vmem:[#allocation5 + $0x478] sm:$0xff]
        %v629 = vld [vmem:[#allocation5 + $0x480] sm:$0xff]
        %v630 = vld [vmem:[#allocation5 + $0x488] sm:$0xff]
        %v631 = vld [vmem:[#allocation5 + $0x490] sm:$0xff]
        %v632 = vld [vmem:[#allocation5 + $0x498] sm:$0xff]
        %v633 = vld [vmem:[#allocation5 + $0x4a0] sm:$0xff]
        %v634 = vld [vmem:[#allocation5 + $0x4a8] sm:$0xff]
        %v635 = vld [vmem:[#allocation5 + $0x4b0] sm:$0xff]
        %v636 = vld [vmem:[#allocation5 + $0x4b8] sm:$0xff]
        %v637 = vld [vmem:[#allocation5 + $0x4c0] sm:$0xff]
        %v638 = vld [vmem:[#allocation5 + $0x4c8] sm:$0xff]
        %v639 = vld [vmem:[#allocation5 + $0x4d0] sm:$0xff]
        %v640 = vld [vmem:[#allocation5 + $0x4d8] sm:$0xff]
        %v641 = vld [vmem:[#allocation5 + $0x4e0] sm:$0xff]
        %v642 = vld [vmem:[#allocation5 + $0x4e8] sm:$0xff]
        %v643 = vld [vmem:[#allocation5 + $0x4f0] sm:$0xff]
        %v644 = vld [vmem:[#allocation5 + $0x4f8] sm:$0xff]
        %v645 = vld [vmem:[#allocation5 + $0x500] sm:$0xff]
        %v646 = vld [vmem:[#allocation5 + $0x508] sm:$0xff]
        %v647 = vld [vmem:[#allocation5 + $0x510] sm:$0xff]
        %v648 = vld [vmem:[#allocation5 + $0x518] sm:$0xff]
        %v649 = vld [vmem:[#allocation5 + $0x520] sm:$0xff]
        %v650 = vld [vmem:[#allocation5 + $0x528] sm:$0xff]
        %v651 = vld [vmem:[#allocation5 + $0x530] sm:$0xff]
        %v652 = vld [vmem:[#allocation5 + $0x538] sm:$0xff]
        %v653 = vld [vmem:[#allocation5 + $0x540] sm:$0xff]
        %v654 = vld [vmem:[#allocation5 + $0x548] sm:$0xff]
        %v655 = vld [vmem:[#allocation5 + $0x550] sm:$0xff]
        %v656 = vld [vmem:[#allocation5 + $0x558] sm:$0xff]
        %v657 = vld [vmem:[#allocation5 + $0x560] sm:$0xff]
        %v658 = vld [vmem:[#allocation5 + $0x568] sm:$0xff]
        %v659 = vld [vmem:[#allocation5 + $0x570] sm:$0xff]
        %v660 = vld [vmem:[#allocation5 + $0x578] sm:$0xff]
        %v661 = vld [vmem:[#allocation5 + $0x580] sm:$0xff]
        %v662 = vld [vmem:[#allocation5 + $0x588] sm:$0xff]
        %v663 = vld [vmem:[#allocation5 + $0x590] sm:$0xff]
        %v664 = vld [vmem:[#allocation5 + $0x598] sm:$0xff]
        %v665 = vld [vmem:[#allocation5 + $0x5a0] sm:$0xff]
        %v666 = vld [vmem:[#allocation5 + $0x5a8] sm:$0xff]
        %v667 = vld [vmem:[#allocation5 + $0x5b0] sm:$0xff]
        %v668 = vld [vmem:[#allocation5 + $0x5b8] sm:$0xff]
        %v669 = vld [vmem:[#allocation5 + $0x5c0] sm:$0xff]
        %v670 = vld [vmem:[#allocation5 + $0x5c8] sm:$0xff]
        %v671 = vld [vmem:[#allocation5 + $0x5d0] sm:$0xff]
        %v672 = vld [vmem:[#allocation5 + $0x5d8] sm:$0xff]
        %v673 = vld [vmem:[#allocation5 + $0x5e0] sm:$0xff]
        %v674 = vld [vmem:[#allocation5 + $0x5e8] sm:$0xff]
        %v675 = vld [vmem:[#allocation5 + $0x5f0] sm:$0xff]
        %v676 = vld [vmem:[#allocation5 + $0x5f8] sm:$0xff]
        %v677 = vld [vmem:[#allocation5 + $0x600] sm:$0xff]
        %v678 = vld [vmem:[#allocation5 + $0x608] sm:$0xff]
        %v679 = vld [vmem:[#allocation5 + $0x610] sm:$0xff]
        %v680 = vld [vmem:[#allocation5 + $0x618] sm:$0xff]
        %v681 = vld [vmem:[#allocation5 + $0x620] sm:$0xff]
        %v682 = vld [vmem:[#allocation5 + $0x628] sm:$0xff]
        %v683 = vld [vmem:[#allocation5 + $0x630] sm:$0xff]
        %v684 = vld [vmem:[#allocation5 + $0x638] sm:$0xff]
        %v685 = vld [vmem:[#allocation5 + $0x640] sm:$0xff]
        %v686 = vld [vmem:[#allocation5 + $0x648] sm:$0xff]
        %v687 = vld [vmem:[#allocation5 + $0x650] sm:$0xff]
        %v688 = vld [vmem:[#allocation5 + $0x658] sm:$0xff]
        %v689 = vld [vmem:[#allocation5 + $0x660] sm:$0xff]
        %v690 = vld [vmem:[#allocation5 + $0x668] sm:$0xff]
        %v691 = vld [vmem:[#allocation5 + $0x670] sm:$0xff]
        %v692 = vld [vmem:[#allocation5 + $0x678] sm:$0xff]
        %v693 = vld [vmem:[#allocation5 + $0x680] sm:$0xff]
        %v694 = vld [vmem:[#allocation5 + $0x688] sm:$0xff]
        %v695 = vld [vmem:[#allocation5 + $0x690] sm:$0xff]
        %v696 = vld [vmem:[#allocation5 + $0x698] sm:$0xff]
        %v697 = vld [vmem:[#allocation5 + $0x6a0] sm:$0xff]
        %v698 = vld [vmem:[#allocation5 + $0x6a8] sm:$0xff]
        %v699 = vld [vmem:[#allocation5 + $0x6b0] sm:$0xff]
        %v700 = vld [vmem:[#allocation5 + $0x6b8] sm:$0xff]
        %v701 = vld [vmem:[#allocation5 + $0x6c0] sm:$0xff]
        %v702 = vld [vmem:[#allocation5 + $0x6c8] sm:$0xff]
        %v703 = vld [vmem:[#allocation5 + $0x6d0] sm:$0xff]
        %v704 = vld [vmem:[#allocation5 + $0x6d8] sm:$0xff]
        %v705 = vld [vmem:[#allocation5 + $0x6e0] sm:$0xff]
        %v706 = vld [vmem:[#allocation5 + $0x6e8] sm:$0xff]
        %v707 = vld [vmem:[#allocation5 + $0x6f0] sm:$0xff]
        %v708 = vld [vmem:[#allocation5 + $0x6f8] sm:$0xff]
        %v709 = vld [vmem:[#allocation7] sm:$0xf]
        %v711 = vlaneseq
        %v712 = vshrl.u32 %v711, 7
        %v713 = vsub.s32 0, %v712
        %v714 = vrot.slane %v709, %v713
        %v715 = vlaneseq
        %v716 = vshrl.u32 %v715, 7
        %v717 = vsub.s32 1, %v716
        %v718 = vrot.slane %v709, %v717
        %v719 = vlaneseq
        %v720 = vshrl.u32 %v719, 7
        %v721 = vsub.s32 2, %v720
        %v722 = vrot.slane %v709, %v721
        %v723 = vlaneseq
        %v724 = vshrl.u32 %v723, 7
        %v725 = vsub.s32 3, %v724
        %v726 = vrot.slane %v709, %v725
        %v859 = vunpack.c.l.b16 %v357
        %v860 = vunpack.c.h.b16 %v357
        %v861 = vunpack.c.l.b16 %v358
        %v862 = vunpack.c.h.b16 %v358
        %v863 = vunpack.c.l.b16 %v359
        %v864 = vunpack.c.h.b16 %v359
        %v865 = vunpack.c.l.b16 %v360
        %v866 = vunpack.c.l.b16 %v361
        %v867 = vunpack.c.h.b16 %v361
        %v868 = vunpack.c.l.b16 %v362
        %v869 = vunpack.c.h.b16 %v362
        %v870 = vunpack.c.l.b16 %v363
        %v871 = vunpack.c.h.b16 %v363
        %v872 = vunpack.c.l.b16 %v364
        %v873 = vunpack.c.l.b16 %v365
        %v874 = vunpack.c.h.b16 %v365
        %v875 = vunpack.c.l.b16 %v366
        %v876 = vunpack.c.h.b16 %v366
        %v877 = vunpack.c.l.b16 %v367
        %v878 = vunpack.c.h.b16 %v367
        %v879 = vunpack.c.l.b16 %v368
        %v880 = vunpack.c.l.b16 %v369
        %v881 = vunpack.c.h.b16 %v369
        %v882 = vunpack.c.l.b16 %v370
        %v883 = vunpack.c.h.b16 %v370
        %v884 = vunpack.c.l.b16 %v371
        %v885 = vunpack.c.h.b16 %v371
        %v886 = vunpack.c.l.b16 %v372
        %v887 = vunpack.c.l.b16 %v373
        %v888 = vunpack.c.h.b16 %v373
        %v889 = vunpack.c.l.b16 %v374
        %v890 = vunpack.c.h.b16 %v374
        %v891 = vunpack.c.l.b16 %v375
        %v892 = vunpack.c.h.b16 %v375
        %v893 = vunpack.c.l.b16 %v376
        %v894 = vunpack.c.l.b16 %v377
        %v895 = vunpack.c.h.b16 %v377
        %v896 = vunpack.c.l.b16 %v378
        %v897 = vunpack.c.h.b16 %v378
        %v898 = vunpack.c.l.b16 %v379
        %v899 = vunpack.c.h.b16 %v379
        %v900 = vunpack.c.l.b16 %v380
        %v901 = vunpack.c.l.b16 %v381
        %v902 = vunpack.c.h.b16 %v381
        %v903 = vunpack.c.l.b16 %v382
        %v904 = vunpack.c.h.b16 %v382
        %v905 = vunpack.c.l.b16 %v383
        %v906 = vunpack.c.h.b16 %v383
        %v907 = vunpack.c.l.b16 %v384
        %v908 = vunpack.c.l.b16 %v385
        %v909 = vunpack.c.h.b16 %v385
        %v910 = vunpack.c.l.b16 %v386
        %v911 = vunpack.c.h.b16 %v386
        %v912 = vunpack.c.l.b16 %v387
        %v913 = vunpack.c.h.b16 %v387
        %v914 = vunpack.c.l.b16 %v388
        %v915 = vunpack.c.l.b16 %v389
        %v916 = vunpack.c.h.b16 %v389
        %v917 = vunpack.c.l.b16 %v390
        %v918 = vunpack.c.h.b16 %v390
        %v919 = vunpack.c.l.b16 %v391
        %v920 = vunpack.c.h.b16 %v391
        %v921 = vunpack.c.l.b16 %v392
        %v922 = vunpack.c.l.b16 %v393
        %v923 = vunpack.c.h.b16 %v393
        %v924 = vunpack.c.l.b16 %v394
        %v925 = vunpack.c.h.b16 %v394
        %v926 = vunpack.c.l.b16 %v395
        %v927 = vunpack.c.h.b16 %v395
        %v928 = vunpack.c.l.b16 %v396
        %v929 = vunpack.c.l.b16 %v397
        %v930 = vunpack.c.h.b16 %v397
        %v931 = vunpack.c.l.b16 %v398
        %v932 = vunpack.c.h.b16 %v398
        %v933 = vunpack.c.l.b16 %v399
        %v934 = vunpack.c.h.b16 %v399
        %v935 = vunpack.c.l.b16 %v400
        %v936 = vunpack.c.l.b16 %v401
        %v937 = vunpack.c.h.b16 %v401
        %v938 = vunpack.c.l.b16 %v402
        %v939 = vunpack.c.h.b16 %v402
        %v940 = vunpack.c.l.b16 %v403
        %v941 = vunpack.c.h.b16 %v403
        %v942 = vunpack.c.l.b16 %v404
        %v943 = vunpack.c.l.b16 %v405
        %v944 = vunpack.c.h.b16 %v405
        %v945 = vunpack.c.l.b16 %v406
        %v946 = vunpack.c.h.b16 %v406
        %v947 = vunpack.c.l.b16 %v407
        %v948 = vunpack.c.h.b16 %v407
        %v949 = vunpack.c.l.b16 %v408
        %v950 = vunpack.c.l.b16 %v409
        %v951 = vunpack.c.h.b16 %v409
        %v952 = vunpack.c.l.b16 %v410
        %v953 = vunpack.c.h.b16 %v410
        %v954 = vunpack.c.l.b16 %v411
        %v955 = vunpack.c.h.b16 %v411
        %v956 = vunpack.c.l.b16 %v412
        %v957 = vunpack.c.l.b16 %v413
        %v958 = vunpack.c.h.b16 %v413
        %v959 = vunpack.c.l.b16 %v414
        %v960 = vunpack.c.h.b16 %v414
        %v961 = vunpack.c.l.b16 %v415
        %v962 = vunpack.c.h.b16 %v415
        %v963 = vunpack.c.l.b16 %v416
        %v964 = vunpack.c.l.b16 %v417
        %v965 = vunpack.c.h.b16 %v417
        %v966 = vunpack.c.l.b16 %v418
        %v967 = vunpack.c.h.b16 %v418
        %v968 = vunpack.c.l.b16 %v419
        %v969 = vunpack.c.h.b16 %v419
        %v970 = vunpack.c.l.b16 %v420
        %v971 = vunpack.c.l.b16 %v421
        %v972 = vunpack.c.h.b16 %v421
        %v973 = vunpack.c.l.b16 %v422
        %v974 = vunpack.c.h.b16 %v422
        %v975 = vunpack.c.l.b16 %v423
        %v976 = vunpack.c.h.b16 %v423
        %v977 = vunpack.c.l.b16 %v424
        %v978 = vunpack.c.l.b16 %v425
        %v979 = vunpack.c.h.b16 %v425
        %v980 = vunpack.c.l.b16 %v426
        %v981 = vunpack.c.h.b16 %v426
        %v982 = vunpack.c.l.b16 %v427
        %v983 = vunpack.c.h.b16 %v427
        %v984 = vunpack.c.l.b16 %v428
        %v985 = vunpack.c.l.b16 %v429
        %v986 = vunpack.c.h.b16 %v429
        %v987 = vunpack.c.l.b16 %v430
        %v988 = vunpack.c.h.b16 %v430
        %v989 = vunpack.c.l.b16 %v431
        %v990 = vunpack.c.h.b16 %v431
        %v991 = vunpack.c.l.b16 %v432
        %v992 = vunpack.c.l.b16 %v433
        %v993 = vunpack.c.h.b16 %v433
        %v994 = vunpack.c.l.b16 %v434
        %v995 = vunpack.c.h.b16 %v434
        %v996 = vunpack.c.l.b16 %v435
        %v997 = vunpack.c.h.b16 %v435
        %v998 = vunpack.c.l.b16 %v436
        %v999 = vunpack.c.l.b16 %v437
        %v1000 = vunpack.c.h.b16 %v437
        %v1001 = vunpack.c.l.b16 %v438
        %v1002 = vunpack.c.h.b16 %v438
        %v1003 = vunpack.c.l.b16 %v439
        %v1004 = vunpack.c.h.b16 %v439
        %v1005 = vunpack.c.l.b16 %v440
        %v1006 = vunpack.c.l.b16 %v441
        %v1007 = vunpack.c.h.b16 %v441
        %v1008 = vunpack.c.l.b16 %v442
        %v1009 = vunpack.c.h.b16 %v442
        %v1010 = vunpack.c.l.b16 %v443
        %v1011 = vunpack.c.h.b16 %v443
        %v1012 = vunpack.c.l.b16 %v444
        %v1013 = vunpack.c.l.b16 %v445
        %v1014 = vunpack.c.h.b16 %v445
        %v1015 = vunpack.c.l.b16 %v446
        %v1016 = vunpack.c.h.b16 %v446
        %v1017 = vunpack.c.l.b16 %v447
        %v1018 = vunpack.c.h.b16 %v447
        %v1019 = vunpack.c.l.b16 %v448
        %v1020 = vunpack.c.l.b16 %v449
        %v1021 = vunpack.c.h.b16 %v449
        %v1022 = vunpack.c.l.b16 %v450
        %v1023 = vunpack.c.h.b16 %v450
        %v1024 = vunpack.c.l.b16 %v451
        %v1025 = vunpack.c.h.b16 %v451
        %v1026 = vunpack.c.l.b16 %v452
        %v1027 = vunpack.c.l.b16 %v453
        %v1028 = vunpack.c.h.b16 %v453
        %v1029 = vunpack.c.l.b16 %v454
        %v1030 = vunpack.c.h.b16 %v454
        %v1031 = vunpack.c.l.b16 %v455
        %v1032 = vunpack.c.h.b16 %v455
        %v1033 = vunpack.c.l.b16 %v456
        %v1034 = vunpack.c.l.b16 %v457
        %v1035 = vunpack.c.h.b16 %v457
        %v1036 = vunpack.c.l.b16 %v458
        %v1037 = vunpack.c.h.b16 %v458
        %v1038 = vunpack.c.l.b16 %v459
        %v1039 = vunpack.c.h.b16 %v459
        %v1040 = vunpack.c.l.b16 %v460
        %v1041 = vunpack.c.l.b16 %v461
        %v1042 = vunpack.c.h.b16 %v461
        %v1043 = vunpack.c.l.b16 %v462
        %v1044 = vunpack.c.h.b16 %v462
        %v1045 = vunpack.c.l.b16 %v463
        %v1046 = vunpack.c.h.b16 %v463
        %v1047 = vunpack.c.l.b16 %v464
        %v1048 = vunpack.c.l.b16 %v465
        %v1049 = vunpack.c.h.b16 %v465
        %v1050 = vunpack.c.l.b16 %v466
        %v1051 = vunpack.c.h.b16 %v466
        %v1052 = vunpack.c.l.b16 %v467
        %v1053 = vunpack.c.h.b16 %v467
        %v1054 = vunpack.c.l.b16 %v468
        %v1055 = vunpack.c.l.b16 %v469
        %v1056 = vunpack.c.h.b16 %v469
        %v1057 = vunpack.c.l.b16 %v470
        %v1058 = vunpack.c.h.b16 %v470
        %v1059 = vunpack.c.l.b16 %v471
        %v1060 = vunpack.c.h.b16 %v471
        %v1061 = vunpack.c.l.b16 %v472
        %v1062 = vunpack.c.l.b16 %v473
        %v1063 = vunpack.c.h.b16 %v473
        %v1064 = vunpack.c.l.b16 %v474
        %v1065 = vunpack.c.h.b16 %v474
        %v1066 = vunpack.c.l.b16 %v475
        %v1067 = vunpack.c.h.b16 %v475
        %v1068 = vunpack.c.l.b16 %v476
        %v1069 = vunpack.c.l.b16 %v477
        %v1070 = vunpack.c.h.b16 %v477
        %v1071 = vunpack.c.l.b16 %v478
        %v1072 = vunpack.c.h.b16 %v478
        %v1073 = vunpack.c.l.b16 %v479
        %v1074 = vunpack.c.h.b16 %v479
        %v1075 = vunpack.c.l.b16 %v480
        %v1076 = vunpack.c.l.b16 %v481
        %v1077 = vunpack.c.h.b16 %v481
        %v1078 = vunpack.c.l.b16 %v482
        %v1079 = vunpack.c.h.b16 %v482
        %v1080 = vunpack.c.l.b16 %v483
        %v1081 = vunpack.c.h.b16 %v483
        %v1082 = vunpack.c.l.b16 %v484
        %v1083 = vpack.c.b16 %v866, %v859
        %v1084 = vpack.c.b16 %v867, %v860
        %v1085 = vpack.c.b16 %v868, %v861
        %v1086 = vpack.c.b16 %v869, %v862
        %v1087 = vpack.c.b16 %v870, %v863
        %v1088 = vpack.c.b16 %v871, %v864
        %v1089 = vpack.c.b16 %v872, %v865
        %v1090 = vpack.c.b16 %v880, %v873
        %v1091 = vpack.c.b16 %v881, %v874
        %v1092 = vpack.c.b16 %v882, %v875
        %v1093 = vpack.c.b16 %v883, %v876
        %v1094 = vpack.c.b16 %v884, %v877
        %v1095 = vpack.c.b16 %v885, %v878
        %v1096 = vpack.c.b16 %v886, %v879
        %v1097 = vpack.c.b16 %v894, %v887
        %v1098 = vpack.c.b16 %v895, %v888
        %v1099 = vpack.c.b16 %v896, %v889
        %v1100 = vpack.c.b16 %v897, %v890
        %v1101 = vpack.c.b16 %v898, %v891
        %v1102 = vpack.c.b16 %v899, %v892
        %v1103 = vpack.c.b16 %v900, %v893
        %v1104 = vpack.c.b16 %v908, %v901
        %v1105 = vpack.c.b16 %v909, %v902
        %v1106 = vpack.c.b16 %v910, %v903
        %v1107 = vpack.c.b16 %v911, %v904
        %v1108 = vpack.c.b16 %v912, %v905
        %v1109 = vpack.c.b16 %v913, %v906
        %v1110 = vpack.c.b16 %v914, %v907
        %v1111 = vpack.c.b16 %v922, %v915
        %v1112 = vpack.c.b16 %v923, %v916
        %v1113 = vpack.c.b16 %v924, %v917
        %v1114 = vpack.c.b16 %v925, %v918
        %v1115 = vpack.c.b16 %v926, %v919
        %v1116 = vpack.c.b16 %v927, %v920
        %v1117 = vpack.c.b16 %v928, %v921
        %v1118 = vpack.c.b16 %v936, %v929
        %v1119 = vpack.c.b16 %v937, %v930
        %v1120 = vpack.c.b16 %v938, %v931
        %v1121 = vpack.c.b16 %v939, %v932
        %v1122 = vpack.c.b16 %v940, %v933
        %v1123 = vpack.c.b16 %v941, %v934
        %v1124 = vpack.c.b16 %v942, %v935
        %v1125 = vpack.c.b16 %v950, %v943
        %v1126 = vpack.c.b16 %v951, %v944
        %v1127 = vpack.c.b16 %v952, %v945
        %v1128 = vpack.c.b16 %v953, %v946
        %v1129 = vpack.c.b16 %v954, %v947
        %v1130 = vpack.c.b16 %v955, %v948
        %v1131 = vpack.c.b16 %v956, %v949
        %v1132 = vpack.c.b16 %v964, %v957
        %v1133 = vpack.c.b16 %v965, %v958
        %v1134 = vpack.c.b16 %v966, %v959
        %v1135 = vpack.c.b16 %v967, %v960
        %v1136 = vpack.c.b16 %v968, %v961
        %v1137 = vpack.c.b16 %v969, %v962
        %v1138 = vpack.c.b16 %v970, %v963
        %v1139 = vpack.c.b16 %v978, %v971
        %v1140 = vpack.c.b16 %v979, %v972
        %v1141 = vpack.c.b16 %v980, %v973
        %v1142 = vpack.c.b16 %v981, %v974
        %v1143 = vpack.c.b16 %v982, %v975
        %v1144 = vpack.c.b16 %v983, %v976
        %v1145 = vpack.c.b16 %v984, %v977
        %v1146 = vpack.c.b16 %v992, %v985
        %v1147 = vpack.c.b16 %v993, %v986
        %v1148 = vpack.c.b16 %v994, %v987
        %v1149 = vpack.c.b16 %v995, %v988
        %v1150 = vpack.c.b16 %v996, %v989
        %v1151 = vpack.c.b16 %v997, %v990
        %v1152 = vpack.c.b16 %v998, %v991
        %v1153 = vpack.c.b16 %v1006, %v999
        %v1154 = vpack.c.b16 %v1007, %v1000
        %v1155 = vpack.c.b16 %v1008, %v1001
        %v1156 = vpack.c.b16 %v1009, %v1002
        %v1157 = vpack.c.b16 %v1010, %v1003
        %v1158 = vpack.c.b16 %v1011, %v1004
        %v1159 = vpack.c.b16 %v1012, %v1005
        %v1160 = vpack.c.b16 %v1020, %v1013
        %v1161 = vpack.c.b16 %v1021, %v1014
        %v1162 = vpack.c.b16 %v1022, %v1015
        %v1163 = vpack.c.b16 %v1023, %v1016
        %v1164 = vpack.c.b16 %v1024, %v1017
        %v1165 = vpack.c.b16 %v1025, %v1018
        %v1166 = vpack.c.b16 %v1026, %v1019
        %v1167 = vpack.c.b16 %v1034, %v1027
        %v1168 = vpack.c.b16 %v1035, %v1028
        %v1169 = vpack.c.b16 %v1036, %v1029
        %v1170 = vpack.c.b16 %v1037, %v1030
        %v1171 = vpack.c.b16 %v1038, %v1031
        %v1172 = vpack.c.b16 %v1039, %v1032
        %v1173 = vpack.c.b16 %v1040, %v1033
        %v1174 = vpack.c.b16 %v1048, %v1041
        %v1175 = vpack.c.b16 %v1049, %v1042
        %v1176 = vpack.c.b16 %v1050, %v1043
        %v1177 = vpack.c.b16 %v1051, %v1044
        %v1178 = vpack.c.b16 %v1052, %v1045
        %v1179 = vpack.c.b16 %v1053, %v1046
        %v1180 = vpack.c.b16 %v1054, %v1047
        %v1181 = vpack.c.b16 %v1062, %v1055
        %v1182 = vpack.c.b16 %v1063, %v1056
        %v1183 = vpack.c.b16 %v1064, %v1057
        %v1184 = vpack.c.b16 %v1065, %v1058
        %v1185 = vpack.c.b16 %v1066, %v1059
        %v1186 = vpack.c.b16 %v1067, %v1060
        %v1187 = vpack.c.b16 %v1068, %v1061
        %v1188 = vpack.c.b16 %v1076, %v1069
        %v1189 = vpack.c.b16 %v1077, %v1070
        %v1190 = vpack.c.b16 %v1078, %v1071
        %v1191 = vpack.c.b16 %v1079, %v1072
        %v1192 = vpack.c.b16 %v1080, %v1073
        %v1193 = vpack.c.b16 %v1081, %v1074
        %v1194 = vpack.c.b16 %v1082, %v1075
        %v1531 = vunpack.c.l.b16 %v485
        %v1532 = vunpack.c.h.b16 %v485
        %v1533 = vunpack.c.l.b16 %v486
        %v1534 = vunpack.c.h.b16 %v486
        %v1535 = vunpack.c.l.b16 %v487
        %v1536 = vunpack.c.h.b16 %v487
        %v1537 = vunpack.c.l.b16 %v488
        %v1538 = vunpack.c.h.b16 %v488
        %v1539 = vunpack.c.l.b16 %v489
        %v1540 = vunpack.c.h.b16 %v489
        %v1541 = vunpack.c.l.b16 %v490
        %v1542 = vunpack.c.h.b16 %v490
        %v1543 = vunpack.c.l.b16 %v491
        %v1544 = vunpack.c.h.b16 %v491
        %v1545 = vunpack.c.l.b16 %v492
        %v1546 = vunpack.c.h.b16 %v492
        %v1547 = vunpack.c.l.b16 %v493
        %v1548 = vunpack.c.h.b16 %v493
        %v1549 = vunpack.c.l.b16 %v494
        %v1550 = vunpack.c.h.b16 %v494
        %v1551 = vunpack.c.l.b16 %v495
        %v1552 = vunpack.c.h.b16 %v495
        %v1553 = vunpack.c.l.b16 %v496
        %v1554 = vunpack.c.h.b16 %v496
        %v1555 = vunpack.c.l.b16 %v497
        %v1556 = vunpack.c.h.b16 %v497
        %v1557 = vunpack.c.l.b16 %v498
        %v1558 = vunpack.c.h.b16 %v498
        %v1559 = vunpack.c.l.b16 %v499
        %v1560 = vunpack.c.h.b16 %v499
        %v1561 = vunpack.c.l.b16 %v500
        %v1562 = vunpack.c.h.b16 %v500
        %v1563 = vunpack.c.l.b16 %v501
        %v1564 = vunpack.c.h.b16 %v501
        %v1565 = vunpack.c.l.b16 %v502
        %v1566 = vunpack.c.h.b16 %v502
        %v1567 = vunpack.c.l.b16 %v503
        %v1568 = vunpack.c.h.b16 %v503
        %v1569 = vunpack.c.l.b16 %v504
        %v1570 = vunpack.c.h.b16 %v504
        %v1571 = vunpack.c.l.b16 %v505
        %v1572 = vunpack.c.h.b16 %v505
        %v1573 = vunpack.c.l.b16 %v506
        %v1574 = vunpack.c.h.b16 %v506
        %v1575 = vunpack.c.l.b16 %v507
        %v1576 = vunpack.c.h.b16 %v507
        %v1577 = vunpack.c.l.b16 %v508
        %v1578 = vunpack.c.h.b16 %v508
        %v1579 = vunpack.c.l.b16 %v509
        %v1580 = vunpack.c.h.b16 %v509
        %v1581 = vunpack.c.l.b16 %v510
        %v1582 = vunpack.c.h.b16 %v510
        %v1583 = vunpack.c.l.b16 %v511
        %v1584 = vunpack.c.h.b16 %v511
        %v1585 = vunpack.c.l.b16 %v512
        %v1586 = vunpack.c.h.b16 %v512
        %v1587 = vunpack.c.l.b16 %v513
        %v1588 = vunpack.c.h.b16 %v513
        %v1589 = vunpack.c.l.b16 %v514
        %v1590 = vunpack.c.h.b16 %v514
        %v1591 = vunpack.c.l.b16 %v515
        %v1592 = vunpack.c.h.b16 %v515
        %v1593 = vunpack.c.l.b16 %v516
        %v1594 = vunpack.c.h.b16 %v516
        %v1595 = vunpack.c.l.b16 %v517
        %v1596 = vunpack.c.h.b16 %v517
        %v1597 = vunpack.c.l.b16 %v518
        %v1598 = vunpack.c.h.b16 %v518
        %v1599 = vunpack.c.l.b16 %v519
        %v1600 = vunpack.c.h.b16 %v519
        %v1601 = vunpack.c.l.b16 %v520
        %v1602 = vunpack.c.h.b16 %v520
        %v1603 = vunpack.c.l.b16 %v521
        %v1604 = vunpack.c.h.b16 %v521
        %v1605 = vunpack.c.l.b16 %v522
        %v1606 = vunpack.c.h.b16 %v522
        %v1607 = vunpack.c.l.b16 %v523
        %v1608 = vunpack.c.h.b16 %v523
        %v1609 = vunpack.c.l.b16 %v524
        %v1610 = vunpack.c.h.b16 %v524
        %v1611 = vunpack.c.l.b16 %v525
        %v1612 = vunpack.c.h.b16 %v525
        %v1613 = vunpack.c.l.b16 %v526
        %v1614 = vunpack.c.h.b16 %v526
        %v1615 = vunpack.c.l.b16 %v527
        %v1616 = vunpack.c.h.b16 %v527
        %v1617 = vunpack.c.l.b16 %v528
        %v1618 = vunpack.c.h.b16 %v528
        %v1619 = vunpack.c.l.b16 %v529
        %v1620 = vunpack.c.h.b16 %v529
        %v1621 = vunpack.c.l.b16 %v530
        %v1622 = vunpack.c.h.b16 %v530
        %v1623 = vunpack.c.l.b16 %v531
        %v1624 = vunpack.c.h.b16 %v531
        %v1625 = vunpack.c.l.b16 %v532
        %v1626 = vunpack.c.h.b16 %v532
        %v1627 = vunpack.c.l.b16 %v533
        %v1628 = vunpack.c.h.b16 %v533
        %v1629 = vunpack.c.l.b16 %v534
        %v1630 = vunpack.c.h.b16 %v534
        %v1631 = vunpack.c.l.b16 %v535
        %v1632 = vunpack.c.h.b16 %v535
        %v1633 = vunpack.c.l.b16 %v536
        %v1634 = vunpack.c.h.b16 %v536
        %v1635 = vunpack.c.l.b16 %v537
        %v1636 = vunpack.c.h.b16 %v537
        %v1637 = vunpack.c.l.b16 %v538
        %v1638 = vunpack.c.h.b16 %v538
        %v1639 = vunpack.c.l.b16 %v539
        %v1640 = vunpack.c.h.b16 %v539
        %v1641 = vunpack.c.l.b16 %v540
        %v1642 = vunpack.c.h.b16 %v540
        %v1643 = vunpack.c.l.b16 %v541
        %v1644 = vunpack.c.h.b16 %v541
        %v1645 = vunpack.c.l.b16 %v542
        %v1646 = vunpack.c.h.b16 %v542
        %v1647 = vunpack.c.l.b16 %v543
        %v1648 = vunpack.c.h.b16 %v543
        %v1649 = vunpack.c.l.b16 %v544
        %v1650 = vunpack.c.h.b16 %v544
        %v1651 = vunpack.c.l.b16 %v545
        %v1652 = vunpack.c.h.b16 %v545
        %v1653 = vunpack.c.l.b16 %v546
        %v1654 = vunpack.c.h.b16 %v546
        %v1655 = vunpack.c.l.b16 %v547
        %v1656 = vunpack.c.h.b16 %v547
        %v1657 = vunpack.c.l.b16 %v548
        %v1658 = vunpack.c.h.b16 %v548
        %v1659 = vunpack.c.l.b16 %v549
        %v1660 = vunpack.c.h.b16 %v549
        %v1661 = vunpack.c.l.b16 %v550
        %v1662 = vunpack.c.h.b16 %v550
        %v1663 = vunpack.c.l.b16 %v551
        %v1664 = vunpack.c.h.b16 %v551
        %v1665 = vunpack.c.l.b16 %v552
        %v1666 = vunpack.c.h.b16 %v552
        %v1667 = vunpack.c.l.b16 %v553
        %v1668 = vunpack.c.h.b16 %v553
        %v1669 = vunpack.c.l.b16 %v554
        %v1670 = vunpack.c.h.b16 %v554
        %v1671 = vunpack.c.l.b16 %v555
        %v1672 = vunpack.c.h.b16 %v555
        %v1673 = vunpack.c.l.b16 %v556
        %v1674 = vunpack.c.h.b16 %v556
        %v1675 = vunpack.c.l.b16 %v557
        %v1676 = vunpack.c.h.b16 %v557
        %v1677 = vunpack.c.l.b16 %v558
        %v1678 = vunpack.c.h.b16 %v558
        %v1679 = vunpack.c.l.b16 %v559
        %v1680 = vunpack.c.h.b16 %v559
        %v1681 = vunpack.c.l.b16 %v560
        %v1682 = vunpack.c.h.b16 %v560
        %v1683 = vunpack.c.l.b16 %v561
        %v1684 = vunpack.c.h.b16 %v561
        %v1685 = vunpack.c.l.b16 %v562
        %v1686 = vunpack.c.h.b16 %v562
        %v1687 = vunpack.c.l.b16 %v563
        %v1688 = vunpack.c.h.b16 %v563
        %v1689 = vunpack.c.l.b16 %v564
        %v1690 = vunpack.c.h.b16 %v564
        %v1691 = vunpack.c.l.b16 %v565
        %v1692 = vunpack.c.h.b16 %v565
        %v1693 = vunpack.c.l.b16 %v566
        %v1694 = vunpack.c.h.b16 %v566
        %v1695 = vunpack.c.l.b16 %v567
        %v1696 = vunpack.c.h.b16 %v567
        %v1697 = vunpack.c.l.b16 %v568
        %v1698 = vunpack.c.h.b16 %v568
        %v1699 = vunpack.c.l.b16 %v569
        %v1700 = vunpack.c.h.b16 %v569
        %v1701 = vunpack.c.l.b16 %v570
        %v1702 = vunpack.c.h.b16 %v570
        %v1703 = vunpack.c.l.b16 %v571
        %v1704 = vunpack.c.h.b16 %v571
        %v1705 = vunpack.c.l.b16 %v572
        %v1706 = vunpack.c.h.b16 %v572
        %v1707 = vunpack.c.l.b16 %v573
        %v1708 = vunpack.c.h.b16 %v573
        %v1709 = vunpack.c.l.b16 %v574
        %v1710 = vunpack.c.h.b16 %v574
        %v1711 = vunpack.c.l.b16 %v575
        %v1712 = vunpack.c.h.b16 %v575
        %v1713 = vunpack.c.l.b16 %v576
        %v1714 = vunpack.c.h.b16 %v576
        %v1715 = vunpack.c.l.b16 %v577
        %v1716 = vunpack.c.h.b16 %v577
        %v1717 = vunpack.c.l.b16 %v578
        %v1718 = vunpack.c.h.b16 %v578
        %v1719 = vunpack.c.l.b16 %v579
        %v1720 = vunpack.c.h.b16 %v579
        %v1721 = vunpack.c.l.b16 %v580
        %v1722 = vunpack.c.h.b16 %v580
        %v1723 = vunpack.c.l.b16 %v581
        %v1724 = vunpack.c.h.b16 %v581
        %v1725 = vunpack.c.l.b16 %v582
        %v1726 = vunpack.c.h.b16 %v582
        %v1727 = vunpack.c.l.b16 %v583
        %v1728 = vunpack.c.h.b16 %v583
        %v1729 = vunpack.c.l.b16 %v584
        %v1730 = vunpack.c.h.b16 %v584
        %v1731 = vunpack.c.l.b16 %v585
        %v1732 = vunpack.c.h.b16 %v585
        %v1733 = vunpack.c.l.b16 %v586
        %v1734 = vunpack.c.h.b16 %v586
        %v1735 = vunpack.c.l.b16 %v587
        %v1736 = vunpack.c.h.b16 %v587
        %v1737 = vunpack.c.l.b16 %v588
        %v1738 = vunpack.c.h.b16 %v588
        %v1739 = vunpack.c.l.b16 %v589
        %v1740 = vunpack.c.h.b16 %v589
        %v1741 = vunpack.c.l.b16 %v590
        %v1742 = vunpack.c.h.b16 %v590
        %v1743 = vunpack.c.l.b16 %v591
        %v1744 = vunpack.c.h.b16 %v591
        %v1745 = vunpack.c.l.b16 %v592
        %v1746 = vunpack.c.h.b16 %v592
        %v1747 = vunpack.c.l.b16 %v593
        %v1748 = vunpack.c.h.b16 %v593
        %v1749 = vunpack.c.l.b16 %v594
        %v1750 = vunpack.c.h.b16 %v594
        %v1751 = vunpack.c.l.b16 %v595
        %v1752 = vunpack.c.h.b16 %v595
        %v1753 = vunpack.c.l.b16 %v596
        %v1754 = vunpack.c.h.b16 %v596
        %v1755 = vunpack.c.l.b16 %v597
        %v1756 = vunpack.c.h.b16 %v597
        %v1757 = vunpack.c.l.b16 %v598
        %v1758 = vunpack.c.h.b16 %v598
        %v1759 = vunpack.c.l.b16 %v599
        %v1760 = vunpack.c.h.b16 %v599
        %v1761 = vunpack.c.l.b16 %v600
        %v1762 = vunpack.c.h.b16 %v600
        %v1763 = vunpack.c.l.b16 %v601
        %v1764 = vunpack.c.h.b16 %v601
        %v1765 = vunpack.c.l.b16 %v602
        %v1766 = vunpack.c.h.b16 %v602
        %v1767 = vunpack.c.l.b16 %v603
        %v1768 = vunpack.c.h.b16 %v603
        %v1769 = vunpack.c.l.b16 %v604
        %v1770 = vunpack.c.h.b16 %v604
        %v1771 = vunpack.c.l.b16 %v605
        %v1772 = vunpack.c.h.b16 %v605
        %v1773 = vunpack.c.l.b16 %v606
        %v1774 = vunpack.c.h.b16 %v606
        %v1775 = vunpack.c.l.b16 %v607
        %v1776 = vunpack.c.h.b16 %v607
        %v1777 = vunpack.c.l.b16 %v608
        %v1778 = vunpack.c.h.b16 %v608
        %v1779 = vunpack.c.l.b16 %v609
        %v1780 = vunpack.c.h.b16 %v609
        %v1781 = vunpack.c.l.b16 %v610
        %v1782 = vunpack.c.h.b16 %v610
        %v1783 = vunpack.c.l.b16 %v611
        %v1784 = vunpack.c.h.b16 %v611
        %v1785 = vunpack.c.l.b16 %v612
        %v1786 = vunpack.c.h.b16 %v612
        %v1787 = vunpack.c.l.b16 %v613
        %v1788 = vunpack.c.h.b16 %v613
        %v1789 = vunpack.c.l.b16 %v614
        %v1790 = vunpack.c.h.b16 %v614
        %v1791 = vunpack.c.l.b16 %v615
        %v1792 = vunpack.c.h.b16 %v615
        %v1793 = vunpack.c.l.b16 %v616
        %v1794 = vunpack.c.h.b16 %v616
        %v1795 = vunpack.c.l.b16 %v617
        %v1796 = vunpack.c.h.b16 %v617
        %v1797 = vunpack.c.l.b16 %v618
        %v1798 = vunpack.c.h.b16 %v618
        %v1799 = vunpack.c.l.b16 %v619
        %v1800 = vunpack.c.h.b16 %v619
        %v1801 = vunpack.c.l.b16 %v620
        %v1802 = vunpack.c.h.b16 %v620
        %v1803 = vunpack.c.l.b16 %v621
        %v1804 = vunpack.c.h.b16 %v621
        %v1805 = vunpack.c.l.b16 %v622
        %v1806 = vunpack.c.h.b16 %v622
        %v1807 = vunpack.c.l.b16 %v623
        %v1808 = vunpack.c.h.b16 %v623
        %v1809 = vunpack.c.l.b16 %v624
        %v1810 = vunpack.c.h.b16 %v624
        %v1811 = vunpack.c.l.b16 %v625
        %v1812 = vunpack.c.h.b16 %v625
        %v1813 = vunpack.c.l.b16 %v626
        %v1814 = vunpack.c.h.b16 %v626
        %v1815 = vunpack.c.l.b16 %v627
        %v1816 = vunpack.c.h.b16 %v627
        %v1817 = vunpack.c.l.b16 %v628
        %v1818 = vunpack.c.h.b16 %v628
        %v1819 = vunpack.c.l.b16 %v629
        %v1820 = vunpack.c.h.b16 %v629
        %v1821 = vunpack.c.l.b16 %v630
        %v1822 = vunpack.c.h.b16 %v630
        %v1823 = vunpack.c.l.b16 %v631
        %v1824 = vunpack.c.h.b16 %v631
        %v1825 = vunpack.c.l.b16 %v632
        %v1826 = vunpack.c.h.b16 %v632
        %v1827 = vunpack.c.l.b16 %v633
        %v1828 = vunpack.c.h.b16 %v633
        %v1829 = vunpack.c.l.b16 %v634
        %v1830 = vunpack.c.h.b16 %v634
        %v1831 = vunpack.c.l.b16 %v635
        %v1832 = vunpack.c.h.b16 %v635
        %v1833 = vunpack.c.l.b16 %v636
        %v1834 = vunpack.c.h.b16 %v636
        %v1835 = vunpack.c.l.b16 %v637
        %v1836 = vunpack.c.h.b16 %v637
        %v1837 = vunpack.c.l.b16 %v638
        %v1838 = vunpack.c.h.b16 %v638
        %v1839 = vunpack.c.l.b16 %v639
        %v1840 = vunpack.c.h.b16 %v639
        %v1841 = vunpack.c.l.b16 %v640
        %v1842 = vunpack.c.h.b16 %v640
        %v1843 = vunpack.c.l.b16 %v641
        %v1844 = vunpack.c.h.b16 %v641
        %v1845 = vunpack.c.l.b16 %v642
        %v1846 = vunpack.c.h.b16 %v642
        %v1847 = vunpack.c.l.b16 %v643
        %v1848 = vunpack.c.h.b16 %v643
        %v1849 = vunpack.c.l.b16 %v644
        %v1850 = vunpack.c.h.b16 %v644
        %v1851 = vunpack.c.l.b16 %v645
        %v1852 = vunpack.c.h.b16 %v645
        %v1853 = vunpack.c.l.b16 %v646
        %v1854 = vunpack.c.h.b16 %v646
        %v1855 = vunpack.c.l.b16 %v647
        %v1856 = vunpack.c.h.b16 %v647
        %v1857 = vunpack.c.l.b16 %v648
        %v1858 = vunpack.c.h.b16 %v648
        %v1859 = vunpack.c.l.b16 %v649
        %v1860 = vunpack.c.h.b16 %v649
        %v1861 = vunpack.c.l.b16 %v650
        %v1862 = vunpack.c.h.b16 %v650
        %v1863 = vunpack.c.l.b16 %v651
        %v1864 = vunpack.c.h.b16 %v651
        %v1865 = vunpack.c.l.b16 %v652
        %v1866 = vunpack.c.h.b16 %v652
        %v1867 = vunpack.c.l.b16 %v653
        %v1868 = vunpack.c.h.b16 %v653
        %v1869 = vunpack.c.l.b16 %v654
        %v1870 = vunpack.c.h.b16 %v654
        %v1871 = vunpack.c.l.b16 %v655
        %v1872 = vunpack.c.h.b16 %v655
        %v1873 = vunpack.c.l.b16 %v656
        %v1874 = vunpack.c.h.b16 %v656
        %v1875 = vunpack.c.l.b16 %v657
        %v1876 = vunpack.c.h.b16 %v657
        %v1877 = vunpack.c.l.b16 %v658
        %v1878 = vunpack.c.h.b16 %v658
        %v1879 = vunpack.c.l.b16 %v659
        %v1880 = vunpack.c.h.b16 %v659
        %v1881 = vunpack.c.l.b16 %v660
        %v1882 = vunpack.c.h.b16 %v660
        %v1883 = vunpack.c.l.b16 %v661
        %v1884 = vunpack.c.h.b16 %v661
        %v1885 = vunpack.c.l.b16 %v662
        %v1886 = vunpack.c.h.b16 %v662
        %v1887 = vunpack.c.l.b16 %v663
        %v1888 = vunpack.c.h.b16 %v663
        %v1889 = vunpack.c.l.b16 %v664
        %v1890 = vunpack.c.h.b16 %v664
        %v1891 = vunpack.c.l.b16 %v665
        %v1892 = vunpack.c.h.b16 %v665
        %v1893 = vunpack.c.l.b16 %v666
        %v1894 = vunpack.c.h.b16 %v666
        %v1895 = vunpack.c.l.b16 %v667
        %v1896 = vunpack.c.h.b16 %v667
        %v1897 = vunpack.c.l.b16 %v668
        %v1898 = vunpack.c.h.b16 %v668
        %v1899 = vunpack.c.l.b16 %v669
        %v1900 = vunpack.c.h.b16 %v669
        %v1901 = vunpack.c.l.b16 %v670
        %v1902 = vunpack.c.h.b16 %v670
        %v1903 = vunpack.c.l.b16 %v671
        %v1904 = vunpack.c.h.b16 %v671
        %v1905 = vunpack.c.l.b16 %v672
        %v1906 = vunpack.c.h.b16 %v672
        %v1907 = vunpack.c.l.b16 %v673
        %v1908 = vunpack.c.h.b16 %v673
        %v1909 = vunpack.c.l.b16 %v674
        %v1910 = vunpack.c.h.b16 %v674
        %v1911 = vunpack.c.l.b16 %v675
        %v1912 = vunpack.c.h.b16 %v675
        %v1913 = vunpack.c.l.b16 %v676
        %v1914 = vunpack.c.h.b16 %v676
        %v1915 = vunpack.c.l.b16 %v677
        %v1916 = vunpack.c.h.b16 %v677
        %v1917 = vunpack.c.l.b16 %v678
        %v1918 = vunpack.c.h.b16 %v678
        %v1919 = vunpack.c.l.b16 %v679
        %v1920 = vunpack.c.h.b16 %v679
        %v1921 = vunpack.c.l.b16 %v680
        %v1922 = vunpack.c.h.b16 %v680
        %v1923 = vunpack.c.l.b16 %v681
        %v1924 = vunpack.c.h.b16 %v681
        %v1925 = vunpack.c.l.b16 %v682
        %v1926 = vunpack.c.h.b16 %v682
        %v1927 = vunpack.c.l.b16 %v683
        %v1928 = vunpack.c.h.b16 %v683
        %v1929 = vunpack.c.l.b16 %v684
        %v1930 = vunpack.c.h.b16 %v684
        %v1931 = vunpack.c.l.b16 %v685
        %v1932 = vunpack.c.h.b16 %v685
        %v1933 = vunpack.c.l.b16 %v686
        %v1934 = vunpack.c.h.b16 %v686
        %v1935 = vunpack.c.l.b16 %v687
        %v1936 = vunpack.c.h.b16 %v687
        %v1937 = vunpack.c.l.b16 %v688
        %v1938 = vunpack.c.h.b16 %v688
        %v1939 = vunpack.c.l.b16 %v689
        %v1940 = vunpack.c.h.b16 %v689
        %v1941 = vunpack.c.l.b16 %v690
        %v1942 = vunpack.c.h.b16 %v690
        %v1943 = vunpack.c.l.b16 %v691
        %v1944 = vunpack.c.h.b16 %v691
        %v1945 = vunpack.c.l.b16 %v692
        %v1946 = vunpack.c.h.b16 %v692
        %v1947 = vunpack.c.l.b16 %v693
        %v1948 = vunpack.c.h.b16 %v693
        %v1949 = vunpack.c.l.b16 %v694
        %v1950 = vunpack.c.h.b16 %v694
        %v1951 = vunpack.c.l.b16 %v695
        %v1952 = vunpack.c.h.b16 %v695
        %v1953 = vunpack.c.l.b16 %v696
        %v1954 = vunpack.c.h.b16 %v696
        %v1955 = vunpack.c.l.b16 %v697
        %v1956 = vunpack.c.h.b16 %v697
        %v1957 = vunpack.c.l.b16 %v698
        %v1958 = vunpack.c.h.b16 %v698
        %v1959 = vunpack.c.l.b16 %v699
        %v1960 = vunpack.c.h.b16 %v699
        %v1961 = vunpack.c.l.b16 %v700
        %v1962 = vunpack.c.h.b16 %v700
        %v1963 = vunpack.c.l.b16 %v701
        %v1964 = vunpack.c.h.b16 %v701
        %v1965 = vunpack.c.l.b16 %v702
        %v1966 = vunpack.c.h.b16 %v702
        %v1967 = vunpack.c.l.b16 %v703
        %v1968 = vunpack.c.h.b16 %v703
        %v1969 = vunpack.c.l.b16 %v704
        %v1970 = vunpack.c.h.b16 %v704
        %v1971 = vunpack.c.l.b16 %v705
        %v1972 = vunpack.c.h.b16 %v705
        %v1973 = vunpack.c.l.b16 %v706
        %v1974 = vunpack.c.h.b16 %v706
        %v1975 = vunpack.c.l.b16 %v707
        %v1976 = vunpack.c.h.b16 %v707
        %v1977 = vunpack.c.l.b16 %v708
        %v1978 = vunpack.c.h.b16 %v708
        %v1979 = vpack.c.b16 %v1535, %v1531
        %v1980 = vpack.c.b16 %v1536, %v1532
        %v1981 = vpack.c.b16 %v1537, %v1533
        %v1982 = vpack.c.b16 %v1538, %v1534
        %v1983 = vpack.c.b16 %v1543, %v1539
        %v1984 = vpack.c.b16 %v1544, %v1540
        %v1985 = vpack.c.b16 %v1545, %v1541
        %v1986 = vpack.c.b16 %v1546, %v1542
        %v1987 = vpack.c.b16 %v1551, %v1547
        %v1988 = vpack.c.b16 %v1552, %v1548
        %v1989 = vpack.c.b16 %v1553, %v1549
        %v1990 = vpack.c.b16 %v1554, %v1550
        %v1991 = vpack.c.b16 %v1559, %v1555
        %v1992 = vpack.c.b16 %v1560, %v1556
        %v1993 = vpack.c.b16 %v1561, %v1557
        %v1994 = vpack.c.b16 %v1562, %v1558
        %v1995 = vpack.c.b16 %v1567, %v1563
        %v1996 = vpack.c.b16 %v1568, %v1564
        %v1997 = vpack.c.b16 %v1569, %v1565
        %v1998 = vpack.c.b16 %v1570, %v1566
        %v1999 = vpack.c.b16 %v1575, %v1571
        %v2000 = vpack.c.b16 %v1576, %v1572
        %v2001 = vpack.c.b16 %v1577, %v1573
        %v2002 = vpack.c.b16 %v1578, %v1574
        %v2003 = vpack.c.b16 %v1583, %v1579
        %v2004 = vpack.c.b16 %v1584, %v1580
        %v2005 = vpack.c.b16 %v1585, %v1581
        %v2006 = vpack.c.b16 %v1586, %v1582
        %v2007 = vpack.c.b16 %v1591, %v1587
        %v2008 = vpack.c.b16 %v1592, %v1588
        %v2009 = vpack.c.b16 %v1593, %v1589
        %v2010 = vpack.c.b16 %v1594, %v1590
        %v2011 = vpack.c.b16 %v1599, %v1595
        %v2012 = vpack.c.b16 %v1600, %v1596
        %v2013 = vpack.c.b16 %v1601, %v1597
        %v2014 = vpack.c.b16 %v1602, %v1598
        %v2015 = vpack.c.b16 %v1607, %v1603
        %v2016 = vpack.c.b16 %v1608, %v1604
        %v2017 = vpack.c.b16 %v1609, %v1605
        %v2018 = vpack.c.b16 %v1610, %v1606
        %v2019 = vpack.c.b16 %v1615, %v1611
        %v2020 = vpack.c.b16 %v1616, %v1612
        %v2021 = vpack.c.b16 %v1617, %v1613
        %v2022 = vpack.c.b16 %v1618, %v1614
        %v2023 = vpack.c.b16 %v1623, %v1619
        %v2024 = vpack.c.b16 %v1624, %v1620
        %v2025 = vpack.c.b16 %v1625, %v1621
        %v2026 = vpack.c.b16 %v1626, %v1622
        %v2027 = vpack.c.b16 %v1631, %v1627
        %v2028 = vpack.c.b16 %v1632, %v1628
        %v2029 = vpack.c.b16 %v1633, %v1629
        %v2030 = vpack.c.b16 %v1634, %v1630
        %v2031 = vpack.c.b16 %v1639, %v1635
        %v2032 = vpack.c.b16 %v1640, %v1636
        %v2033 = vpack.c.b16 %v1641, %v1637
        %v2034 = vpack.c.b16 %v1642, %v1638
        %v2035 = vpack.c.b16 %v1647, %v1643
        %v2036 = vpack.c.b16 %v1648, %v1644
        %v2037 = vpack.c.b16 %v1649, %v1645
        %v2038 = vpack.c.b16 %v1650, %v1646
        %v2039 = vpack.c.b16 %v1655, %v1651
        %v2040 = vpack.c.b16 %v1656, %v1652
        %v2041 = vpack.c.b16 %v1657, %v1653
        %v2042 = vpack.c.b16 %v1658, %v1654
        %v2043 = vpack.c.b16 %v1663, %v1659
        %v2044 = vpack.c.b16 %v1664, %v1660
        %v2045 = vpack.c.b16 %v1665, %v1661
        %v2046 = vpack.c.b16 %v1666, %v1662
        %v2047 = vpack.c.b16 %v1671, %v1667
        %v2048 = vpack.c.b16 %v1672, %v1668
        %v2049 = vpack.c.b16 %v1673, %v1669
        %v2050 = vpack.c.b16 %v1674, %v1670
        %v2051 = vpack.c.b16 %v1679, %v1675
        %v2052 = vpack.c.b16 %v1680, %v1676
        %v2053 = vpack.c.b16 %v1681, %v1677
        %v2054 = vpack.c.b16 %v1682, %v1678
        %v2055 = vpack.c.b16 %v1687, %v1683
        %v2056 = vpack.c.b16 %v1688, %v1684
        %v2057 = vpack.c.b16 %v1689, %v1685
        %v2058 = vpack.c.b16 %v1690, %v1686
        %v2059 = vpack.c.b16 %v1695, %v1691
        %v2060 = vpack.c.b16 %v1696, %v1692
        %v2061 = vpack.c.b16 %v1697, %v1693
        %v2062 = vpack.c.b16 %v1698, %v1694
        %v2063 = vpack.c.b16 %v1703, %v1699
        %v2064 = vpack.c.b16 %v1704, %v1700
        %v2065 = vpack.c.b16 %v1705, %v1701
        %v2066 = vpack.c.b16 %v1706, %v1702
        %v2067 = vpack.c.b16 %v1711, %v1707
        %v2068 = vpack.c.b16 %v1712, %v1708
        %v2069 = vpack.c.b16 %v1713, %v1709
        %v2070 = vpack.c.b16 %v1714, %v1710
        %v2071 = vpack.c.b16 %v1719, %v1715
        %v2072 = vpack.c.b16 %v1720, %v1716
        %v2073 = vpack.c.b16 %v1721, %v1717
        %v2074 = vpack.c.b16 %v1722, %v1718
        %v2075 = vpack.c.b16 %v1727, %v1723
        %v2076 = vpack.c.b16 %v1728, %v1724
        %v2077 = vpack.c.b16 %v1729, %v1725
        %v2078 = vpack.c.b16 %v1730, %v1726
        %v2079 = vpack.c.b16 %v1735, %v1731
        %v2080 = vpack.c.b16 %v1736, %v1732
        %v2081 = vpack.c.b16 %v1737, %v1733
        %v2082 = vpack.c.b16 %v1738, %v1734
        %v2083 = vpack.c.b16 %v1743, %v1739
        %v2084 = vpack.c.b16 %v1744, %v1740
        %v2085 = vpack.c.b16 %v1745, %v1741
        %v2086 = vpack.c.b16 %v1746, %v1742
        %v2087 = vpack.c.b16 %v1751, %v1747
        %v2088 = vpack.c.b16 %v1752, %v1748
        %v2089 = vpack.c.b16 %v1753, %v1749
        %v2090 = vpack.c.b16 %v1754, %v1750
        %v2091 = vpack.c.b16 %v1759, %v1755
        %v2092 = vpack.c.b16 %v1760, %v1756
        %v2093 = vpack.c.b16 %v1761, %v1757
        %v2094 = vpack.c.b16 %v1762, %v1758
        %v2095 = vpack.c.b16 %v1767, %v1763
        %v2096 = vpack.c.b16 %v1768, %v1764
        %v2097 = vpack.c.b16 %v1769, %v1765
        %v2098 = vpack.c.b16 %v1770, %v1766
        %v2099 = vpack.c.b16 %v1775, %v1771
        %v2100 = vpack.c.b16 %v1776, %v1772
        %v2101 = vpack.c.b16 %v1777, %v1773
        %v2102 = vpack.c.b16 %v1778, %v1774
        %v2103 = vpack.c.b16 %v1783, %v1779
        %v2104 = vpack.c.b16 %v1784, %v1780
        %v2105 = vpack.c.b16 %v1785, %v1781
        %v2106 = vpack.c.b16 %v1786, %v1782
        %v2107 = vpack.c.b16 %v1791, %v1787
        %v2108 = vpack.c.b16 %v1792, %v1788
        %v2109 = vpack.c.b16 %v1793, %v1789
        %v2110 = vpack.c.b16 %v1794, %v1790
        %v2111 = vpack.c.b16 %v1799, %v1795
        %v2112 = vpack.c.b16 %v1800, %v1796
        %v2113 = vpack.c.b16 %v1801, %v1797
        %v2114 = vpack.c.b16 %v1802, %v1798
        %v2115 = vpack.c.b16 %v1807, %v1803
        %v2116 = vpack.c.b16 %v1808, %v1804
        %v2117 = vpack.c.b16 %v1809, %v1805
        %v2118 = vpack.c.b16 %v1810, %v1806
        %v2119 = vpack.c.b16 %v1815, %v1811
        %v2120 = vpack.c.b16 %v1816, %v1812
        %v2121 = vpack.c.b16 %v1817, %v1813
        %v2122 = vpack.c.b16 %v1818, %v1814
        %v2123 = vpack.c.b16 %v1823, %v1819
        %v2124 = vpack.c.b16 %v1824, %v1820
        %v2125 = vpack.c.b16 %v1825, %v1821
        %v2126 = vpack.c.b16 %v1826, %v1822
        %v2127 = vpack.c.b16 %v1831, %v1827
        %v2128 = vpack.c.b16 %v1832, %v1828
        %v2129 = vpack.c.b16 %v1833, %v1829
        %v2130 = vpack.c.b16 %v1834, %v1830
        %v2131 = vpack.c.b16 %v1839, %v1835
        %v2132 = vpack.c.b16 %v1840, %v1836
        %v2133 = vpack.c.b16 %v1841, %v1837
        %v2134 = vpack.c.b16 %v1842, %v1838
        %v2135 = vpack.c.b16 %v1847, %v1843
        %v2136 = vpack.c.b16 %v1848, %v1844
        %v2137 = vpack.c.b16 %v1849, %v1845
        %v2138 = vpack.c.b16 %v1850, %v1846
        %v2139 = vpack.c.b16 %v1855, %v1851
        %v2140 = vpack.c.b16 %v1856, %v1852
        %v2141 = vpack.c.b16 %v1857, %v1853
        %v2142 = vpack.c.b16 %v1858, %v1854
        %v2143 = vpack.c.b16 %v1863, %v1859
        %v2144 = vpack.c.b16 %v1864, %v1860
        %v2145 = vpack.c.b16 %v1865, %v1861
        %v2146 = vpack.c.b16 %v1866, %v1862
        %v2147 = vpack.c.b16 %v1871, %v1867
        %v2148 = vpack.c.b16 %v1872, %v1868
        %v2149 = vpack.c.b16 %v1873, %v1869
        %v2150 = vpack.c.b16 %v1874, %v1870
        %v2151 = vpack.c.b16 %v1879, %v1875
        %v2152 = vpack.c.b16 %v1880, %v1876
        %v2153 = vpack.c.b16 %v1881, %v1877
        %v2154 = vpack.c.b16 %v1882, %v1878
        %v2155 = vpack.c.b16 %v1887, %v1883
        %v2156 = vpack.c.b16 %v1888, %v1884
        %v2157 = vpack.c.b16 %v1889, %v1885
        %v2158 = vpack.c.b16 %v1890, %v1886
        %v2159 = vpack.c.b16 %v1895, %v1891
        %v2160 = vpack.c.b16 %v1896, %v1892
        %v2161 = vpack.c.b16 %v1897, %v1893
        %v2162 = vpack.c.b16 %v1898, %v1894
        %v2163 = vpack.c.b16 %v1903, %v1899
        %v2164 = vpack.c.b16 %v1904, %v1900
        %v2165 = vpack.c.b16 %v1905, %v1901
        %v2166 = vpack.c.b16 %v1906, %v1902
        %v2167 = vpack.c.b16 %v1911, %v1907
        %v2168 = vpack.c.b16 %v1912, %v1908
        %v2169 = vpack.c.b16 %v1913, %v1909
        %v2170 = vpack.c.b16 %v1914, %v1910
        %v2171 = vpack.c.b16 %v1919, %v1915
        %v2172 = vpack.c.b16 %v1920, %v1916
        %v2173 = vpack.c.b16 %v1921, %v1917
        %v2174 = vpack.c.b16 %v1922, %v1918
        %v2175 = vpack.c.b16 %v1927, %v1923
        %v2176 = vpack.c.b16 %v1928, %v1924
        %v2177 = vpack.c.b16 %v1929, %v1925
        %v2178 = vpack.c.b16 %v1930, %v1926
        %v2179 = vpack.c.b16 %v1935, %v1931
        %v2180 = vpack.c.b16 %v1936, %v1932
        %v2181 = vpack.c.b16 %v1937, %v1933
        %v2182 = vpack.c.b16 %v1938, %v1934
        %v2183 = vpack.c.b16 %v1943, %v1939
        %v2184 = vpack.c.b16 %v1944, %v1940
        %v2185 = vpack.c.b16 %v1945, %v1941
        %v2186 = vpack.c.b16 %v1946, %v1942
        %v2187 = vpack.c.b16 %v1951, %v1947
        %v2188 = vpack.c.b16 %v1952, %v1948
        %v2189 = vpack.c.b16 %v1953, %v1949
        %v2190 = vpack.c.b16 %v1954, %v1950
        %v2191 = vpack.c.b16 %v1959, %v1955
        %v2192 = vpack.c.b16 %v1960, %v1956
        %v2193 = vpack.c.b16 %v1961, %v1957
        %v2194 = vpack.c.b16 %v1962, %v1958
        %v2195 = vpack.c.b16 %v1967, %v1963
        %v2196 = vpack.c.b16 %v1968, %v1964
        %v2197 = vpack.c.b16 %v1969, %v1965
        %v2198 = vpack.c.b16 %v1970, %v1966
        %v2199 = vpack.c.b16 %v1975, %v1971
        %v2200 = vpack.c.b16 %v1976, %v1972
        %v2201 = vpack.c.b16 %v1977, %v1973
        %v2202 = vpack.c.b16 %v1978, %v1974
        %2427 = vmatprep.subr.bf16.mxu0 %v2008
        %2428 = vmatpush1.bf16.msra.mxu0 %v2007
        %2429 = vmatprep.subr.bf16.mxu0 %v2004
        %2430 = vmatpush1.bf16.msra.mxu0 %v2003
        %2431 = vmatprep.subr.bf16.mxu0 %v2000
        %2432 = vmatpush1.bf16.msra.mxu0 %v1999
        %2433 = vmatprep.subr.bf16.mxu0 %v1996
        %2434 = vmatpush1.bf16.msra.mxu0 %v1995
        %2435 = vmatprep.subr.bf16.mxu0 %v1992
        %2436 = vmatpush1.bf16.msra.mxu0 %v1991
        %2437 = vmatprep.subr.bf16.mxu0 %v1988
        %2438 = vmatpush1.bf16.msra.mxu0 %v1987
        %2439 = vmatprep.subr.bf16.mxu0 %v1984
        %2440 = vmatpush1.bf16.msra.mxu0 %v1983
        %2441 = vmatprep.subr.bf16.mxu0 %v1980
        %2442 = vmatpush1.bf16.msra.mxu0 %v1979
        %2443 = vmatprep.subr.bf16.mxu0 %v2040
        %2444 = vmatpush2.bf16.msra.mxu0 %v2039
        %2445 = vmatprep.subr.bf16.mxu0 %v2036
        %2446 = vmatpush2.bf16.msra.mxu0 %v2035
        %2447 = vmatprep.subr.bf16.mxu0 %v2032
        %2448 = vmatpush2.bf16.msra.mxu0 %v2031
        %2449 = vmatprep.subr.bf16.mxu0 %v2028
        %2450 = vmatpush2.bf16.msra.mxu0 %v2027
        %2451 = vmatprep.subr.bf16.mxu0 %v2024
        %2452 = vmatpush2.bf16.msra.mxu0 %v2023
        %2453 = vmatprep.subr.bf16.mxu0 %v2020
        %2454 = vmatpush2.bf16.msra.mxu0 %v2019
        %2455 = vmatprep.subr.bf16.mxu0 %v2016
        %2456 = vmatpush2.bf16.msra.mxu0 %v2015
        %2457 = vmatprep.subr.bf16.mxu0 %v2012
        %2458 = vmatpush2.bf16.msra.mxu0 %v2011
        %2459 = vmatprep.mubr.bf16.mxu0 %v1084
        %2460 = vmatmul.mubr.bf16.gmra.mxu0 %v1083
        %v2461 = vpop.f32.mrf.mxu0
        %v2462 = vadd.f32 %v714, %v2461
        %v2463 = vpop.f32.mrf.mxu0
        %v2464 = vadd.f32 %v718, %v2463
        %v2465 = vpop.f32.mrf.mxu0
        %v2466 = vadd.f32 %v714, %v2465
        %v2467 = vpop.f32.mrf.mxu0
        %v2468 = vadd.f32 %v718, %v2467
        %2469 = vmatprep.mubr.bf16.mxu0 %v1091
        %2470 = vmatmul.mubr.bf16.gmra.mxu0 %v1090
        %v2471 = vpop.f32.mrf.mxu0
        %v2472 = vadd.f32 %v714, %v2471
        %v2473 = vpop.f32.mrf.mxu0
        %v2474 = vadd.f32 %v718, %v2473
        %v2475 = vpop.f32.mrf.mxu0
        %v2476 = vadd.f32 %v714, %v2475
        %v2477 = vpop.f32.mrf.mxu0
        %v2478 = vadd.f32 %v718, %v2477
        %2479 = vmatprep.mubr.bf16.mxu0 %v1098
        %2480 = vmatmul.mubr.bf16.gmra.mxu0 %v1097
        %v2481 = vpop.f32.mrf.mxu0
        %v2482 = vadd.f32 %v714, %v2481
        %v2483 = vpop.f32.mrf.mxu0
        %v2484 = vadd.f32 %v718, %v2483
        %v2485 = vpop.f32.mrf.mxu0
        %v2486 = vadd.f32 %v714, %v2485
        %v2487 = vpop.f32.mrf.mxu0
        %v2488 = vadd.f32 %v718, %v2487
        %2489 = vmatprep.mubr.bf16.mxu0 %v1105
        %2490 = vmatmul.mubr.bf16.gmra.mxu0 %v1104
        %v2491 = vpop.f32.mrf.mxu0
        %v2492 = vadd.f32 %v714, %v2491
        %v2493 = vpop.f32.mrf.mxu0
        %v2494 = vadd.f32 %v718, %v2493
        %v2495 = vpop.f32.mrf.mxu0
        %v2496 = vadd.f32 %v714, %v2495
        %v2497 = vpop.f32.mrf.mxu0
        %v2498 = vadd.f32 %v718, %v2497
        %2499 = vmatprep.mubr.bf16.mxu0 %v1112
        %2500 = vmatmul.mubr.bf16.gmra.mxu0 %v1111
        %v2501 = vpop.f32.mrf.mxu0
        %v2502 = vadd.f32 %v714, %v2501
        %v2503 = vpop.f32.mrf.mxu0
        %v2504 = vadd.f32 %v718, %v2503
        %v2505 = vpop.f32.mrf.mxu0
        %v2506 = vadd.f32 %v714, %v2505
        %v2507 = vpop.f32.mrf.mxu0
        %v2508 = vadd.f32 %v718, %v2507
        %2509 = vmatprep.mubr.bf16.mxu0 %v1119
        %2510 = vmatmul.mubr.bf16.gmra.mxu0 %v1118
        %v2511 = vpop.f32.mrf.mxu0
        %v2512 = vadd.f32 %v714, %v2511
        %v2513 = vpop.f32.mrf.mxu0
        %v2514 = vadd.f32 %v718, %v2513
        %v2515 = vpop.f32.mrf.mxu0
        %v2516 = vadd.f32 %v714, %v2515
        %v2517 = vpop.f32.mrf.mxu0
        %v2518 = vadd.f32 %v718, %v2517
        %2519 = vmatprep.mubr.bf16.mxu0 %v1126
        %2520 = vmatmul.mubr.bf16.gmra.mxu0 %v1125
        %v2521 = vpop.f32.mrf.mxu0
        %v2522 = vadd.f32 %v714, %v2521
        %v2523 = vpop.f32.mrf.mxu0
        %v2524 = vadd.f32 %v718, %v2523
        %v2525 = vpop.f32.mrf.mxu0
        %v2526 = vadd.f32 %v714, %v2525
        %v2527 = vpop.f32.mrf.mxu0
        %v2528 = vadd.f32 %v718, %v2527
        %2529 = vmatprep.mubr.bf16.mxu0 %v1133
        %2530 = vmatmul.mubr.bf16.gmra.mxu0 %v1132
        %v2531 = vpop.f32.mrf.mxu0
        %v2532 = vadd.f32 %v714, %v2531
        %v2533 = vpop.f32.mrf.mxu0
        %v2534 = vadd.f32 %v718, %v2533
        %v2535 = vpop.f32.mrf.mxu0
        %v2536 = vadd.f32 %v714, %v2535
        %v2537 = vpop.f32.mrf.mxu0
        %v2538 = vadd.f32 %v718, %v2537
        %2539 = vmatprep.mubr.bf16.mxu0 %v1140
        %2540 = vmatmul.mubr.bf16.gmra.mxu0 %v1139
        %v2541 = vpop.f32.mrf.mxu0
        %v2542 = vadd.f32 %v714, %v2541
        %v2543 = vpop.f32.mrf.mxu0
        %v2544 = vadd.f32 %v718, %v2543
        %v2545 = vpop.f32.mrf.mxu0
        %v2546 = vadd.f32 %v714, %v2545
        %v2547 = vpop.f32.mrf.mxu0
        %v2548 = vadd.f32 %v718, %v2547
        %2549 = vmatprep.mubr.bf16.mxu0 %v1147
        %2550 = vmatmul.mubr.bf16.gmra.mxu0 %v1146
        %v2551 = vpop.f32.mrf.mxu0
        %v2552 = vadd.f32 %v714, %v2551
        %v2553 = vpop.f32.mrf.mxu0
        %v2554 = vadd.f32 %v718, %v2553
        %v2555 = vpop.f32.mrf.mxu0
        %v2556 = vadd.f32 %v714, %v2555
        %v2557 = vpop.f32.mrf.mxu0
        %v2558 = vadd.f32 %v718, %v2557
        %2559 = vmatprep.mubr.bf16.mxu0 %v1154
        %2560 = vmatmul.mubr.bf16.gmra.mxu0 %v1153
        %v2561 = vpop.f32.mrf.mxu0
        %v2562 = vadd.f32 %v714, %v2561
        %v2563 = vpop.f32.mrf.mxu0
        %v2564 = vadd.f32 %v718, %v2563
        %v2565 = vpop.f32.mrf.mxu0
        %v2566 = vadd.f32 %v714, %v2565
        %v2567 = vpop.f32.mrf.mxu0
        %v2568 = vadd.f32 %v718, %v2567
        %2569 = vmatprep.mubr.bf16.mxu0 %v1161
        %2570 = vmatmul.mubr.bf16.gmra.mxu0 %v1160
        %v2571 = vpop.f32.mrf.mxu0
        %v2572 = vadd.f32 %v714, %v2571
        %v2573 = vpop.f32.mrf.mxu0
        %v2574 = vadd.f32 %v718, %v2573
        %v2575 = vpop.f32.mrf.mxu0
        %v2576 = vadd.f32 %v714, %v2575
        %v2577 = vpop.f32.mrf.mxu0
        %v2578 = vadd.f32 %v718, %v2577
        %2579 = vmatprep.mubr.bf16.mxu0 %v1168
        %2580 = vmatmul.mubr.bf16.gmra.mxu0 %v1167
        %v2581 = vpop.f32.mrf.mxu0
        %v2582 = vadd.f32 %v714, %v2581
        %v2583 = vpop.f32.mrf.mxu0
        %v2584 = vadd.f32 %v718, %v2583
        %v2585 = vpop.f32.mrf.mxu0
        %v2586 = vadd.f32 %v714, %v2585
        %v2587 = vpop.f32.mrf.mxu0
        %v2588 = vadd.f32 %v718, %v2587
        %2589 = vmatprep.mubr.bf16.mxu0 %v1175
        %2590 = vmatmul.mubr.bf16.gmra.mxu0 %v1174
        %v2591 = vpop.f32.mrf.mxu0
        %v2592 = vadd.f32 %v714, %v2591
        %v2593 = vpop.f32.mrf.mxu0
        %v2594 = vadd.f32 %v718, %v2593
        %v2595 = vpop.f32.mrf.mxu0
        %v2596 = vadd.f32 %v714, %v2595
        %v2597 = vpop.f32.mrf.mxu0
        %v2598 = vadd.f32 %v718, %v2597
        %2599 = vmatprep.mubr.bf16.mxu0 %v1182
        %2600 = vmatmul.mubr.bf16.gmra.mxu0 %v1181
        %v2601 = vpop.f32.mrf.mxu0
        %v2602 = vadd.f32 %v714, %v2601
        %v2603 = vpop.f32.mrf.mxu0
        %v2604 = vadd.f32 %v718, %v2603
        %v2605 = vpop.f32.mrf.mxu0
        %v2606 = vadd.f32 %v714, %v2605
        %v2607 = vpop.f32.mrf.mxu0
        %v2608 = vadd.f32 %v718, %v2607
        %2609 = vmatprep.mubr.bf16.mxu0 %v1189
        %2610 = vmatmul.mubr.bf16.gmra.mxu0 %v1188
        %v2611 = vpop.f32.mrf.mxu0
        %v2612 = vadd.f32 %v714, %v2611
        %v2613 = vpop.f32.mrf.mxu0
        %v2614 = vadd.f32 %v718, %v2613
        %v2615 = vpop.f32.mrf.mxu0
        %v2616 = vadd.f32 %v714, %v2615
        %v2617 = vpop.f32.mrf.mxu0
        %v2618 = vadd.f32 %v718, %v2617
        %2619 = vdwg.mxu0
        %2620 = vmatprep.subr.bf16.mxu0 %v2072
        %2621 = vmatpush1.bf16.msra.mxu0 %v2071
        %2622 = vmatprep.subr.bf16.mxu0 %v2068
        %2623 = vmatpush1.bf16.msra.mxu0 %v2067
        %2624 = vmatprep.subr.bf16.mxu0 %v2064
        %2625 = vmatpush1.bf16.msra.mxu0 %v2063
        %2626 = vmatprep.subr.bf16.mxu0 %v2060
        %2627 = vmatpush1.bf16.msra.mxu0 %v2059
        %2628 = vmatprep.subr.bf16.mxu0 %v2056
        %2629 = vmatpush1.bf16.msra.mxu0 %v2055
        %2630 = vmatprep.subr.bf16.mxu0 %v2052
        %2631 = vmatpush1.bf16.msra.mxu0 %v2051
        %2632 = vmatprep.subr.bf16.mxu0 %v2048
        %2633 = vmatpush1.bf16.msra.mxu0 %v2047
        %2634 = vmatprep.subr.bf16.mxu0 %v2044
        %2635 = vmatpush1.bf16.msra.mxu0 %v2043
        %2636 = vmatprep.subr.bf16.mxu0 %v2104
        %2637 = vmatpush2.bf16.msra.mxu0 %v2103
        %2638 = vmatprep.subr.bf16.mxu0 %v2100
        %2639 = vmatpush2.bf16.msra.mxu0 %v2099
        %2640 = vmatprep.subr.bf16.mxu0 %v2096
        %2641 = vmatpush2.bf16.msra.mxu0 %v2095
        %2642 = vmatprep.subr.bf16.mxu0 %v2092
        %2643 = vmatpush2.bf16.msra.mxu0 %v2091
        %2644 = vmatprep.subr.bf16.mxu0 %v2088
        %2645 = vmatpush2.bf16.msra.mxu0 %v2087
        %2646 = vmatprep.subr.bf16.mxu0 %v2084
        %2647 = vmatpush2.bf16.msra.mxu0 %v2083
        %2648 = vmatprep.subr.bf16.mxu0 %v2080
        %2649 = vmatpush2.bf16.msra.mxu0 %v2079
        %2650 = vmatprep.subr.bf16.mxu0 %v2076
        %2651 = vmatpush2.bf16.msra.mxu0 %v2075
        %2652 = vmatprep.mubr.bf16.mxu0 %v1086
        %2653 = vmatmul.mubr.bf16.gmra.mxu0 %v1085
        %v2654 = vpop.f32.mrf.mxu0
        %v2655 = vadd.f32 %v2462, %v2654
        %v2656 = vpop.f32.mrf.mxu0
        %v2657 = vadd.f32 %v2464, %v2656
        %v2658 = vpop.f32.mrf.mxu0
        %v2659 = vadd.f32 %v2466, %v2658
        %v2660 = vpop.f32.mrf.mxu0
        %v2661 = vadd.f32 %v2468, %v2660
        %2662 = vmatprep.mubr.bf16.mxu0 %v1093
        %2663 = vmatmul.mubr.bf16.gmra.mxu0 %v1092
        %v2664 = vpop.f32.mrf.mxu0
        %v2665 = vadd.f32 %v2472, %v2664
        %v2666 = vpop.f32.mrf.mxu0
        %v2667 = vadd.f32 %v2474, %v2666
        %v2668 = vpop.f32.mrf.mxu0
        %v2669 = vadd.f32 %v2476, %v2668
        %v2670 = vpop.f32.mrf.mxu0
        %v2671 = vadd.f32 %v2478, %v2670
        %2672 = vmatprep.mubr.bf16.mxu0 %v1100
        %2673 = vmatmul.mubr.bf16.gmra.mxu0 %v1099
        %v2674 = vpop.f32.mrf.mxu0
        %v2675 = vadd.f32 %v2482, %v2674
        %v2676 = vpop.f32.mrf.mxu0
        %v2677 = vadd.f32 %v2484, %v2676
        %v2678 = vpop.f32.mrf.mxu0
        %v2679 = vadd.f32 %v2486, %v2678
        %v2680 = vpop.f32.mrf.mxu0
        %v2681 = vadd.f32 %v2488, %v2680
        %2682 = vmatprep.mubr.bf16.mxu0 %v1107
        %2683 = vmatmul.mubr.bf16.gmra.mxu0 %v1106
        %v2684 = vpop.f32.mrf.mxu0
        %v2685 = vadd.f32 %v2492, %v2684
        %v2686 = vpop.f32.mrf.mxu0
        %v2687 = vadd.f32 %v2494, %v2686
        %v2688 = vpop.f32.mrf.mxu0
        %v2689 = vadd.f32 %v2496, %v2688
        %v2690 = vpop.f32.mrf.mxu0
        %v2691 = vadd.f32 %v2498, %v2690
        %2692 = vmatprep.mubr.bf16.mxu0 %v1114
        %2693 = vmatmul.mubr.bf16.gmra.mxu0 %v1113
        %v2694 = vpop.f32.mrf.mxu0
        %v2695 = vadd.f32 %v2502, %v2694
        %v2696 = vpop.f32.mrf.mxu0
        %v2697 = vadd.f32 %v2504, %v2696
        %v2698 = vpop.f32.mrf.mxu0
        %v2699 = vadd.f32 %v2506, %v2698
        %v2700 = vpop.f32.mrf.mxu0
        %v2701 = vadd.f32 %v2508, %v2700
        %2702 = vmatprep.mubr.bf16.mxu0 %v1121
        %2703 = vmatmul.mubr.bf16.gmra.mxu0 %v1120
        %v2704 = vpop.f32.mrf.mxu0
        %v2705 = vadd.f32 %v2512, %v2704
        %v2706 = vpop.f32.mrf.mxu0
        %v2707 = vadd.f32 %v2514, %v2706
        %v2708 = vpop.f32.mrf.mxu0
        %v2709 = vadd.f32 %v2516, %v2708
        %v2710 = vpop.f32.mrf.mxu0
        %v2711 = vadd.f32 %v2518, %v2710
        %2712 = vmatprep.mubr.bf16.mxu0 %v1128
        %2713 = vmatmul.mubr.bf16.gmra.mxu0 %v1127
        %v2714 = vpop.f32.mrf.mxu0
        %v2715 = vadd.f32 %v2522, %v2714
        %v2716 = vpop.f32.mrf.mxu0
        %v2717 = vadd.f32 %v2524, %v2716
        %v2718 = vpop.f32.mrf.mxu0
        %v2719 = vadd.f32 %v2526, %v2718
        %v2720 = vpop.f32.mrf.mxu0
        %v2721 = vadd.f32 %v2528, %v2720
        %2722 = vmatprep.mubr.bf16.mxu0 %v1135
        %2723 = vmatmul.mubr.bf16.gmra.mxu0 %v1134
        %v2724 = vpop.f32.mrf.mxu0
        %v2725 = vadd.f32 %v2532, %v2724
        %v2726 = vpop.f32.mrf.mxu0
        %v2727 = vadd.f32 %v2534, %v2726
        %v2728 = vpop.f32.mrf.mxu0
        %v2729 = vadd.f32 %v2536, %v2728
        %v2730 = vpop.f32.mrf.mxu0
        %v2731 = vadd.f32 %v2538, %v2730
        %2732 = vmatprep.mubr.bf16.mxu0 %v1142
        %2733 = vmatmul.mubr.bf16.gmra.mxu0 %v1141
        %v2734 = vpop.f32.mrf.mxu0
        %v2735 = vadd.f32 %v2542, %v2734
        %v2736 = vpop.f32.mrf.mxu0
        %v2737 = vadd.f32 %v2544, %v2736
        %v2738 = vpop.f32.mrf.mxu0
        %v2739 = vadd.f32 %v2546, %v2738
        %v2740 = vpop.f32.mrf.mxu0
        %v2741 = vadd.f32 %v2548, %v2740
        %2742 = vmatprep.mubr.bf16.mxu0 %v1149
        %2743 = vmatmul.mubr.bf16.gmra.mxu0 %v1148
        %v2744 = vpop.f32.mrf.mxu0
        %v2745 = vadd.f32 %v2552, %v2744
        %v2746 = vpop.f32.mrf.mxu0
        %v2747 = vadd.f32 %v2554, %v2746
        %v2748 = vpop.f32.mrf.mxu0
        %v2749 = vadd.f32 %v2556, %v2748
        %v2750 = vpop.f32.mrf.mxu0
        %v2751 = vadd.f32 %v2558, %v2750
        %2752 = vmatprep.mubr.bf16.mxu0 %v1156
        %2753 = vmatmul.mubr.bf16.gmra.mxu0 %v1155
        %v2754 = vpop.f32.mrf.mxu0
        %v2755 = vadd.f32 %v2562, %v2754
        %v2756 = vpop.f32.mrf.mxu0
        %v2757 = vadd.f32 %v2564, %v2756
        %v2758 = vpop.f32.mrf.mxu0
        %v2759 = vadd.f32 %v2566, %v2758
        %v2760 = vpop.f32.mrf.mxu0
        %v2761 = vadd.f32 %v2568, %v2760
        %2762 = vmatprep.mubr.bf16.mxu0 %v1163
        %2763 = vmatmul.mubr.bf16.gmra.mxu0 %v1162
        %v2764 = vpop.f32.mrf.mxu0
        %v2765 = vadd.f32 %v2572, %v2764
        %v2766 = vpop.f32.mrf.mxu0
        %v2767 = vadd.f32 %v2574, %v2766
        %v2768 = vpop.f32.mrf.mxu0
        %v2769 = vadd.f32 %v2576, %v2768
        %v2770 = vpop.f32.mrf.mxu0
        %v2771 = vadd.f32 %v2578, %v2770
        %2772 = vmatprep.mubr.bf16.mxu0 %v1170
        %2773 = vmatmul.mubr.bf16.gmra.mxu0 %v1169
        %v2774 = vpop.f32.mrf.mxu0
        %v2775 = vadd.f32 %v2582, %v2774
        %v2776 = vpop.f32.mrf.mxu0
        %v2777 = vadd.f32 %v2584, %v2776
        %v2778 = vpop.f32.mrf.mxu0
        %v2779 = vadd.f32 %v2586, %v2778
        %v2780 = vpop.f32.mrf.mxu0
        %v2781 = vadd.f32 %v2588, %v2780
        %2782 = vmatprep.mubr.bf16.mxu0 %v1177
        %2783 = vmatmul.mubr.bf16.gmra.mxu0 %v1176
        %v2784 = vpop.f32.mrf.mxu0
        %v2785 = vadd.f32 %v2592, %v2784
        %v2786 = vpop.f32.mrf.mxu0
        %v2787 = vadd.f32 %v2594, %v2786
        %v2788 = vpop.f32.mrf.mxu0
        %v2789 = vadd.f32 %v2596, %v2788
        %v2790 = vpop.f32.mrf.mxu0
        %v2791 = vadd.f32 %v2598, %v2790
        %2792 = vmatprep.mubr.bf16.mxu0 %v1184
        %2793 = vmatmul.mubr.bf16.gmra.mxu0 %v1183
        %v2794 = vpop.f32.mrf.mxu0
        %v2795 = vadd.f32 %v2602, %v2794
        %v2796 = vpop.f32.mrf.mxu0
        %v2797 = vadd.f32 %v2604, %v2796
        %v2798 = vpop.f32.mrf.mxu0
        %v2799 = vadd.f32 %v2606, %v2798
        %v2800 = vpop.f32.mrf.mxu0
        %v2801 = vadd.f32 %v2608, %v2800
        %2802 = vmatprep.mubr.bf16.mxu0 %v1191
        %2803 = vmatmul.mubr.bf16.gmra.mxu0 %v1190
        %v2804 = vpop.f32.mrf.mxu0
        %v2805 = vadd.f32 %v2612, %v2804
        %v2806 = vpop.f32.mrf.mxu0
        %v2807 = vadd.f32 %v2614, %v2806
        %v2808 = vpop.f32.mrf.mxu0
        %v2809 = vadd.f32 %v2616, %v2808
        %v2810 = vpop.f32.mrf.mxu0
        %v2811 = vadd.f32 %v2618, %v2810
        %2812 = vdwg.mxu0
        %2813 = vmatprep.subr.bf16.mxu0 %v2136
        %2814 = vmatpush1.bf16.msra.mxu0 %v2135
        %2815 = vmatprep.subr.bf16.mxu0 %v2132
        %2816 = vmatpush1.bf16.msra.mxu0 %v2131
        %2817 = vmatprep.subr.bf16.mxu0 %v2128
        %2818 = vmatpush1.bf16.msra.mxu0 %v2127
        %2819 = vmatprep.subr.bf16.mxu0 %v2124
        %2820 = vmatpush1.bf16.msra.mxu0 %v2123
        %2821 = vmatprep.subr.bf16.mxu0 %v2120
        %2822 = vmatpush1.bf16.msra.mxu0 %v2119
        %2823 = vmatprep.subr.bf16.mxu0 %v2116
        %2824 = vmatpush1.bf16.msra.mxu0 %v2115
        %2825 = vmatprep.subr.bf16.mxu0 %v2112
        %2826 = vmatpush1.bf16.msra.mxu0 %v2111
        %2827 = vmatprep.subr.bf16.mxu0 %v2108
        %2828 = vmatpush1.bf16.msra.mxu0 %v2107
        %2829 = vmatprep.subr.bf16.mxu0 %v2168
        %2830 = vmatpush2.bf16.msra.mxu0 %v2167
        %2831 = vmatprep.subr.bf16.mxu0 %v2164
        %2832 = vmatpush2.bf16.msra.mxu0 %v2163
        %2833 = vmatprep.subr.bf16.mxu0 %v2160
        %2834 = vmatpush2.bf16.msra.mxu0 %v2159
        %2835 = vmatprep.subr.bf16.mxu0 %v2156
        %2836 = vmatpush2.bf16.msra.mxu0 %v2155
        %2837 = vmatprep.subr.bf16.mxu0 %v2152
        %2838 = vmatpush2.bf16.msra.mxu0 %v2151
        %2839 = vmatprep.subr.bf16.mxu0 %v2148
        %2840 = vmatpush2.bf16.msra.mxu0 %v2147
        %2841 = vmatprep.subr.bf16.mxu0 %v2144
        %2842 = vmatpush2.bf16.msra.mxu0 %v2143
        %2843 = vmatprep.subr.bf16.mxu0 %v2140
        %2844 = vmatpush2.bf16.msra.mxu0 %v2139
        %2845 = vmatprep.mubr.bf16.mxu0 %v1088
        %2846 = vmatmul.mubr.bf16.gmra.mxu0 %v1087
        %v2847 = vpop.f32.mrf.mxu0
        %v2848 = vadd.f32 %v2655, %v2847
        %v2849 = vpop.f32.mrf.mxu0
        %v2850 = vadd.f32 %v2657, %v2849
        %v2851 = vpop.f32.mrf.mxu0
        %v2852 = vadd.f32 %v2659, %v2851
        %v2853 = vpop.f32.mrf.mxu0
        %v2854 = vadd.f32 %v2661, %v2853
        %2855 = vmatprep.mubr.bf16.mxu0 %v1095
        %2856 = vmatmul.mubr.bf16.gmra.mxu0 %v1094
        %v2857 = vpop.f32.mrf.mxu0
        %v2858 = vadd.f32 %v2665, %v2857
        %v2859 = vpop.f32.mrf.mxu0
        %v2860 = vadd.f32 %v2667, %v2859
        %v2861 = vpop.f32.mrf.mxu0
        %v2862 = vadd.f32 %v2669, %v2861
        %v2863 = vpop.f32.mrf.mxu0
        %v2864 = vadd.f32 %v2671, %v2863
        %2865 = vmatprep.mubr.bf16.mxu0 %v1102
        %2866 = vmatmul.mubr.bf16.gmra.mxu0 %v1101
        %v2867 = vpop.f32.mrf.mxu0
        %v2868 = vadd.f32 %v2675, %v2867
        %v2869 = vpop.f32.mrf.mxu0
        %v2870 = vadd.f32 %v2677, %v2869
        %v2871 = vpop.f32.mrf.mxu0
        %v2872 = vadd.f32 %v2679, %v2871
        %v2873 = vpop.f32.mrf.mxu0
        %v2874 = vadd.f32 %v2681, %v2873
        %2875 = vmatprep.mubr.bf16.mxu0 %v1109
        %2876 = vmatmul.mubr.bf16.gmra.mxu0 %v1108
        %v2877 = vpop.f32.mrf.mxu0
        %v2878 = vadd.f32 %v2685, %v2877
        %v2879 = vpop.f32.mrf.mxu0
        %v2880 = vadd.f32 %v2687, %v2879
        %v2881 = vpop.f32.mrf.mxu0
        %v2882 = vadd.f32 %v2689, %v2881
        %v2883 = vpop.f32.mrf.mxu0
        %v2884 = vadd.f32 %v2691, %v2883
        %2885 = vmatprep.mubr.bf16.mxu0 %v1116
        %2886 = vmatmul.mubr.bf16.gmra.mxu0 %v1115
        %v2887 = vpop.f32.mrf.mxu0
        %v2888 = vadd.f32 %v2695, %v2887
        %v2889 = vpop.f32.mrf.mxu0
        %v2890 = vadd.f32 %v2697, %v2889
        %v2891 = vpop.f32.mrf.mxu0
        %v2892 = vadd.f32 %v2699, %v2891
        %v2893 = vpop.f32.mrf.mxu0
        %v2894 = vadd.f32 %v2701, %v2893
        %2895 = vmatprep.mubr.bf16.mxu0 %v1123
        %2896 = vmatmul.mubr.bf16.gmra.mxu0 %v1122
        %v2897 = vpop.f32.mrf.mxu0
        %v2898 = vadd.f32 %v2705, %v2897
        %v2899 = vpop.f32.mrf.mxu0
        %v2900 = vadd.f32 %v2707, %v2899
        %v2901 = vpop.f32.mrf.mxu0
        %v2902 = vadd.f32 %v2709, %v2901
        %v2903 = vpop.f32.mrf.mxu0
        %v2904 = vadd.f32 %v2711, %v2903
        %2905 = vmatprep.mubr.bf16.mxu0 %v1130
        %2906 = vmatmul.mubr.bf16.gmra.mxu0 %v1129
        %v2907 = vpop.f32.mrf.mxu0
        %v2908 = vadd.f32 %v2715, %v2907
        %v2909 = vpop.f32.mrf.mxu0
        %v2910 = vadd.f32 %v2717, %v2909
        %v2911 = vpop.f32.mrf.mxu0
        %v2912 = vadd.f32 %v2719, %v2911
        %v2913 = vpop.f32.mrf.mxu0
        %v2914 = vadd.f32 %v2721, %v2913
        %2915 = vmatprep.mubr.bf16.mxu0 %v1137
        %2916 = vmatmul.mubr.bf16.gmra.mxu0 %v1136
        %v2917 = vpop.f32.mrf.mxu0
        %v2918 = vadd.f32 %v2725, %v2917
        %v2919 = vpop.f32.mrf.mxu0
        %v2920 = vadd.f32 %v2727, %v2919
        %v2921 = vpop.f32.mrf.mxu0
        %v2922 = vadd.f32 %v2729, %v2921
        %v2923 = vpop.f32.mrf.mxu0
        %v2924 = vadd.f32 %v2731, %v2923
        %2925 = vmatprep.mubr.bf16.mxu0 %v1144
        %2926 = vmatmul.mubr.bf16.gmra.mxu0 %v1143
        %v2927 = vpop.f32.mrf.mxu0
        %v2928 = vadd.f32 %v2735, %v2927
        %v2929 = vpop.f32.mrf.mxu0
        %v2930 = vadd.f32 %v2737, %v2929
        %v2931 = vpop.f32.mrf.mxu0
        %v2932 = vadd.f32 %v2739, %v2931
        %v2933 = vpop.f32.mrf.mxu0
        %v2934 = vadd.f32 %v2741, %v2933
        %2935 = vmatprep.mubr.bf16.mxu0 %v1151
        %2936 = vmatmul.mubr.bf16.gmra.mxu0 %v1150
        %v2937 = vpop.f32.mrf.mxu0
        %v2938 = vadd.f32 %v2745, %v2937
        %v2939 = vpop.f32.mrf.mxu0
        %v2940 = vadd.f32 %v2747, %v2939
        %v2941 = vpop.f32.mrf.mxu0
        %v2942 = vadd.f32 %v2749, %v2941
        %v2943 = vpop.f32.mrf.mxu0
        %v2944 = vadd.f32 %v2751, %v2943
        %2945 = vmatprep.mubr.bf16.mxu0 %v1158
        %2946 = vmatmul.mubr.bf16.gmra.mxu0 %v1157
        %v2947 = vpop.f32.mrf.mxu0
        %v2948 = vadd.f32 %v2755, %v2947
        %v2949 = vpop.f32.mrf.mxu0
        %v2950 = vadd.f32 %v2757, %v2949
        %v2951 = vpop.f32.mrf.mxu0
        %v2952 = vadd.f32 %v2759, %v2951
        %v2953 = vpop.f32.mrf.mxu0
        %v2954 = vadd.f32 %v2761, %v2953
        %2955 = vmatprep.mubr.bf16.mxu0 %v1165
        %2956 = vmatmul.mubr.bf16.gmra.mxu0 %v1164
        %v2957 = vpop.f32.mrf.mxu0
        %v2958 = vadd.f32 %v2765, %v2957
        %v2959 = vpop.f32.mrf.mxu0
        %v2960 = vadd.f32 %v2767, %v2959
        %v2961 = vpop.f32.mrf.mxu0
        %v2962 = vadd.f32 %v2769, %v2961
        %v2963 = vpop.f32.mrf.mxu0
        %v2964 = vadd.f32 %v2771, %v2963
        %2965 = vmatprep.mubr.bf16.mxu0 %v1172
        %2966 = vmatmul.mubr.bf16.gmra.mxu0 %v1171
        %v2967 = vpop.f32.mrf.mxu0
        %v2968 = vadd.f32 %v2775, %v2967
        %v2969 = vpop.f32.mrf.mxu0
        %v2970 = vadd.f32 %v2777, %v2969
        %v2971 = vpop.f32.mrf.mxu0
        %v2972 = vadd.f32 %v2779, %v2971
        %v2973 = vpop.f32.mrf.mxu0
        %v2974 = vadd.f32 %v2781, %v2973
        %2975 = vmatprep.mubr.bf16.mxu0 %v1179
        %2976 = vmatmul.mubr.bf16.gmra.mxu0 %v1178
        %v2977 = vpop.f32.mrf.mxu0
        %v2978 = vadd.f32 %v2785, %v2977
        %v2979 = vpop.f32.mrf.mxu0
        %v2980 = vadd.f32 %v2787, %v2979
        %v2981 = vpop.f32.mrf.mxu0
        %v2982 = vadd.f32 %v2789, %v2981
        %v2983 = vpop.f32.mrf.mxu0
        %v2984 = vadd.f32 %v2791, %v2983
        %2985 = vmatprep.mubr.bf16.mxu0 %v1186
        %2986 = vmatmul.mubr.bf16.gmra.mxu0 %v1185
        %v2987 = vpop.f32.mrf.mxu0
        %v2988 = vadd.f32 %v2795, %v2987
        %v2989 = vpop.f32.mrf.mxu0
        %v2990 = vadd.f32 %v2797, %v2989
        %v2991 = vpop.f32.mrf.mxu0
        %v2992 = vadd.f32 %v2799, %v2991
        %v2993 = vpop.f32.mrf.mxu0
        %v2994 = vadd.f32 %v2801, %v2993
        %2995 = vmatprep.mubr.bf16.mxu0 %v1193
        %2996 = vmatmul.mubr.bf16.gmra.mxu0 %v1192
        %v2997 = vpop.f32.mrf.mxu0
        %v2998 = vadd.f32 %v2805, %v2997
        %v2999 = vpop.f32.mrf.mxu0
        %v3000 = vadd.f32 %v2807, %v2999
        %v3001 = vpop.f32.mrf.mxu0
        %v3002 = vadd.f32 %v2809, %v3001
        %v3003 = vpop.f32.mrf.mxu0
        %v3004 = vadd.f32 %v2811, %v3003
        %3005 = vdwg.mxu0
        %3006 = vmatprep.subr.bf16.mxu0 %v2200
        %3007 = vmatpush1.bf16.msra.mxu0 %v2199
        %3008 = vmatprep.subr.bf16.mxu0 %v2196
        %3009 = vmatpush1.bf16.msra.mxu0 %v2195
        %3010 = vmatprep.subr.bf16.mxu0 %v2192
        %3011 = vmatpush1.bf16.msra.mxu0 %v2191
        %3012 = vmatprep.subr.bf16.mxu0 %v2188
        %3013 = vmatpush1.bf16.msra.mxu0 %v2187
        %3014 = vmatprep.subr.bf16.mxu0 %v2184
        %3015 = vmatpush1.bf16.msra.mxu0 %v2183
        %3016 = vmatprep.subr.bf16.mxu0 %v2180
        %3017 = vmatpush1.bf16.msra.mxu0 %v2179
        %3018 = vmatprep.subr.bf16.mxu0 %v2176
        %3019 = vmatpush1.bf16.msra.mxu0 %v2175
        %3020 = vmatprep.subr.bf16.mxu0 %v2172
        %3021 = vmatpush1.bf16.msra.mxu0 %v2171
        %3022 = vmatprep.subr.bf16.mxu0 0
        %3023 = vmatpush2.bf16.msra.mxu0 0
        %3024 = vmatprep.subr.bf16.mxu0 0
        %3025 = vmatpush2.bf16.msra.mxu0 0
        %3026 = vmatprep.subr.bf16.mxu0 0
        %3027 = vmatpush2.bf16.msra.mxu0 0
        %3028 = vmatprep.subr.bf16.mxu0 0
        %3029 = vmatpush2.bf16.msra.mxu0 0
        %3030 = vmatprep.subr.bf16.mxu0 0
        %3031 = vmatpush2.bf16.msra.mxu0 0
        %3032 = vmatprep.subr.bf16.mxu0 0
        %3033 = vmatpush2.bf16.msra.mxu0 0
        %3034 = vmatprep.subr.bf16.mxu0 0
        %3035 = vmatpush2.bf16.msra.mxu0 0
        %3036 = vmatprep.subr.bf16.mxu0 0
        %3037 = vmatpush2.bf16.msra.mxu0 0
        %3038 = vmatprep.mubr.bf16.mxu0 0
        %3039 = vmatmul.mubr.bf16.gmra.mxu0 %v1089
        %v3040 = vpop.f32.mrf.mxu0
        %v3041 = vadd.f32 %v2848, %v3040
        %v3042 = vpop.f32.mrf.mxu0
        %v3043 = vadd.f32 %v2850, %v3042
        %v3044 = vpop.f32.mrf.mxu0
        %v3045 = vadd.f32 %v2852, %v3044
        %v3046 = vpop.f32.mrf.mxu0
        %v3047 = vadd.f32 %v2854, %v3046
        %3048 = vmatprep.mubr.bf16.mxu0 0
        %3049 = vmatmul.mubr.bf16.gmra.mxu0 %v1096
        %v3050 = vpop.f32.mrf.mxu0
        %v3051 = vadd.f32 %v2858, %v3050
        %v3052 = vpop.f32.mrf.mxu0
        %v3053 = vadd.f32 %v2860, %v3052
        %v3054 = vpop.f32.mrf.mxu0
        %v3055 = vadd.f32 %v2862, %v3054
        %v3056 = vpop.f32.mrf.mxu0
        %v3057 = vadd.f32 %v2864, %v3056
        %3058 = vmatprep.mubr.bf16.mxu0 0
        %3059 = vmatmul.mubr.bf16.gmra.mxu0 %v1103
        %v3060 = vpop.f32.mrf.mxu0
        %v3061 = vadd.f32 %v2868, %v3060
        %v3062 = vpop.f32.mrf.mxu0
        %v3063 = vadd.f32 %v2870, %v3062
        %v3064 = vpop.f32.mrf.mxu0
        %v3065 = vadd.f32 %v2872, %v3064
        %v3066 = vpop.f32.mrf.mxu0
        %v3067 = vadd.f32 %v2874, %v3066
        %3068 = vmatprep.mubr.bf16.mxu0 0
        %3069 = vmatmul.mubr.bf16.gmra.mxu0 %v1110
        %v3070 = vpop.f32.mrf.mxu0
        %v3071 = vadd.f32 %v2878, %v3070
        %v3072 = vpop.f32.mrf.mxu0
        %v3073 = vadd.f32 %v2880, %v3072
        %v3074 = vpop.f32.mrf.mxu0
        %v3075 = vadd.f32 %v2882, %v3074
        %v3076 = vpop.f32.mrf.mxu0
        %v3077 = vadd.f32 %v2884, %v3076
        %3078 = vmatprep.mubr.bf16.mxu0 0
        %3079 = vmatmul.mubr.bf16.gmra.mxu0 %v1117
        %v3080 = vpop.f32.mrf.mxu0
        %v3081 = vadd.f32 %v2888, %v3080
        %v3082 = vpop.f32.mrf.mxu0
        %v3083 = vadd.f32 %v2890, %v3082
        %v3084 = vpop.f32.mrf.mxu0
        %v3085 = vadd.f32 %v2892, %v3084
        %v3086 = vpop.f32.mrf.mxu0
        %v3087 = vadd.f32 %v2894, %v3086
        %3088 = vmatprep.mubr.bf16.mxu0 0
        %3089 = vmatmul.mubr.bf16.gmra.mxu0 %v1124
        %v3090 = vpop.f32.mrf.mxu0
        %v3091 = vadd.f32 %v2898, %v3090
        %v3092 = vpop.f32.mrf.mxu0
        %v3093 = vadd.f32 %v2900, %v3092
        %v3094 = vpop.f32.mrf.mxu0
        %v3095 = vadd.f32 %v2902, %v3094
        %v3096 = vpop.f32.mrf.mxu0
        %v3097 = vadd.f32 %v2904, %v3096
        %3098 = vmatprep.mubr.bf16.mxu0 0
        %3099 = vmatmul.mubr.bf16.gmra.mxu0 %v1131
        %v3100 = vpop.f32.mrf.mxu0
        %v3101 = vadd.f32 %v2908, %v3100
        %v3102 = vpop.f32.mrf.mxu0
        %v3103 = vadd.f32 %v2910, %v3102
        %v3104 = vpop.f32.mrf.mxu0
        %v3105 = vadd.f32 %v2912, %v3104
        %v3106 = vpop.f32.mrf.mxu0
        %v3107 = vadd.f32 %v2914, %v3106
        %3108 = vmatprep.mubr.bf16.mxu0 0
        %3109 = vmatmul.mubr.bf16.gmra.mxu0 %v1138
        %v3110 = vpop.f32.mrf.mxu0
        %v3111 = vadd.f32 %v2918, %v3110
        %v3112 = vpop.f32.mrf.mxu0
        %v3113 = vadd.f32 %v2920, %v3112
        %v3114 = vpop.f32.mrf.mxu0
        %v3115 = vadd.f32 %v2922, %v3114
        %v3116 = vpop.f32.mrf.mxu0
        %v3117 = vadd.f32 %v2924, %v3116
        %3118 = vmatprep.mubr.bf16.mxu0 0
        %3119 = vmatmul.mubr.bf16.gmra.mxu0 %v1145
        %v3120 = vpop.f32.mrf.mxu0
        %v3121 = vadd.f32 %v2928, %v3120
        %v3122 = vpop.f32.mrf.mxu0
        %v3123 = vadd.f32 %v2930, %v3122
        %v3124 = vpop.f32.mrf.mxu0
        %v3125 = vadd.f32 %v2932, %v3124
        %v3126 = vpop.f32.mrf.mxu0
        %v3127 = vadd.f32 %v2934, %v3126
        %3128 = vmatprep.mubr.bf16.mxu0 0
        %3129 = vmatmul.mubr.bf16.gmra.mxu0 %v1152
        %v3130 = vpop.f32.mrf.mxu0
        %v3131 = vadd.f32 %v2938, %v3130
        %v3132 = vpop.f32.mrf.mxu0
        %v3133 = vadd.f32 %v2940, %v3132
        %v3134 = vpop.f32.mrf.mxu0
        %v3135 = vadd.f32 %v2942, %v3134
        %v3136 = vpop.f32.mrf.mxu0
        %v3137 = vadd.f32 %v2944, %v3136
        %3138 = vmatprep.mubr.bf16.mxu0 0
        %3139 = vmatmul.mubr.bf16.gmra.mxu0 %v1159
        %v3140 = vpop.f32.mrf.mxu0
        %v3141 = vadd.f32 %v2948, %v3140
        %v3142 = vpop.f32.mrf.mxu0
        %v3143 = vadd.f32 %v2950, %v3142
        %v3144 = vpop.f32.mrf.mxu0
        %v3145 = vadd.f32 %v2952, %v3144
        %v3146 = vpop.f32.mrf.mxu0
        %v3147 = vadd.f32 %v2954, %v3146
        %3148 = vmatprep.mubr.bf16.mxu0 0
        %3149 = vmatmul.mubr.bf16.gmra.mxu0 %v1166
        %v3150 = vpop.f32.mrf.mxu0
        %v3151 = vadd.f32 %v2958, %v3150
        %v3152 = vpop.f32.mrf.mxu0
        %v3153 = vadd.f32 %v2960, %v3152
        %v3154 = vpop.f32.mrf.mxu0
        %v3155 = vadd.f32 %v2962, %v3154
        %v3156 = vpop.f32.mrf.mxu0
        %v3157 = vadd.f32 %v2964, %v3156
        %3158 = vmatprep.mubr.bf16.mxu0 0
        %3159 = vmatmul.mubr.bf16.gmra.mxu0 %v1173
        %v3160 = vpop.f32.mrf.mxu0
        %v3161 = vadd.f32 %v2968, %v3160
        %v3162 = vpop.f32.mrf.mxu0
        %v3163 = vadd.f32 %v2970, %v3162
        %v3164 = vpop.f32.mrf.mxu0
        %v3165 = vadd.f32 %v2972, %v3164
        %v3166 = vpop.f32.mrf.mxu0
        %v3167 = vadd.f32 %v2974, %v3166
        %3168 = vmatprep.mubr.bf16.mxu0 0
        %3169 = vmatmul.mubr.bf16.gmra.mxu0 %v1180
        %v3170 = vpop.f32.mrf.mxu0
        %v3171 = vadd.f32 %v2978, %v3170
        %v3172 = vpop.f32.mrf.mxu0
        %v3173 = vadd.f32 %v2980, %v3172
        %v3174 = vpop.f32.mrf.mxu0
        %v3175 = vadd.f32 %v2982, %v3174
        %v3176 = vpop.f32.mrf.mxu0
        %v3177 = vadd.f32 %v2984, %v3176
        %3178 = vmatprep.mubr.bf16.mxu0 0
        %3179 = vmatmul.mubr.bf16.gmra.mxu0 %v1187
        %v3180 = vpop.f32.mrf.mxu0
        %v3181 = vadd.f32 %v2988, %v3180
        %v3182 = vpop.f32.mrf.mxu0
        %v3183 = vadd.f32 %v2990, %v3182
        %v3184 = vpop.f32.mrf.mxu0
        %v3185 = vadd.f32 %v2992, %v3184
        %v3186 = vpop.f32.mrf.mxu0
        %v3187 = vadd.f32 %v2994, %v3186
        %3188 = vmatprep.mubr.bf16.mxu0 0
        %3189 = vmatmul.mubr.bf16.gmra.mxu0 %v1194
        %v3190 = vpop.f32.mrf.mxu0
        %v3191 = vadd.f32 %v2998, %v3190
        %v3192 = vpop.f32.mrf.mxu0
        %v3193 = vadd.f32 %v3000, %v3192
        %v3194 = vpop.f32.mrf.mxu0
        %v3195 = vadd.f32 %v3002, %v3194
        %v3196 = vpop.f32.mrf.mxu0
        %v3197 = vadd.f32 %v3004, %v3196
        %3198 = vdwg.mxu0
        %3199 = vmatprep.subr.bf16.mxu0 %v2010
        %3200 = vmatpush1.bf16.msra.mxu0 %v2009
        %3201 = vmatprep.subr.bf16.mxu0 %v2006
        %3202 = vmatpush1.bf16.msra.mxu0 %v2005
        %3203 = vmatprep.subr.bf16.mxu0 %v2002
        %3204 = vmatpush1.bf16.msra.mxu0 %v2001
        %3205 = vmatprep.subr.bf16.mxu0 %v1998
        %3206 = vmatpush1.bf16.msra.mxu0 %v1997
        %3207 = vmatprep.subr.bf16.mxu0 %v1994
        %3208 = vmatpush1.bf16.msra.mxu0 %v1993
        %3209 = vmatprep.subr.bf16.mxu0 %v1990
        %3210 = vmatpush1.bf16.msra.mxu0 %v1989
        %3211 = vmatprep.subr.bf16.mxu0 %v1986
        %3212 = vmatpush1.bf16.msra.mxu0 %v1985
        %3213 = vmatprep.subr.bf16.mxu0 %v1982
        %3214 = vmatpush1.bf16.msra.mxu0 %v1981
        %3215 = vmatprep.subr.bf16.mxu0 %v2042
        %3216 = vmatpush2.bf16.msra.mxu0 %v2041
        %3217 = vmatprep.subr.bf16.mxu0 %v2038
        %3218 = vmatpush2.bf16.msra.mxu0 %v2037
        %3219 = vmatprep.subr.bf16.mxu0 %v2034
        %3220 = vmatpush2.bf16.msra.mxu0 %v2033
        %3221 = vmatprep.subr.bf16.mxu0 %v2030
        %3222 = vmatpush2.bf16.msra.mxu0 %v2029
        %3223 = vmatprep.subr.bf16.mxu0 %v2026
        %3224 = vmatpush2.bf16.msra.mxu0 %v2025
        %3225 = vmatprep.subr.bf16.mxu0 %v2022
        %3226 = vmatpush2.bf16.msra.mxu0 %v2021
        %3227 = vmatprep.subr.bf16.mxu0 %v2018
        %3228 = vmatpush2.bf16.msra.mxu0 %v2017
        %3229 = vmatprep.subr.bf16.mxu0 %v2014
        %3230 = vmatpush2.bf16.msra.mxu0 %v2013
        %3231 = vmatprep.mubr.bf16.mxu0 %v1084
        %3232 = vmatmul.mubr.bf16.gmra.mxu0 %v1083
        %v3233 = vpop.f32.mrf.mxu0
        %v3234 = vadd.f32 %v722, %v3233
        %v3235 = vpop.f32.mrf.mxu0
        %v3236 = vadd.f32 %v726, %v3235
        %v3237 = vpop.f32.mrf.mxu0
        %v3238 = vadd.f32 %v722, %v3237
        %v3239 = vpop.f32.mrf.mxu0
        %v3240 = vadd.f32 %v726, %v3239
        %3241 = vmatprep.mubr.bf16.mxu0 %v1091
        %3242 = vmatmul.mubr.bf16.gmra.mxu0 %v1090
        %v3243 = vpop.f32.mrf.mxu0
        %v3244 = vadd.f32 %v722, %v3243
        %v3245 = vpop.f32.mrf.mxu0
        %v3246 = vadd.f32 %v726, %v3245
        %v3247 = vpop.f32.mrf.mxu0
        %v3248 = vadd.f32 %v722, %v3247
        %v3249 = vpop.f32.mrf.mxu0
        %v3250 = vadd.f32 %v726, %v3249
        %3251 = vmatprep.mubr.bf16.mxu0 %v1098
        %3252 = vmatmul.mubr.bf16.gmra.mxu0 %v1097
        %v3253 = vpop.f32.mrf.mxu0
        %v3254 = vadd.f32 %v722, %v3253
        %v3255 = vpop.f32.mrf.mxu0
        %v3256 = vadd.f32 %v726, %v3255
        %v3257 = vpop.f32.mrf.mxu0
        %v3258 = vadd.f32 %v722, %v3257
        %v3259 = vpop.f32.mrf.mxu0
        %v3260 = vadd.f32 %v726, %v3259
        %3261 = vmatprep.mubr.bf16.mxu0 %v1105
        %3262 = vmatmul.mubr.bf16.gmra.mxu0 %v1104
        %v3263 = vpop.f32.mrf.mxu0
        %v3264 = vadd.f32 %v722, %v3263
        %v3265 = vpop.f32.mrf.mxu0
        %v3266 = vadd.f32 %v726, %v3265
        %v3267 = vpop.f32.mrf.mxu0
        %v3268 = vadd.f32 %v722, %v3267
        %v3269 = vpop.f32.mrf.mxu0
        %v3270 = vadd.f32 %v726, %v3269
        %3271 = vmatprep.mubr.bf16.mxu0 %v1112
        %3272 = vmatmul.mubr.bf16.gmra.mxu0 %v1111
        %v3273 = vpop.f32.mrf.mxu0
        %v3274 = vadd.f32 %v722, %v3273
        %v3275 = vpop.f32.mrf.mxu0
        %v3276 = vadd.f32 %v726, %v3275
        %v3277 = vpop.f32.mrf.mxu0
        %v3278 = vadd.f32 %v722, %v3277
        %v3279 = vpop.f32.mrf.mxu0
        %v3280 = vadd.f32 %v726, %v3279
        %3281 = vmatprep.mubr.bf16.mxu0 %v1119
        %3282 = vmatmul.mubr.bf16.gmra.mxu0 %v1118
        %v3283 = vpop.f32.mrf.mxu0
        %v3284 = vadd.f32 %v722, %v3283
        %v3285 = vpop.f32.mrf.mxu0
        %v3286 = vadd.f32 %v726, %v3285
        %v3287 = vpop.f32.mrf.mxu0
        %v3288 = vadd.f32 %v722, %v3287
        %v3289 = vpop.f32.mrf.mxu0
        %v3290 = vadd.f32 %v726, %v3289
        %3291 = vmatprep.mubr.bf16.mxu0 %v1126
        %3292 = vmatmul.mubr.bf16.gmra.mxu0 %v1125
        %v3293 = vpop.f32.mrf.mxu0
        %v3294 = vadd.f32 %v722, %v3293
        %v3295 = vpop.f32.mrf.mxu0
        %v3296 = vadd.f32 %v726, %v3295
        %v3297 = vpop.f32.mrf.mxu0
        %v3298 = vadd.f32 %v722, %v3297
        %v3299 = vpop.f32.mrf.mxu0
        %v3300 = vadd.f32 %v726, %v3299
        %3301 = vmatprep.mubr.bf16.mxu0 %v1133
        %3302 = vmatmul.mubr.bf16.gmra.mxu0 %v1132
        %v3303 = vpop.f32.mrf.mxu0
        %v3304 = vadd.f32 %v722, %v3303
        %v3305 = vpop.f32.mrf.mxu0
        %v3306 = vadd.f32 %v726, %v3305
        %v3307 = vpop.f32.mrf.mxu0
        %v3308 = vadd.f32 %v722, %v3307
        %v3309 = vpop.f32.mrf.mxu0
        %v3310 = vadd.f32 %v726, %v3309
        %3311 = vmatprep.mubr.bf16.mxu0 %v1140
        %3312 = vmatmul.mubr.bf16.gmra.mxu0 %v1139
        %v3313 = vpop.f32.mrf.mxu0
        %v3314 = vadd.f32 %v722, %v3313
        %v3315 = vpop.f32.mrf.mxu0
        %v3316 = vadd.f32 %v726, %v3315
        %v3317 = vpop.f32.mrf.mxu0
        %v3318 = vadd.f32 %v722, %v3317
        %v3319 = vpop.f32.mrf.mxu0
        %v3320 = vadd.f32 %v726, %v3319
        %3321 = vmatprep.mubr.bf16.mxu0 %v1147
        %3322 = vmatmul.mubr.bf16.gmra.mxu0 %v1146
        %v3323 = vpop.f32.mrf.mxu0
        %v3324 = vadd.f32 %v722, %v3323
        %v3325 = vpop.f32.mrf.mxu0
        %v3326 = vadd.f32 %v726, %v3325
        %v3327 = vpop.f32.mrf.mxu0
        %v3328 = vadd.f32 %v722, %v3327
        %v3329 = vpop.f32.mrf.mxu0
        %v3330 = vadd.f32 %v726, %v3329
        %3331 = vmatprep.mubr.bf16.mxu0 %v1154
        %3332 = vmatmul.mubr.bf16.gmra.mxu0 %v1153
        %v3333 = vpop.f32.mrf.mxu0
        %v3334 = vadd.f32 %v722, %v3333
        %v3335 = vpop.f32.mrf.mxu0
        %v3336 = vadd.f32 %v726, %v3335
        %v3337 = vpop.f32.mrf.mxu0
        %v3338 = vadd.f32 %v722, %v3337
        %v3339 = vpop.f32.mrf.mxu0
        %v3340 = vadd.f32 %v726, %v3339
        %3341 = vmatprep.mubr.bf16.mxu0 %v1161
        %3342 = vmatmul.mubr.bf16.gmra.mxu0 %v1160
        %v3343 = vpop.f32.mrf.mxu0
        %v3344 = vadd.f32 %v722, %v3343
        %v3345 = vpop.f32.mrf.mxu0
        %v3346 = vadd.f32 %v726, %v3345
        %v3347 = vpop.f32.mrf.mxu0
        %v3348 = vadd.f32 %v722, %v3347
        %v3349 = vpop.f32.mrf.mxu0
        %v3350 = vadd.f32 %v726, %v3349
        %3351 = vmatprep.mubr.bf16.mxu0 %v1168
        %3352 = vmatmul.mubr.bf16.gmra.mxu0 %v1167
        %v3353 = vpop.f32.mrf.mxu0
        %v3354 = vadd.f32 %v722, %v3353
        %v3355 = vpop.f32.mrf.mxu0
        %v3356 = vadd.f32 %v726, %v3355
        %v3357 = vpop.f32.mrf.mxu0
        %v3358 = vadd.f32 %v722, %v3357
        %v3359 = vpop.f32.mrf.mxu0
        %v3360 = vadd.f32 %v726, %v3359
        %3361 = vmatprep.mubr.bf16.mxu0 %v1175
        %3362 = vmatmul.mubr.bf16.gmra.mxu0 %v1174
        %v3363 = vpop.f32.mrf.mxu0
        %v3364 = vadd.f32 %v722, %v3363
        %v3365 = vpop.f32.mrf.mxu0
        %v3366 = vadd.f32 %v726, %v3365
        %v3367 = vpop.f32.mrf.mxu0
        %v3368 = vadd.f32 %v722, %v3367
        %v3369 = vpop.f32.mrf.mxu0
        %v3370 = vadd.f32 %v726, %v3369
        %3371 = vmatprep.mubr.bf16.mxu0 %v1182
        %3372 = vmatmul.mubr.bf16.gmra.mxu0 %v1181
        %v3373 = vpop.f32.mrf.mxu0
        %v3374 = vadd.f32 %v722, %v3373
        %v3375 = vpop.f32.mrf.mxu0
        %v3376 = vadd.f32 %v726, %v3375
        %v3377 = vpop.f32.mrf.mxu0
        %v3378 = vadd.f32 %v722, %v3377
        %v3379 = vpop.f32.mrf.mxu0
        %v3380 = vadd.f32 %v726, %v3379
        %3381 = vmatprep.mubr.bf16.mxu0 %v1189
        %3382 = vmatmul.mubr.bf16.gmra.mxu0 %v1188
        %v3383 = vpop.f32.mrf.mxu0
        %v3384 = vadd.f32 %v722, %v3383
        %v3385 = vpop.f32.mrf.mxu0
        %v3386 = vadd.f32 %v726, %v3385
        %v3387 = vpop.f32.mrf.mxu0
        %v3388 = vadd.f32 %v722, %v3387
        %v3389 = vpop.f32.mrf.mxu0
        %v3390 = vadd.f32 %v726, %v3389
        %3391 = vdwg.mxu0
        %3392 = vmatprep.subr.bf16.mxu0 %v2074
        %3393 = vmatpush1.bf16.msra.mxu0 %v2073
        %3394 = vmatprep.subr.bf16.mxu0 %v2070
        %3395 = vmatpush1.bf16.msra.mxu0 %v2069
        %3396 = vmatprep.subr.bf16.mxu0 %v2066
        %3397 = vmatpush1.bf16.msra.mxu0 %v2065
        %3398 = vmatprep.subr.bf16.mxu0 %v2062
        %3399 = vmatpush1.bf16.msra.mxu0 %v2061
        %3400 = vmatprep.subr.bf16.mxu0 %v2058
        %3401 = vmatpush1.bf16.msra.mxu0 %v2057
        %3402 = vmatprep.subr.bf16.mxu0 %v2054
        %3403 = vmatpush1.bf16.msra.mxu0 %v2053
        %3404 = vmatprep.subr.bf16.mxu0 %v2050
        %3405 = vmatpush1.bf16.msra.mxu0 %v2049
        %3406 = vmatprep.subr.bf16.mxu0 %v2046
        %3407 = vmatpush1.bf16.msra.mxu0 %v2045
        %3408 = vmatprep.subr.bf16.mxu0 %v2106
        %3409 = vmatpush2.bf16.msra.mxu0 %v2105
        %3410 = vmatprep.subr.bf16.mxu0 %v2102
        %3411 = vmatpush2.bf16.msra.mxu0 %v2101
        %3412 = vmatprep.subr.bf16.mxu0 %v2098
        %3413 = vmatpush2.bf16.msra.mxu0 %v2097
        %3414 = vmatprep.subr.bf16.mxu0 %v2094
        %3415 = vmatpush2.bf16.msra.mxu0 %v2093
        %3416 = vmatprep.subr.bf16.mxu0 %v2090
        %3417 = vmatpush2.bf16.msra.mxu0 %v2089
        %3418 = vmatprep.subr.bf16.mxu0 %v2086
        %3419 = vmatpush2.bf16.msra.mxu0 %v2085
        %3420 = vmatprep.subr.bf16.mxu0 %v2082
        %3421 = vmatpush2.bf16.msra.mxu0 %v2081
        %3422 = vmatprep.subr.bf16.mxu0 %v2078
        %3423 = vmatpush2.bf16.msra.mxu0 %v2077
        %3424 = vmatprep.mubr.bf16.mxu0 %v1086
        %3425 = vmatmul.mubr.bf16.gmra.mxu0 %v1085
        %v3426 = vpop.f32.mrf.mxu0
        %v3427 = vadd.f32 %v3234, %v3426
        %v3428 = vpop.f32.mrf.mxu0
        %v3429 = vadd.f32 %v3236, %v3428
        %v3430 = vpop.f32.mrf.mxu0
        %v3431 = vadd.f32 %v3238, %v3430
        %v3432 = vpop.f32.mrf.mxu0
        %v3433 = vadd.f32 %v3240, %v3432
        %3434 = vmatprep.mubr.bf16.mxu0 %v1093
        %3435 = vmatmul.mubr.bf16.gmra.mxu0 %v1092
        %v3436 = vpop.f32.mrf.mxu0
        %v3437 = vadd.f32 %v3244, %v3436
        %v3438 = vpop.f32.mrf.mxu0
        %v3439 = vadd.f32 %v3246, %v3438
        %v3440 = vpop.f32.mrf.mxu0
        %v3441 = vadd.f32 %v3248, %v3440
        %v3442 = vpop.f32.mrf.mxu0
        %v3443 = vadd.f32 %v3250, %v3442
        %3444 = vmatprep.mubr.bf16.mxu0 %v1100
        %3445 = vmatmul.mubr.bf16.gmra.mxu0 %v1099
        %v3446 = vpop.f32.mrf.mxu0
        %v3447 = vadd.f32 %v3254, %v3446
        %v3448 = vpop.f32.mrf.mxu0
        %v3449 = vadd.f32 %v3256, %v3448
        %v3450 = vpop.f32.mrf.mxu0
        %v3451 = vadd.f32 %v3258, %v3450
        %v3452 = vpop.f32.mrf.mxu0
        %v3453 = vadd.f32 %v3260, %v3452
        %3454 = vmatprep.mubr.bf16.mxu0 %v1107
        %3455 = vmatmul.mubr.bf16.gmra.mxu0 %v1106
        %v3456 = vpop.f32.mrf.mxu0
        %v3457 = vadd.f32 %v3264, %v3456
        %v3458 = vpop.f32.mrf.mxu0
        %v3459 = vadd.f32 %v3266, %v3458
        %v3460 = vpop.f32.mrf.mxu0
        %v3461 = vadd.f32 %v3268, %v3460
        %v3462 = vpop.f32.mrf.mxu0
        %v3463 = vadd.f32 %v3270, %v3462
        %3464 = vmatprep.mubr.bf16.mxu0 %v1114
        %3465 = vmatmul.mubr.bf16.gmra.mxu0 %v1113
        %v3466 = vpop.f32.mrf.mxu0
        %v3467 = vadd.f32 %v3274, %v3466
        %v3468 = vpop.f32.mrf.mxu0
        %v3469 = vadd.f32 %v3276, %v3468
        %v3470 = vpop.f32.mrf.mxu0
        %v3471 = vadd.f32 %v3278, %v3470
        %v3472 = vpop.f32.mrf.mxu0
        %v3473 = vadd.f32 %v3280, %v3472
        %3474 = vmatprep.mubr.bf16.mxu0 %v1121
        %3475 = vmatmul.mubr.bf16.gmra.mxu0 %v1120
        %v3476 = vpop.f32.mrf.mxu0
        %v3477 = vadd.f32 %v3284, %v3476
        %v3478 = vpop.f32.mrf.mxu0
        %v3479 = vadd.f32 %v3286, %v3478
        %v3480 = vpop.f32.mrf.mxu0
        %v3481 = vadd.f32 %v3288, %v3480
        %v3482 = vpop.f32.mrf.mxu0
        %v3483 = vadd.f32 %v3290, %v3482
        %3484 = vmatprep.mubr.bf16.mxu0 %v1128
        %3485 = vmatmul.mubr.bf16.gmra.mxu0 %v1127
        %v3486 = vpop.f32.mrf.mxu0
        %v3487 = vadd.f32 %v3294, %v3486
        %v3488 = vpop.f32.mrf.mxu0
        %v3489 = vadd.f32 %v3296, %v3488
        %v3490 = vpop.f32.mrf.mxu0
        %v3491 = vadd.f32 %v3298, %v3490
        %v3492 = vpop.f32.mrf.mxu0
        %v3493 = vadd.f32 %v3300, %v3492
        %3494 = vmatprep.mubr.bf16.mxu0 %v1135
        %3495 = vmatmul.mubr.bf16.gmra.mxu0 %v1134
        %v3496 = vpop.f32.mrf.mxu0
        %v3497 = vadd.f32 %v3304, %v3496
        %v3498 = vpop.f32.mrf.mxu0
        %v3499 = vadd.f32 %v3306, %v3498
        %v3500 = vpop.f32.mrf.mxu0
        %v3501 = vadd.f32 %v3308, %v3500
        %v3502 = vpop.f32.mrf.mxu0
        %v3503 = vadd.f32 %v3310, %v3502
        %3504 = vmatprep.mubr.bf16.mxu0 %v1142
        %3505 = vmatmul.mubr.bf16.gmra.mxu0 %v1141
        %v3506 = vpop.f32.mrf.mxu0
        %v3507 = vadd.f32 %v3314, %v3506
        %v3508 = vpop.f32.mrf.mxu0
        %v3509 = vadd.f32 %v3316, %v3508
        %v3510 = vpop.f32.mrf.mxu0
        %v3511 = vadd.f32 %v3318, %v3510
        %v3512 = vpop.f32.mrf.mxu0
        %v3513 = vadd.f32 %v3320, %v3512
        %3514 = vmatprep.mubr.bf16.mxu0 %v1149
        %3515 = vmatmul.mubr.bf16.gmra.mxu0 %v1148
        %v3516 = vpop.f32.mrf.mxu0
        %v3517 = vadd.f32 %v3324, %v3516
        %v3518 = vpop.f32.mrf.mxu0
        %v3519 = vadd.f32 %v3326, %v3518
        %v3520 = vpop.f32.mrf.mxu0
        %v3521 = vadd.f32 %v3328, %v3520
        %v3522 = vpop.f32.mrf.mxu0
        %v3523 = vadd.f32 %v3330, %v3522
        %3524 = vmatprep.mubr.bf16.mxu0 %v1156
        %3525 = vmatmul.mubr.bf16.gmra.mxu0 %v1155
        %v3526 = vpop.f32.mrf.mxu0
        %v3527 = vadd.f32 %v3334, %v3526
        %v3528 = vpop.f32.mrf.mxu0
        %v3529 = vadd.f32 %v3336, %v3528
        %v3530 = vpop.f32.mrf.mxu0
        %v3531 = vadd.f32 %v3338, %v3530
        %v3532 = vpop.f32.mrf.mxu0
        %v3533 = vadd.f32 %v3340, %v3532
        %3534 = vmatprep.mubr.bf16.mxu0 %v1163
        %3535 = vmatmul.mubr.bf16.gmra.mxu0 %v1162
        %v3536 = vpop.f32.mrf.mxu0
        %v3537 = vadd.f32 %v3344, %v3536
        %v3538 = vpop.f32.mrf.mxu0
        %v3539 = vadd.f32 %v3346, %v3538
        %v3540 = vpop.f32.mrf.mxu0
        %v3541 = vadd.f32 %v3348, %v3540
        %v3542 = vpop.f32.mrf.mxu0
        %v3543 = vadd.f32 %v3350, %v3542
        %3544 = vmatprep.mubr.bf16.mxu0 %v1170
        %3545 = vmatmul.mubr.bf16.gmra.mxu0 %v1169
        %v3546 = vpop.f32.mrf.mxu0
        %v3547 = vadd.f32 %v3354, %v3546
        %v3548 = vpop.f32.mrf.mxu0
        %v3549 = vadd.f32 %v3356, %v3548
        %v3550 = vpop.f32.mrf.mxu0
        %v3551 = vadd.f32 %v3358, %v3550
        %v3552 = vpop.f32.mrf.mxu0
        %v3553 = vadd.f32 %v3360, %v3552
        %3554 = vmatprep.mubr.bf16.mxu0 %v1177
        %3555 = vmatmul.mubr.bf16.gmra.mxu0 %v1176
        %v3556 = vpop.f32.mrf.mxu0
        %v3557 = vadd.f32 %v3364, %v3556
        %v3558 = vpop.f32.mrf.mxu0
        %v3559 = vadd.f32 %v3366, %v3558
        %v3560 = vpop.f32.mrf.mxu0
        %v3561 = vadd.f32 %v3368, %v3560
        %v3562 = vpop.f32.mrf.mxu0
        %v3563 = vadd.f32 %v3370, %v3562
        %3564 = vmatprep.mubr.bf16.mxu0 %v1184
        %3565 = vmatmul.mubr.bf16.gmra.mxu0 %v1183
        %v3566 = vpop.f32.mrf.mxu0
        %v3567 = vadd.f32 %v3374, %v3566
        %v3568 = vpop.f32.mrf.mxu0
        %v3569 = vadd.f32 %v3376, %v3568
        %v3570 = vpop.f32.mrf.mxu0
        %v3571 = vadd.f32 %v3378, %v3570
        %v3572 = vpop.f32.mrf.mxu0
        %v3573 = vadd.f32 %v3380, %v3572
        %3574 = vmatprep.mubr.bf16.mxu0 %v1191
        %3575 = vmatmul.mubr.bf16.gmra.mxu0 %v1190
        %v3576 = vpop.f32.mrf.mxu0
        %v3577 = vadd.f32 %v3384, %v3576
        %v3578 = vpop.f32.mrf.mxu0
        %v3579 = vadd.f32 %v3386, %v3578
        %v3580 = vpop.f32.mrf.mxu0
        %v3581 = vadd.f32 %v3388, %v3580
        %v3582 = vpop.f32.mrf.mxu0
        %v3583 = vadd.f32 %v3390, %v3582
        %3584 = vdwg.mxu0
        %3585 = vmatprep.subr.bf16.mxu0 %v2138
        %3586 = vmatpush1.bf16.msra.mxu0 %v2137
        %3587 = vmatprep.subr.bf16.mxu0 %v2134
        %3588 = vmatpush1.bf16.msra.mxu0 %v2133
        %3589 = vmatprep.subr.bf16.mxu0 %v2130
        %3590 = vmatpush1.bf16.msra.mxu0 %v2129
        %3591 = vmatprep.subr.bf16.mxu0 %v2126
        %3592 = vmatpush1.bf16.msra.mxu0 %v2125
        %3593 = vmatprep.subr.bf16.mxu0 %v2122
        %3594 = vmatpush1.bf16.msra.mxu0 %v2121
        %3595 = vmatprep.subr.bf16.mxu0 %v2118
        %3596 = vmatpush1.bf16.msra.mxu0 %v2117
        %3597 = vmatprep.subr.bf16.mxu0 %v2114
        %3598 = vmatpush1.bf16.msra.mxu0 %v2113
        %3599 = vmatprep.subr.bf16.mxu0 %v2110
        %3600 = vmatpush1.bf16.msra.mxu0 %v2109
        %3601 = vmatprep.subr.bf16.mxu0 %v2170
        %3602 = vmatpush2.bf16.msra.mxu0 %v2169
        %3603 = vmatprep.subr.bf16.mxu0 %v2166
        %3604 = vmatpush2.bf16.msra.mxu0 %v2165
        %3605 = vmatprep.subr.bf16.mxu0 %v2162
        %3606 = vmatpush2.bf16.msra.mxu0 %v2161
        %3607 = vmatprep.subr.bf16.mxu0 %v2158
        %3608 = vmatpush2.bf16.msra.mxu0 %v2157
        %3609 = vmatprep.subr.bf16.mxu0 %v2154
        %3610 = vmatpush2.bf16.msra.mxu0 %v2153
        %3611 = vmatprep.subr.bf16.mxu0 %v2150
        %3612 = vmatpush2.bf16.msra.mxu0 %v2149
        %3613 = vmatprep.subr.bf16.mxu0 %v2146
        %3614 = vmatpush2.bf16.msra.mxu0 %v2145
        %3615 = vmatprep.subr.bf16.mxu0 %v2142
        %3616 = vmatpush2.bf16.msra.mxu0 %v2141
        %3617 = vmatprep.mubr.bf16.mxu0 %v1088
        %3618 = vmatmul.mubr.bf16.gmra.mxu0 %v1087
        %v3619 = vpop.f32.mrf.mxu0
        %v3620 = vadd.f32 %v3427, %v3619
        %v3621 = vpop.f32.mrf.mxu0
        %v3622 = vadd.f32 %v3429, %v3621
        %v3623 = vpop.f32.mrf.mxu0
        %v3624 = vadd.f32 %v3431, %v3623
        %v3625 = vpop.f32.mrf.mxu0
        %v3626 = vadd.f32 %v3433, %v3625
        %3627 = vmatprep.mubr.bf16.mxu0 %v1095
        %3628 = vmatmul.mubr.bf16.gmra.mxu0 %v1094
        %v3629 = vpop.f32.mrf.mxu0
        %v3630 = vadd.f32 %v3437, %v3629
        %v3631 = vpop.f32.mrf.mxu0
        %v3632 = vadd.f32 %v3439, %v3631
        %v3633 = vpop.f32.mrf.mxu0
        %v3634 = vadd.f32 %v3441, %v3633
        %v3635 = vpop.f32.mrf.mxu0
        %v3636 = vadd.f32 %v3443, %v3635
        %3637 = vmatprep.mubr.bf16.mxu0 %v1102
        %3638 = vmatmul.mubr.bf16.gmra.mxu0 %v1101
        %v3639 = vpop.f32.mrf.mxu0
        %v3640 = vadd.f32 %v3447, %v3639
        %v3641 = vpop.f32.mrf.mxu0
        %v3642 = vadd.f32 %v3449, %v3641
        %v3643 = vpop.f32.mrf.mxu0
        %v3644 = vadd.f32 %v3451, %v3643
        %v3645 = vpop.f32.mrf.mxu0
        %v3646 = vadd.f32 %v3453, %v3645
        %3647 = vmatprep.mubr.bf16.mxu0 %v1109
        %3648 = vmatmul.mubr.bf16.gmra.mxu0 %v1108
        %v3649 = vpop.f32.mrf.mxu0
        %v3650 = vadd.f32 %v3457, %v3649
        %v3651 = vpop.f32.mrf.mxu0
        %v3652 = vadd.f32 %v3459, %v3651
        %v3653 = vpop.f32.mrf.mxu0
        %v3654 = vadd.f32 %v3461, %v3653
        %v3655 = vpop.f32.mrf.mxu0
        %v3656 = vadd.f32 %v3463, %v3655
        %3657 = vmatprep.mubr.bf16.mxu0 %v1116
        %3658 = vmatmul.mubr.bf16.gmra.mxu0 %v1115
        %v3659 = vpop.f32.mrf.mxu0
        %v3660 = vadd.f32 %v3467, %v3659
        %v3661 = vpop.f32.mrf.mxu0
        %v3662 = vadd.f32 %v3469, %v3661
        %v3663 = vpop.f32.mrf.mxu0
        %v3664 = vadd.f32 %v3471, %v3663
        %v3665 = vpop.f32.mrf.mxu0
        %v3666 = vadd.f32 %v3473, %v3665
        %3667 = vmatprep.mubr.bf16.mxu0 %v1123
        %3668 = vmatmul.mubr.bf16.gmra.mxu0 %v1122
        %v3669 = vpop.f32.mrf.mxu0
        %v3670 = vadd.f32 %v3477, %v3669
        %v3671 = vpop.f32.mrf.mxu0
        %v3672 = vadd.f32 %v3479, %v3671
        %v3673 = vpop.f32.mrf.mxu0
        %v3674 = vadd.f32 %v3481, %v3673
        %v3675 = vpop.f32.mrf.mxu0
        %v3676 = vadd.f32 %v3483, %v3675
        %3677 = vmatprep.mubr.bf16.mxu0 %v1130
        %3678 = vmatmul.mubr.bf16.gmra.mxu0 %v1129
        %v3679 = vpop.f32.mrf.mxu0
        %v3680 = vadd.f32 %v3487, %v3679
        %v3681 = vpop.f32.mrf.mxu0
        %v3682 = vadd.f32 %v3489, %v3681
        %v3683 = vpop.f32.mrf.mxu0
        %v3684 = vadd.f32 %v3491, %v3683
        %v3685 = vpop.f32.mrf.mxu0
        %v3686 = vadd.f32 %v3493, %v3685
        %3687 = vmatprep.mubr.bf16.mxu0 %v1137
        %3688 = vmatmul.mubr.bf16.gmra.mxu0 %v1136
        %v3689 = vpop.f32.mrf.mxu0
        %v3690 = vadd.f32 %v3497, %v3689
        %v3691 = vpop.f32.mrf.mxu0
        %v3692 = vadd.f32 %v3499, %v3691
        %v3693 = vpop.f32.mrf.mxu0
        %v3694 = vadd.f32 %v3501, %v3693
        %v3695 = vpop.f32.mrf.mxu0
        %v3696 = vadd.f32 %v3503, %v3695
        %3697 = vmatprep.mubr.bf16.mxu0 %v1144
        %3698 = vmatmul.mubr.bf16.gmra.mxu0 %v1143
        %v3699 = vpop.f32.mrf.mxu0
        %v3700 = vadd.f32 %v3507, %v3699
        %v3701 = vpop.f32.mrf.mxu0
        %v3702 = vadd.f32 %v3509, %v3701
        %v3703 = vpop.f32.mrf.mxu0
        %v3704 = vadd.f32 %v3511, %v3703
        %v3705 = vpop.f32.mrf.mxu0
        %v3706 = vadd.f32 %v3513, %v3705
        %3707 = vmatprep.mubr.bf16.mxu0 %v1151
        %3708 = vmatmul.mubr.bf16.gmra.mxu0 %v1150
        %v3709 = vpop.f32.mrf.mxu0
        %v3710 = vadd.f32 %v3517, %v3709
        %v3711 = vpop.f32.mrf.mxu0
        %v3712 = vadd.f32 %v3519, %v3711
        %v3713 = vpop.f32.mrf.mxu0
        %v3714 = vadd.f32 %v3521, %v3713
        %v3715 = vpop.f32.mrf.mxu0
        %v3716 = vadd.f32 %v3523, %v3715
        %3717 = vmatprep.mubr.bf16.mxu0 %v1158
        %3718 = vmatmul.mubr.bf16.gmra.mxu0 %v1157
        %v3719 = vpop.f32.mrf.mxu0
        %v3720 = vadd.f32 %v3527, %v3719
        %v3721 = vpop.f32.mrf.mxu0
        %v3722 = vadd.f32 %v3529, %v3721
        %v3723 = vpop.f32.mrf.mxu0
        %v3724 = vadd.f32 %v3531, %v3723
        %v3725 = vpop.f32.mrf.mxu0
        %v3726 = vadd.f32 %v3533, %v3725
        %3727 = vmatprep.mubr.bf16.mxu0 %v1165
        %3728 = vmatmul.mubr.bf16.gmra.mxu0 %v1164
        %v3729 = vpop.f32.mrf.mxu0
        %v3730 = vadd.f32 %v3537, %v3729
        %v3731 = vpop.f32.mrf.mxu0
        %v3732 = vadd.f32 %v3539, %v3731
        %v3733 = vpop.f32.mrf.mxu0
        %v3734 = vadd.f32 %v3541, %v3733
        %v3735 = vpop.f32.mrf.mxu0
        %v3736 = vadd.f32 %v3543, %v3735
        %3737 = vmatprep.mubr.bf16.mxu0 %v1172
        %3738 = vmatmul.mubr.bf16.gmra.mxu0 %v1171
        %v3739 = vpop.f32.mrf.mxu0
        %v3740 = vadd.f32 %v3547, %v3739
        %v3741 = vpop.f32.mrf.mxu0
        %v3742 = vadd.f32 %v3549, %v3741
        %v3743 = vpop.f32.mrf.mxu0
        %v3744 = vadd.f32 %v3551, %v3743
        %v3745 = vpop.f32.mrf.mxu0
        %v3746 = vadd.f32 %v3553, %v3745
        %3747 = vmatprep.mubr.bf16.mxu0 %v1179
        %3748 = vmatmul.mubr.bf16.gmra.mxu0 %v1178
        %v3749 = vpop.f32.mrf.mxu0
        %v3750 = vadd.f32 %v3557, %v3749
        %v3751 = vpop.f32.mrf.mxu0
        %v3752 = vadd.f32 %v3559, %v3751
        %v3753 = vpop.f32.mrf.mxu0
        %v3754 = vadd.f32 %v3561, %v3753
        %v3755 = vpop.f32.mrf.mxu0
        %v3756 = vadd.f32 %v3563, %v3755
        %3757 = vmatprep.mubr.bf16.mxu0 %v1186
        %3758 = vmatmul.mubr.bf16.gmra.mxu0 %v1185
        %v3759 = vpop.f32.mrf.mxu0
        %v3760 = vadd.f32 %v3567, %v3759
        %v3761 = vpop.f32.mrf.mxu0
        %v3762 = vadd.f32 %v3569, %v3761
        %v3763 = vpop.f32.mrf.mxu0
        %v3764 = vadd.f32 %v3571, %v3763
        %v3765 = vpop.f32.mrf.mxu0
        %v3766 = vadd.f32 %v3573, %v3765
        %3767 = vmatprep.mubr.bf16.mxu0 %v1193
        %3768 = vmatmul.mubr.bf16.gmra.mxu0 %v1192
        %v3769 = vpop.f32.mrf.mxu0
        %v3770 = vadd.f32 %v3577, %v3769
        %v3771 = vpop.f32.mrf.mxu0
        %v3772 = vadd.f32 %v3579, %v3771
        %v3773 = vpop.f32.mrf.mxu0
        %v3774 = vadd.f32 %v3581, %v3773
        %v3775 = vpop.f32.mrf.mxu0
        %v3776 = vadd.f32 %v3583, %v3775
        %3777 = vdwg.mxu0
        %3778 = vmatprep.subr.bf16.mxu0 %v2202
        %3779 = vmatpush1.bf16.msra.mxu0 %v2201
        %3780 = vmatprep.subr.bf16.mxu0 %v2198
        %3781 = vmatpush1.bf16.msra.mxu0 %v2197
        %3782 = vmatprep.subr.bf16.mxu0 %v2194
        %3783 = vmatpush1.bf16.msra.mxu0 %v2193
        %3784 = vmatprep.subr.bf16.mxu0 %v2190
        %3785 = vmatpush1.bf16.msra.mxu0 %v2189
        %3786 = vmatprep.subr.bf16.mxu0 %v2186
        %3787 = vmatpush1.bf16.msra.mxu0 %v2185
        %3788 = vmatprep.subr.bf16.mxu0 %v2182
        %3789 = vmatpush1.bf16.msra.mxu0 %v2181
        %3790 = vmatprep.subr.bf16.mxu0 %v2178
        %3791 = vmatpush1.bf16.msra.mxu0 %v2177
        %3792 = vmatprep.subr.bf16.mxu0 %v2174
        %3793 = vmatpush1.bf16.msra.mxu0 %v2173
        %3794 = vmatprep.subr.bf16.mxu0 0
        %3795 = vmatpush2.bf16.msra.mxu0 0
        %3796 = vmatprep.subr.bf16.mxu0 0
        %3797 = vmatpush2.bf16.msra.mxu0 0
        %3798 = vmatprep.subr.bf16.mxu0 0
        %3799 = vmatpush2.bf16.msra.mxu0 0
        %3800 = vmatprep.subr.bf16.mxu0 0
        %3801 = vmatpush2.bf16.msra.mxu0 0
        %3802 = vmatprep.subr.bf16.mxu0 0
        %3803 = vmatpush2.bf16.msra.mxu0 0
        %3804 = vmatprep.subr.bf16.mxu0 0
        %3805 = vmatpush2.bf16.msra.mxu0 0
        %3806 = vmatprep.subr.bf16.mxu0 0
        %3807 = vmatpush2.bf16.msra.mxu0 0
        %3808 = vmatprep.subr.bf16.mxu0 0
        %3809 = vmatpush2.bf16.msra.mxu0 0
        %3810 = vmatprep.mubr.bf16.mxu0 0
        %3811 = vmatmul.mubr.bf16.gmra.mxu0 %v1089
        %v3812 = vpop.f32.mrf.mxu0
        %v3813 = vadd.f32 %v3620, %v3812
        %v3814 = vpop.f32.mrf.mxu0
        %v3815 = vadd.f32 %v3622, %v3814
        %v3816 = vpop.f32.mrf.mxu0
        %v3817 = vadd.f32 %v3624, %v3816
        %v3818 = vpop.f32.mrf.mxu0
        %v3819 = vadd.f32 %v3626, %v3818
        %3820 = vmatprep.mubr.bf16.mxu0 0
        %3821 = vmatmul.mubr.bf16.gmra.mxu0 %v1096
        %v3822 = vpop.f32.mrf.mxu0
        %v3823 = vadd.f32 %v3630, %v3822
        %v3824 = vpop.f32.mrf.mxu0
        %v3825 = vadd.f32 %v3632, %v3824
        %v3826 = vpop.f32.mrf.mxu0
        %v3827 = vadd.f32 %v3634, %v3826
        %v3828 = vpop.f32.mrf.mxu0
        %v3829 = vadd.f32 %v3636, %v3828
        %3830 = vmatprep.mubr.bf16.mxu0 0
        %3831 = vmatmul.mubr.bf16.gmra.mxu0 %v1103
        %v3832 = vpop.f32.mrf.mxu0
        %v3833 = vadd.f32 %v3640, %v3832
        %v3834 = vpop.f32.mrf.mxu0
        %v3835 = vadd.f32 %v3642, %v3834
        %v3836 = vpop.f32.mrf.mxu0
        %v3837 = vadd.f32 %v3644, %v3836
        %v3838 = vpop.f32.mrf.mxu0
        %v3839 = vadd.f32 %v3646, %v3838
        %3840 = vmatprep.mubr.bf16.mxu0 0
        %3841 = vmatmul.mubr.bf16.gmra.mxu0 %v1110
        %v3842 = vpop.f32.mrf.mxu0
        %v3843 = vadd.f32 %v3650, %v3842
        %v3844 = vpop.f32.mrf.mxu0
        %v3845 = vadd.f32 %v3652, %v3844
        %v3846 = vpop.f32.mrf.mxu0
        %v3847 = vadd.f32 %v3654, %v3846
        %v3848 = vpop.f32.mrf.mxu0
        %v3849 = vadd.f32 %v3656, %v3848
        %3850 = vmatprep.mubr.bf16.mxu0 0
        %3851 = vmatmul.mubr.bf16.gmra.mxu0 %v1117
        %v3852 = vpop.f32.mrf.mxu0
        %v3853 = vadd.f32 %v3660, %v3852
        %v3854 = vpop.f32.mrf.mxu0
        %v3855 = vadd.f32 %v3662, %v3854
        %v3856 = vpop.f32.mrf.mxu0
        %v3857 = vadd.f32 %v3664, %v3856
        %v3858 = vpop.f32.mrf.mxu0
        %v3859 = vadd.f32 %v3666, %v3858
        %3860 = vmatprep.mubr.bf16.mxu0 0
        %3861 = vmatmul.mubr.bf16.gmra.mxu0 %v1124
        %v3862 = vpop.f32.mrf.mxu0
        %v3863 = vadd.f32 %v3670, %v3862
        %v3864 = vpop.f32.mrf.mxu0
        %v3865 = vadd.f32 %v3672, %v3864
        %v3866 = vpop.f32.mrf.mxu0
        %v3867 = vadd.f32 %v3674, %v3866
        %v3868 = vpop.f32.mrf.mxu0
        %v3869 = vadd.f32 %v3676, %v3868
        %3870 = vmatprep.mubr.bf16.mxu0 0
        %3871 = vmatmul.mubr.bf16.gmra.mxu0 %v1131
        %v3872 = vpop.f32.mrf.mxu0
        %v3873 = vadd.f32 %v3680, %v3872
        %v3874 = vpop.f32.mrf.mxu0
        %v3875 = vadd.f32 %v3682, %v3874
        %v3876 = vpop.f32.mrf.mxu0
        %v3877 = vadd.f32 %v3684, %v3876
        %v3878 = vpop.f32.mrf.mxu0
        %v3879 = vadd.f32 %v3686, %v3878
        %3880 = vmatprep.mubr.bf16.mxu0 0
        %3881 = vmatmul.mubr.bf16.gmra.mxu0 %v1138
        %v3882 = vpop.f32.mrf.mxu0
        %v3883 = vadd.f32 %v3690, %v3882
        %v3884 = vpop.f32.mrf.mxu0
        %v3885 = vadd.f32 %v3692, %v3884
        %v3886 = vpop.f32.mrf.mxu0
        %v3887 = vadd.f32 %v3694, %v3886
        %v3888 = vpop.f32.mrf.mxu0
        %v3889 = vadd.f32 %v3696, %v3888
        %3890 = vmatprep.mubr.bf16.mxu0 0
        %3891 = vmatmul.mubr.bf16.gmra.mxu0 %v1145
        %v3892 = vpop.f32.mrf.mxu0
        %v3893 = vadd.f32 %v3700, %v3892
        %v3894 = vpop.f32.mrf.mxu0
        %v3895 = vadd.f32 %v3702, %v3894
        %v3896 = vpop.f32.mrf.mxu0
        %v3897 = vadd.f32 %v3704, %v3896
        %v3898 = vpop.f32.mrf.mxu0
        %v3899 = vadd.f32 %v3706, %v3898
        %3900 = vmatprep.mubr.bf16.mxu0 0
        %3901 = vmatmul.mubr.bf16.gmra.mxu0 %v1152
        %v3902 = vpop.f32.mrf.mxu0
        %v3903 = vadd.f32 %v3710, %v3902
        %v3904 = vpop.f32.mrf.mxu0
        %v3905 = vadd.f32 %v3712, %v3904
        %v3906 = vpop.f32.mrf.mxu0
        %v3907 = vadd.f32 %v3714, %v3906
        %v3908 = vpop.f32.mrf.mxu0
        %v3909 = vadd.f32 %v3716, %v3908
        %3910 = vmatprep.mubr.bf16.mxu0 0
        %3911 = vmatmul.mubr.bf16.gmra.mxu0 %v1159
        %v3912 = vpop.f32.mrf.mxu0
        %v3913 = vadd.f32 %v3720, %v3912
        %v3914 = vpop.f32.mrf.mxu0
        %v3915 = vadd.f32 %v3722, %v3914
        %v3916 = vpop.f32.mrf.mxu0
        %v3917 = vadd.f32 %v3724, %v3916
        %v3918 = vpop.f32.mrf.mxu0
        %v3919 = vadd.f32 %v3726, %v3918
        %3920 = vmatprep.mubr.bf16.mxu0 0
        %3921 = vmatmul.mubr.bf16.gmra.mxu0 %v1166
        %v3922 = vpop.f32.mrf.mxu0
        %v3923 = vadd.f32 %v3730, %v3922
        %v3924 = vpop.f32.mrf.mxu0
        %v3925 = vadd.f32 %v3732, %v3924
        %v3926 = vpop.f32.mrf.mxu0
        %v3927 = vadd.f32 %v3734, %v3926
        %v3928 = vpop.f32.mrf.mxu0
        %v3929 = vadd.f32 %v3736, %v3928
        %3930 = vmatprep.mubr.bf16.mxu0 0
        %3931 = vmatmul.mubr.bf16.gmra.mxu0 %v1173
        %v3932 = vpop.f32.mrf.mxu0
        %v3933 = vadd.f32 %v3740, %v3932
        %v3934 = vpop.f32.mrf.mxu0
        %v3935 = vadd.f32 %v3742, %v3934
        %v3936 = vpop.f32.mrf.mxu0
        %v3937 = vadd.f32 %v3744, %v3936
        %v3938 = vpop.f32.mrf.mxu0
        %v3939 = vadd.f32 %v3746, %v3938
        %3940 = vmatprep.mubr.bf16.mxu0 0
        %3941 = vmatmul.mubr.bf16.gmra.mxu0 %v1180
        %v3942 = vpop.f32.mrf.mxu0
        %v3943 = vadd.f32 %v3750, %v3942
        %v3944 = vpop.f32.mrf.mxu0
        %v3945 = vadd.f32 %v3752, %v3944
        %v3946 = vpop.f32.mrf.mxu0
        %v3947 = vadd.f32 %v3754, %v3946
        %v3948 = vpop.f32.mrf.mxu0
        %v3949 = vadd.f32 %v3756, %v3948
        %3950 = vmatprep.mubr.bf16.mxu0 0
        %3951 = vmatmul.mubr.bf16.gmra.mxu0 %v1187
        %v3952 = vpop.f32.mrf.mxu0
        %v3953 = vadd.f32 %v3760, %v3952
        %v3954 = vpop.f32.mrf.mxu0
        %v3955 = vadd.f32 %v3762, %v3954
        %v3956 = vpop.f32.mrf.mxu0
        %v3957 = vadd.f32 %v3764, %v3956
        %v3958 = vpop.f32.mrf.mxu0
        %v3959 = vadd.f32 %v3766, %v3958
        %3960 = vmatprep.mubr.bf16.mxu0 0
        %3961 = vmatmul.mubr.bf16.gmra.mxu0 %v1194
        %v3962 = vpop.f32.mrf.mxu0
        %v3963 = vadd.f32 %v3770, %v3962
        %v3964 = vpop.f32.mrf.mxu0
        %v3965 = vadd.f32 %v3772, %v3964
        %v3966 = vpop.f32.mrf.mxu0
        %v3967 = vadd.f32 %v3774, %v3966
        %v3968 = vpop.f32.mrf.mxu0
        %v3969 = vadd.f32 %v3776, %v3968
        %3970 = vdwg.mxu0
        %v3971 = vmax.f32 %v3041, 0.0
        %v3972 = vmax.f32 %v3043, 0.0
        %v3973 = vmax.f32 %v3813, 0.0
        %v3974 = vmax.f32 %v3815, 0.0
        %v3975 = vmax.f32 %v3045, 0.0
        %v3976 = vmax.f32 %v3047, 0.0
        %v3977 = vmax.f32 %v3817, 0.0
        %v3978 = vmax.f32 %v3819, 0.0
        %v3979 = vmax.f32 %v3051, 0.0
        %v3980 = vmax.f32 %v3053, 0.0
        %v3981 = vmax.f32 %v3823, 0.0
        %v3982 = vmax.f32 %v3825, 0.0
        %v3983 = vmax.f32 %v3055, 0.0
        %v3984 = vmax.f32 %v3057, 0.0
        %v3985 = vmax.f32 %v3827, 0.0
        %v3986 = vmax.f32 %v3829, 0.0
        %v3987 = vmax.f32 %v3061, 0.0
        %v3988 = vmax.f32 %v3063, 0.0
        %v3989 = vmax.f32 %v3833, 0.0
        %v3990 = vmax.f32 %v3835, 0.0
        %v3991 = vmax.f32 %v3065, 0.0
        %v3992 = vmax.f32 %v3067, 0.0
        %v3993 = vmax.f32 %v3837, 0.0
        %v3994 = vmax.f32 %v3839, 0.0
        %v3995 = vmax.f32 %v3071, 0.0
        %v3996 = vmax.f32 %v3073, 0.0
        %v3997 = vmax.f32 %v3843, 0.0
        %v3998 = vmax.f32 %v3845, 0.0
        %v3999 = vmax.f32 %v3075, 0.0
        %v4000 = vmax.f32 %v3077, 0.0
        %v4001 = vmax.f32 %v3847, 0.0
        %v4002 = vmax.f32 %v3849, 0.0
        %v4003 = vmax.f32 %v3081, 0.0
        %v4004 = vmax.f32 %v3083, 0.0
        %v4005 = vmax.f32 %v3853, 0.0
        %v4006 = vmax.f32 %v3855, 0.0
        %v4007 = vmax.f32 %v3085, 0.0
        %v4008 = vmax.f32 %v3087, 0.0
        %v4009 = vmax.f32 %v3857, 0.0
        %v4010 = vmax.f32 %v3859, 0.0
        %v4011 = vmax.f32 %v3091, 0.0
        %v4012 = vmax.f32 %v3093, 0.0
        %v4013 = vmax.f32 %v3863, 0.0
        %v4014 = vmax.f32 %v3865, 0.0
        %v4015 = vmax.f32 %v3095, 0.0
        %v4016 = vmax.f32 %v3097, 0.0
        %v4017 = vmax.f32 %v3867, 0.0
        %v4018 = vmax.f32 %v3869, 0.0
        %v4019 = vmax.f32 %v3101, 0.0
        %v4020 = vmax.f32 %v3103, 0.0
        %v4021 = vmax.f32 %v3873, 0.0
        %v4022 = vmax.f32 %v3875, 0.0
        %v4023 = vmax.f32 %v3105, 0.0
        %v4024 = vmax.f32 %v3107, 0.0
        %v4025 = vmax.f32 %v3877, 0.0
        %v4026 = vmax.f32 %v3879, 0.0
        %v4027 = vmax.f32 %v3111, 0.0
        %v4028 = vmax.f32 %v3113, 0.0
        %v4029 = vmax.f32 %v3883, 0.0
        %v4030 = vmax.f32 %v3885, 0.0
        %v4031 = vmax.f32 %v3115, 0.0
        %v4032 = vmax.f32 %v3117, 0.0
        %v4033 = vmax.f32 %v3887, 0.0
        %v4034 = vmax.f32 %v3889, 0.0
        %v4035 = vmax.f32 %v3121, 0.0
        %v4036 = vmax.f32 %v3123, 0.0
        %v4037 = vmax.f32 %v3893, 0.0
        %v4038 = vmax.f32 %v3895, 0.0
        %v4039 = vmax.f32 %v3125, 0.0
        %v4040 = vmax.f32 %v3127, 0.0
        %v4041 = vmax.f32 %v3897, 0.0
        %v4042 = vmax.f32 %v3899, 0.0
        %v4043 = vmax.f32 %v3131, 0.0
        %v4044 = vmax.f32 %v3133, 0.0
        %v4045 = vmax.f32 %v3903, 0.0
        %v4046 = vmax.f32 %v3905, 0.0
        %v4047 = vmax.f32 %v3135, 0.0
        %v4048 = vmax.f32 %v3137, 0.0
        %v4049 = vmax.f32 %v3907, 0.0
        %v4050 = vmax.f32 %v3909, 0.0
        %v4051 = vmax.f32 %v3141, 0.0
        %v4052 = vmax.f32 %v3143, 0.0
        %v4053 = vmax.f32 %v3913, 0.0
        %v4054 = vmax.f32 %v3915, 0.0
        %v4055 = vmax.f32 %v3145, 0.0
        %v4056 = vmax.f32 %v3147, 0.0
        %v4057 = vmax.f32 %v3917, 0.0
        %v4058 = vmax.f32 %v3919, 0.0
        %v4059 = vmax.f32 %v3151, 0.0
        %v4060 = vmax.f32 %v3153, 0.0
        %v4061 = vmax.f32 %v3923, 0.0
        %v4062 = vmax.f32 %v3925, 0.0
        %v4063 = vmax.f32 %v3155, 0.0
        %v4064 = vmax.f32 %v3157, 0.0
        %v4065 = vmax.f32 %v3927, 0.0
        %v4066 = vmax.f32 %v3929, 0.0
        %v4067 = vmax.f32 %v3161, 0.0
        %v4068 = vmax.f32 %v3163, 0.0
        %v4069 = vmax.f32 %v3933, 0.0
        %v4070 = vmax.f32 %v3935, 0.0
        %v4071 = vmax.f32 %v3165, 0.0
        %v4072 = vmax.f32 %v3167, 0.0
        %v4073 = vmax.f32 %v3937, 0.0
        %v4074 = vmax.f32 %v3939, 0.0
        %v4075 = vmax.f32 %v3171, 0.0
        %v4076 = vmax.f32 %v3173, 0.0
        %v4077 = vmax.f32 %v3943, 0.0
        %v4078 = vmax.f32 %v3945, 0.0
        %v4079 = vmax.f32 %v3175, 0.0
        %v4080 = vmax.f32 %v3177, 0.0
        %v4081 = vmax.f32 %v3947, 0.0
        %v4082 = vmax.f32 %v3949, 0.0
        %v4083 = vmax.f32 %v3181, 0.0
        %v4084 = vmax.f32 %v3183, 0.0
        %v4085 = vmax.f32 %v3953, 0.0
        %v4086 = vmax.f32 %v3955, 0.0
        %v4087 = vmax.f32 %v3185, 0.0
        %v4088 = vmax.f32 %v3187, 0.0
        %v4089 = vmax.f32 %v3957, 0.0
        %v4090 = vmax.f32 %v3959, 0.0
        %v4091 = vmax.f32 %v3191, 0.0
        %v4092 = vmax.f32 %v3193, 0.0
        %v4093 = vmax.f32 %v3963, 0.0
        %v4094 = vmax.f32 %v3965, 0.0
        %v4095 = vmax.f32 %v3195, 0.0
        %v4096 = vmax.f32 %v3197, 0.0
        %v4097 = vmax.f32 %v3967, 0.0
        %v4098 = vmax.f32 %v3969, 0.0
        %v4099 = vpack.c.bf16 %v3975, %v3971
        %v4100 = vpack.c.bf16 %v3976, %v3972
        %v4101 = vpack.c.bf16 %v3977, %v3973
        %v4102 = vpack.c.bf16 %v3978, %v3974
        %v4103 = vpack.c.bf16 %v3983, %v3979
        %v4104 = vpack.c.bf16 %v3984, %v3980
        %v4105 = vpack.c.bf16 %v3985, %v3981
        %v4106 = vpack.c.bf16 %v3986, %v3982
        %v4107 = vpack.c.bf16 %v3991, %v3987
        %v4108 = vpack.c.bf16 %v3992, %v3988
        %v4109 = vpack.c.bf16 %v3993, %v3989
        %v4110 = vpack.c.bf16 %v3994, %v3990
        %v4111 = vpack.c.bf16 %v3999, %v3995
        %v4112 = vpack.c.bf16 %v4000, %v3996
        %v4113 = vpack.c.bf16 %v4001, %v3997
        %v4114 = vpack.c.bf16 %v4002, %v3998
        %v4115 = vpack.c.bf16 %v4007, %v4003
        %v4116 = vpack.c.bf16 %v4008, %v4004
        %v4117 = vpack.c.bf16 %v4009, %v4005
        %v4118 = vpack.c.bf16 %v4010, %v4006
        %v4119 = vpack.c.bf16 %v4015, %v4011
        %v4120 = vpack.c.bf16 %v4016, %v4012
        %v4121 = vpack.c.bf16 %v4017, %v4013
        %v4122 = vpack.c.bf16 %v4018, %v4014
        %v4123 = vpack.c.bf16 %v4023, %v4019
        %v4124 = vpack.c.bf16 %v4024, %v4020
        %v4125 = vpack.c.bf16 %v4025, %v4021
        %v4126 = vpack.c.bf16 %v4026, %v4022
        %v4127 = vpack.c.bf16 %v4031, %v4027
        %v4128 = vpack.c.bf16 %v4032, %v4028
        %v4129 = vpack.c.bf16 %v4033, %v4029
        %v4130 = vpack.c.bf16 %v4034, %v4030
        %v4131 = vpack.c.bf16 %v4039, %v4035
        %v4132 = vpack.c.bf16 %v4040, %v4036
        %v4133 = vpack.c.bf16 %v4041, %v4037
        %v4134 = vpack.c.bf16 %v4042, %v4038
        %v4135 = vpack.c.bf16 %v4047, %v4043
        %v4136 = vpack.c.bf16 %v4048, %v4044
        %v4137 = vpack.c.bf16 %v4049, %v4045
        %v4138 = vpack.c.bf16 %v4050, %v4046
        %v4139 = vpack.c.bf16 %v4055, %v4051
        %v4140 = vpack.c.bf16 %v4056, %v4052
        %v4141 = vpack.c.bf16 %v4057, %v4053
        %v4142 = vpack.c.bf16 %v4058, %v4054
        %v4143 = vpack.c.bf16 %v4063, %v4059
        %v4144 = vpack.c.bf16 %v4064, %v4060
        %v4145 = vpack.c.bf16 %v4065, %v4061
        %v4146 = vpack.c.bf16 %v4066, %v4062
        %v4147 = vpack.c.bf16 %v4071, %v4067
        %v4148 = vpack.c.bf16 %v4072, %v4068
        %v4149 = vpack.c.bf16 %v4073, %v4069
        %v4150 = vpack.c.bf16 %v4074, %v4070
        %v4151 = vpack.c.bf16 %v4079, %v4075
        %v4152 = vpack.c.bf16 %v4080, %v4076
        %v4153 = vpack.c.bf16 %v4081, %v4077
        %v4154 = vpack.c.bf16 %v4082, %v4078
        %v4155 = vpack.c.bf16 %v4087, %v4083
        %v4156 = vpack.c.bf16 %v4088, %v4084
        %v4157 = vpack.c.bf16 %v4089, %v4085
        %v4158 = vpack.c.bf16 %v4090, %v4086
        %v4159 = vpack.c.bf16 %v4095, %v4091
        %v4160 = vpack.c.bf16 %v4096, %v4092
        %v4161 = vpack.c.bf16 %v4097, %v4093
        %v4162 = vpack.c.bf16 %v4098, %v4094
        %v4163 = vld [vmem:[#allocation8] sm:$0xff]
        %v4164 = vld [vmem:[#allocation8 + $0x8] sm:$0xff]
        %v4165 = vld [vmem:[#allocation8 + $0x10] sm:$0xff]
        %v4166 = vld [vmem:[#allocation8 + $0x18] sm:$0xff]
        %v4167 = vld [vmem:[#allocation8 + $0x20] sm:$0xff]
        %v4168 = vld [vmem:[#allocation8 + $0x28] sm:$0xff]
        %v4169 = vld [vmem:[#allocation8 + $0x30] sm:$0xff]
        %v4170 = vld [vmem:[#allocation8 + $0x38] sm:$0xff]
        %v4171 = vld [vmem:[#allocation8 + $0x40] sm:$0xff]
        %v4172 = vld [vmem:[#allocation8 + $0x48] sm:$0xff]
        %v4173 = vld [vmem:[#allocation8 + $0x50] sm:$0xff]
        %v4174 = vld [vmem:[#allocation8 + $0x58] sm:$0xff]
        %v4175 = vld [vmem:[#allocation8 + $0x60] sm:$0xff]
        %v4176 = vld [vmem:[#allocation8 + $0x68] sm:$0xff]
        %v4177 = vld [vmem:[#allocation8 + $0x70] sm:$0xff]
        %v4178 = vld [vmem:[#allocation8 + $0x78] sm:$0xff]
        %v4179 = vld [vmem:[#allocation8 + $0x80] sm:$0xff]
        %v4180 = vld [vmem:[#allocation8 + $0x88] sm:$0xff]
        %v4181 = vld [vmem:[#allocation8 + $0x90] sm:$0xff]
        %v4182 = vld [vmem:[#allocation8 + $0x98] sm:$0xff]
        %v4183 = vld [vmem:[#allocation8 + $0xa0] sm:$0xff]
        %v4184 = vld [vmem:[#allocation8 + $0xa8] sm:$0xff]
        %v4185 = vld [vmem:[#allocation8 + $0xb0] sm:$0xff]
        %v4186 = vld [vmem:[#allocation8 + $0xb8] sm:$0xff]
        %v4187 = vld [vmem:[#allocation8 + $0xc0] sm:$0xff]
        %v4188 = vld [vmem:[#allocation8 + $0xc8] sm:$0xff]
        %v4189 = vld [vmem:[#allocation8 + $0xd0] sm:$0xff]
        %v4190 = vld [vmem:[#allocation8 + $0xd8] sm:$0xff]
        %v4191 = vld [vmem:[#allocation8 + $0xe0] sm:$0xff]
        %v4192 = vld [vmem:[#allocation8 + $0xe8] sm:$0xff]
        %v4193 = vld [vmem:[#allocation8 + $0xf0] sm:$0xff]
        %v4194 = vld [vmem:[#allocation8 + $0xf8] sm:$0xff]
        %v4195 = vld [vmem:[#allocation8 + $0x100] sm:$0xff]
        %v4196 = vld [vmem:[#allocation8 + $0x108] sm:$0xff]
        %v4197 = vld [vmem:[#allocation8 + $0x110] sm:$0xff]
        %v4198 = vld [vmem:[#allocation8 + $0x118] sm:$0xff]
        %v4199 = vld [vmem:[#allocation8 + $0x120] sm:$0xff]
        %v4200 = vld [vmem:[#allocation8 + $0x128] sm:$0xff]
        %v4201 = vld [vmem:[#allocation8 + $0x130] sm:$0xff]
        %v4202 = vld [vmem:[#allocation8 + $0x138] sm:$0xff]
        %v4203 = vld [vmem:[#allocation8 + $0x140] sm:$0xff]
        %v4204 = vld [vmem:[#allocation8 + $0x148] sm:$0xff]
        %v4205 = vld [vmem:[#allocation8 + $0x150] sm:$0xff]
        %v4206 = vld [vmem:[#allocation8 + $0x158] sm:$0xff]
        %v4207 = vld [vmem:[#allocation8 + $0x160] sm:$0xff]
        %v4208 = vld [vmem:[#allocation8 + $0x168] sm:$0xff]
        %v4209 = vld [vmem:[#allocation8 + $0x170] sm:$0xff]
        %v4210 = vld [vmem:[#allocation8 + $0x178] sm:$0xff]
        %v4211 = vld [vmem:[#allocation8 + $0x180] sm:$0xff]
        %v4212 = vld [vmem:[#allocation8 + $0x188] sm:$0xff]
        %v4213 = vld [vmem:[#allocation8 + $0x190] sm:$0xff]
        %v4214 = vld [vmem:[#allocation8 + $0x198] sm:$0xff]
        %v4215 = vld [vmem:[#allocation8 + $0x1a0] sm:$0xff]
        %v4216 = vld [vmem:[#allocation8 + $0x1a8] sm:$0xff]
        %v4217 = vld [vmem:[#allocation8 + $0x1b0] sm:$0xff]
        %v4218 = vld [vmem:[#allocation8 + $0x1b8] sm:$0xff]
        %v4219 = vld [vmem:[#allocation8 + $0x1c0] sm:$0xff]
        %v4220 = vld [vmem:[#allocation8 + $0x1c8] sm:$0xff]
        %v4221 = vld [vmem:[#allocation8 + $0x1d0] sm:$0xff]
        %v4222 = vld [vmem:[#allocation8 + $0x1d8] sm:$0xff]
        %v4223 = vld [vmem:[#allocation8 + $0x1e0] sm:$0xff]
        %v4224 = vld [vmem:[#allocation8 + $0x1e8] sm:$0xff]
        %v4225 = vld [vmem:[#allocation8 + $0x1f0] sm:$0xff]
        %v4226 = vld [vmem:[#allocation8 + $0x1f8] sm:$0xff]
        %v4227 = vld [vmem:[#allocation8 + $0x200] sm:$0xff]
        %v4228 = vld [vmem:[#allocation8 + $0x208] sm:$0xff]
        %v4229 = vld [vmem:[#allocation8 + $0x210] sm:$0xff]
        %v4230 = vld [vmem:[#allocation8 + $0x218] sm:$0xff]
        %v4231 = vld [vmem:[#allocation8 + $0x220] sm:$0xff]
        %v4232 = vld [vmem:[#allocation8 + $0x228] sm:$0xff]
        %v4233 = vld [vmem:[#allocation8 + $0x230] sm:$0xff]
        %v4234 = vld [vmem:[#allocation8 + $0x238] sm:$0xff]
        %v4235 = vld [vmem:[#allocation8 + $0x240] sm:$0xff]
        %v4236 = vld [vmem:[#allocation8 + $0x248] sm:$0xff]
        %v4237 = vld [vmem:[#allocation8 + $0x250] sm:$0xff]
        %v4238 = vld [vmem:[#allocation8 + $0x258] sm:$0xff]
        %v4239 = vld [vmem:[#allocation8 + $0x260] sm:$0xff]
        %v4240 = vld [vmem:[#allocation8 + $0x268] sm:$0xff]
        %v4241 = vld [vmem:[#allocation8 + $0x270] sm:$0xff]
        %v4242 = vld [vmem:[#allocation8 + $0x278] sm:$0xff]
        %v4243 = vld [vmem:[#allocation8 + $0x280] sm:$0xff]
        %v4244 = vld [vmem:[#allocation8 + $0x288] sm:$0xff]
        %v4245 = vld [vmem:[#allocation8 + $0x290] sm:$0xff]
        %v4246 = vld [vmem:[#allocation8 + $0x298] sm:$0xff]
        %v4247 = vld [vmem:[#allocation8 + $0x2a0] sm:$0xff]
        %v4248 = vld [vmem:[#allocation8 + $0x2a8] sm:$0xff]
        %v4249 = vld [vmem:[#allocation8 + $0x2b0] sm:$0xff]
        %v4250 = vld [vmem:[#allocation8 + $0x2b8] sm:$0xff]
        %v4251 = vld [vmem:[#allocation8 + $0x2c0] sm:$0xff]
        %v4252 = vld [vmem:[#allocation8 + $0x2c8] sm:$0xff]
        %v4253 = vld [vmem:[#allocation8 + $0x2d0] sm:$0xff]
        %v4254 = vld [vmem:[#allocation8 + $0x2d8] sm:$0xff]
        %v4255 = vld [vmem:[#allocation8 + $0x2e0] sm:$0xff]
        %v4256 = vld [vmem:[#allocation8 + $0x2e8] sm:$0xff]
        %v4257 = vld [vmem:[#allocation8 + $0x2f0] sm:$0xff]
        %v4258 = vld [vmem:[#allocation8 + $0x2f8] sm:$0xff]
        %v4259 = vld [vmem:[#allocation8 + $0x300] sm:$0xff]
        %v4260 = vld [vmem:[#allocation8 + $0x308] sm:$0xff]
        %v4261 = vld [vmem:[#allocation8 + $0x310] sm:$0xff]
        %v4262 = vld [vmem:[#allocation8 + $0x318] sm:$0xff]
        %v4263 = vld [vmem:[#allocation8 + $0x320] sm:$0xff]
        %v4264 = vld [vmem:[#allocation8 + $0x328] sm:$0xff]
        %v4265 = vld [vmem:[#allocation8 + $0x330] sm:$0xff]
        %v4266 = vld [vmem:[#allocation8 + $0x338] sm:$0xff]
        %v4267 = vld [vmem:[#allocation8 + $0x340] sm:$0xff]
        %v4268 = vld [vmem:[#allocation8 + $0x348] sm:$0xff]
        %v4269 = vld [vmem:[#allocation8 + $0x350] sm:$0xff]
        %v4270 = vld [vmem:[#allocation8 + $0x358] sm:$0xff]
        %v4271 = vld [vmem:[#allocation8 + $0x360] sm:$0xff]
        %v4272 = vld [vmem:[#allocation8 + $0x368] sm:$0xff]
        %v4273 = vld [vmem:[#allocation8 + $0x370] sm:$0xff]
        %v4274 = vld [vmem:[#allocation8 + $0x378] sm:$0xff]
        %v4275 = vld [vmem:[#allocation8 + $0x380] sm:$0xff]
        %v4276 = vld [vmem:[#allocation8 + $0x388] sm:$0xff]
        %v4277 = vld [vmem:[#allocation8 + $0x390] sm:$0xff]
        %v4278 = vld [vmem:[#allocation8 + $0x398] sm:$0xff]
        %v4279 = vld [vmem:[#allocation8 + $0x3a0] sm:$0xff]
        %v4280 = vld [vmem:[#allocation8 + $0x3a8] sm:$0xff]
        %v4281 = vld [vmem:[#allocation8 + $0x3b0] sm:$0xff]
        %v4282 = vld [vmem:[#allocation8 + $0x3b8] sm:$0xff]
        %v4283 = vld [vmem:[#allocation8 + $0x3c0] sm:$0xff]
        %v4284 = vld [vmem:[#allocation8 + $0x3c8] sm:$0xff]
        %v4285 = vld [vmem:[#allocation8 + $0x3d0] sm:$0xff]
        %v4286 = vld [vmem:[#allocation8 + $0x3d8] sm:$0xff]
        %v4287 = vld [vmem:[#allocation8 + $0x3e0] sm:$0xff]
        %v4288 = vld [vmem:[#allocation8 + $0x3e8] sm:$0xff]
        %v4289 = vld [vmem:[#allocation8 + $0x3f0] sm:$0xff]
        %v4290 = vld [vmem:[#allocation8 + $0x3f8] sm:$0xff]
        %v4291 = vld [vmem:[%s4] sm:$0xf]
        %v4293 = vlaneseq
        %v4294 = vshrl.u32 %v4293, 7
        %v4295 = vsub.s32 0, %v4294
        %v4296 = vrot.slane %v4291, %v4295
        %v4297 = vlaneseq
        %v4298 = vshrl.u32 %v4297, 7
        %v4299 = vsub.s32 1, %v4298
        %v4300 = vrot.slane %v4291, %v4299
        %v4301 = vlaneseq
        %v4302 = vshrl.u32 %v4301, 7
        %v4303 = vsub.s32 2, %v4302
        %v4304 = vrot.slane %v4291, %v4303
        %v4305 = vlaneseq
        %v4306 = vshrl.u32 %v4305, 7
        %v4307 = vsub.s32 3, %v4306
        %v4308 = vrot.slane %v4291, %v4307
        %v4441 = vunpack.c.l.b16 %v4163
        %v4442 = vunpack.c.h.b16 %v4163
        %v4443 = vunpack.c.l.b16 %v4164
        %v4444 = vunpack.c.h.b16 %v4164
        %v4445 = vunpack.c.l.b16 %v4165
        %v4446 = vunpack.c.h.b16 %v4165
        %v4447 = vunpack.c.l.b16 %v4166
        %v4448 = vunpack.c.h.b16 %v4166
        %v4449 = vunpack.c.l.b16 %v4167
        %v4450 = vunpack.c.h.b16 %v4167
        %v4451 = vunpack.c.l.b16 %v4168
        %v4452 = vunpack.c.h.b16 %v4168
        %v4453 = vunpack.c.l.b16 %v4169
        %v4454 = vunpack.c.h.b16 %v4169
        %v4455 = vunpack.c.l.b16 %v4170
        %v4456 = vunpack.c.h.b16 %v4170
        %v4457 = vunpack.c.l.b16 %v4171
        %v4458 = vunpack.c.h.b16 %v4171
        %v4459 = vunpack.c.l.b16 %v4172
        %v4460 = vunpack.c.h.b16 %v4172
        %v4461 = vunpack.c.l.b16 %v4173
        %v4462 = vunpack.c.h.b16 %v4173
        %v4463 = vunpack.c.l.b16 %v4174
        %v4464 = vunpack.c.h.b16 %v4174
        %v4465 = vunpack.c.l.b16 %v4175
        %v4466 = vunpack.c.h.b16 %v4175
        %v4467 = vunpack.c.l.b16 %v4176
        %v4468 = vunpack.c.h.b16 %v4176
        %v4469 = vunpack.c.l.b16 %v4177
        %v4470 = vunpack.c.h.b16 %v4177
        %v4471 = vunpack.c.l.b16 %v4178
        %v4472 = vunpack.c.h.b16 %v4178
        %v4473 = vunpack.c.l.b16 %v4179
        %v4474 = vunpack.c.h.b16 %v4179
        %v4475 = vunpack.c.l.b16 %v4180
        %v4476 = vunpack.c.h.b16 %v4180
        %v4477 = vunpack.c.l.b16 %v4181
        %v4478 = vunpack.c.h.b16 %v4181
        %v4479 = vunpack.c.l.b16 %v4182
        %v4480 = vunpack.c.h.b16 %v4182
        %v4481 = vunpack.c.l.b16 %v4183
        %v4482 = vunpack.c.h.b16 %v4183
        %v4483 = vunpack.c.l.b16 %v4184
        %v4484 = vunpack.c.h.b16 %v4184
        %v4485 = vunpack.c.l.b16 %v4185
        %v4486 = vunpack.c.h.b16 %v4185
        %v4487 = vunpack.c.l.b16 %v4186
        %v4488 = vunpack.c.h.b16 %v4186
        %v4489 = vunpack.c.l.b16 %v4187
        %v4490 = vunpack.c.h.b16 %v4187
        %v4491 = vunpack.c.l.b16 %v4188
        %v4492 = vunpack.c.h.b16 %v4188
        %v4493 = vunpack.c.l.b16 %v4189
        %v4494 = vunpack.c.h.b16 %v4189
        %v4495 = vunpack.c.l.b16 %v4190
        %v4496 = vunpack.c.h.b16 %v4190
        %v4497 = vunpack.c.l.b16 %v4191
        %v4498 = vunpack.c.h.b16 %v4191
        %v4499 = vunpack.c.l.b16 %v4192
        %v4500 = vunpack.c.h.b16 %v4192
        %v4501 = vunpack.c.l.b16 %v4193
        %v4502 = vunpack.c.h.b16 %v4193
        %v4503 = vunpack.c.l.b16 %v4194
        %v4504 = vunpack.c.h.b16 %v4194
        %v4505 = vunpack.c.l.b16 %v4195
        %v4506 = vunpack.c.h.b16 %v4195
        %v4507 = vunpack.c.l.b16 %v4196
        %v4508 = vunpack.c.h.b16 %v4196
        %v4509 = vunpack.c.l.b16 %v4197
        %v4510 = vunpack.c.h.b16 %v4197
        %v4511 = vunpack.c.l.b16 %v4198
        %v4512 = vunpack.c.h.b16 %v4198
        %v4513 = vunpack.c.l.b16 %v4199
        %v4514 = vunpack.c.h.b16 %v4199
        %v4515 = vunpack.c.l.b16 %v4200
        %v4516 = vunpack.c.h.b16 %v4200
        %v4517 = vunpack.c.l.b16 %v4201
        %v4518 = vunpack.c.h.b16 %v4201
        %v4519 = vunpack.c.l.b16 %v4202
        %v4520 = vunpack.c.h.b16 %v4202
        %v4521 = vunpack.c.l.b16 %v4203
        %v4522 = vunpack.c.h.b16 %v4203
        %v4523 = vunpack.c.l.b16 %v4204
        %v4524 = vunpack.c.h.b16 %v4204
        %v4525 = vunpack.c.l.b16 %v4205
        %v4526 = vunpack.c.h.b16 %v4205
        %v4527 = vunpack.c.l.b16 %v4206
        %v4528 = vunpack.c.h.b16 %v4206
        %v4529 = vunpack.c.l.b16 %v4207
        %v4530 = vunpack.c.h.b16 %v4207
        %v4531 = vunpack.c.l.b16 %v4208
        %v4532 = vunpack.c.h.b16 %v4208
        %v4533 = vunpack.c.l.b16 %v4209
        %v4534 = vunpack.c.h.b16 %v4209
        %v4535 = vunpack.c.l.b16 %v4210
        %v4536 = vunpack.c.h.b16 %v4210
        %v4537 = vunpack.c.l.b16 %v4211
        %v4538 = vunpack.c.h.b16 %v4211
        %v4539 = vunpack.c.l.b16 %v4212
        %v4540 = vunpack.c.h.b16 %v4212
        %v4541 = vunpack.c.l.b16 %v4213
        %v4542 = vunpack.c.h.b16 %v4213
        %v4543 = vunpack.c.l.b16 %v4214
        %v4544 = vunpack.c.h.b16 %v4214
        %v4545 = vunpack.c.l.b16 %v4215
        %v4546 = vunpack.c.h.b16 %v4215
        %v4547 = vunpack.c.l.b16 %v4216
        %v4548 = vunpack.c.h.b16 %v4216
        %v4549 = vunpack.c.l.b16 %v4217
        %v4550 = vunpack.c.h.b16 %v4217
        %v4551 = vunpack.c.l.b16 %v4218
        %v4552 = vunpack.c.h.b16 %v4218
        %v4553 = vunpack.c.l.b16 %v4219
        %v4554 = vunpack.c.h.b16 %v4219
        %v4555 = vunpack.c.l.b16 %v4220
        %v4556 = vunpack.c.h.b16 %v4220
        %v4557 = vunpack.c.l.b16 %v4221
        %v4558 = vunpack.c.h.b16 %v4221
        %v4559 = vunpack.c.l.b16 %v4222
        %v4560 = vunpack.c.h.b16 %v4222
        %v4561 = vunpack.c.l.b16 %v4223
        %v4562 = vunpack.c.h.b16 %v4223
        %v4563 = vunpack.c.l.b16 %v4224
        %v4564 = vunpack.c.h.b16 %v4224
        %v4565 = vunpack.c.l.b16 %v4225
        %v4566 = vunpack.c.h.b16 %v4225
        %v4567 = vunpack.c.l.b16 %v4226
        %v4568 = vunpack.c.h.b16 %v4226
        %v4569 = vunpack.c.l.b16 %v4227
        %v4570 = vunpack.c.h.b16 %v4227
        %v4571 = vunpack.c.l.b16 %v4228
        %v4572 = vunpack.c.h.b16 %v4228
        %v4573 = vunpack.c.l.b16 %v4229
        %v4574 = vunpack.c.h.b16 %v4229
        %v4575 = vunpack.c.l.b16 %v4230
        %v4576 = vunpack.c.h.b16 %v4230
        %v4577 = vunpack.c.l.b16 %v4231
        %v4578 = vunpack.c.h.b16 %v4231
        %v4579 = vunpack.c.l.b16 %v4232
        %v4580 = vunpack.c.h.b16 %v4232
        %v4581 = vunpack.c.l.b16 %v4233
        %v4582 = vunpack.c.h.b16 %v4233
        %v4583 = vunpack.c.l.b16 %v4234
        %v4584 = vunpack.c.h.b16 %v4234
        %v4585 = vunpack.c.l.b16 %v4235
        %v4586 = vunpack.c.h.b16 %v4235
        %v4587 = vunpack.c.l.b16 %v4236
        %v4588 = vunpack.c.h.b16 %v4236
        %v4589 = vunpack.c.l.b16 %v4237
        %v4590 = vunpack.c.h.b16 %v4237
        %v4591 = vunpack.c.l.b16 %v4238
        %v4592 = vunpack.c.h.b16 %v4238
        %v4593 = vunpack.c.l.b16 %v4239
        %v4594 = vunpack.c.h.b16 %v4239
        %v4595 = vunpack.c.l.b16 %v4240
        %v4596 = vunpack.c.h.b16 %v4240
        %v4597 = vunpack.c.l.b16 %v4241
        %v4598 = vunpack.c.h.b16 %v4241
        %v4599 = vunpack.c.l.b16 %v4242
        %v4600 = vunpack.c.h.b16 %v4242
        %v4601 = vunpack.c.l.b16 %v4243
        %v4602 = vunpack.c.h.b16 %v4243
        %v4603 = vunpack.c.l.b16 %v4244
        %v4604 = vunpack.c.h.b16 %v4244
        %v4605 = vunpack.c.l.b16 %v4245
        %v4606 = vunpack.c.h.b16 %v4245
        %v4607 = vunpack.c.l.b16 %v4246
        %v4608 = vunpack.c.h.b16 %v4246
        %v4609 = vunpack.c.l.b16 %v4247
        %v4610 = vunpack.c.h.b16 %v4247
        %v4611 = vunpack.c.l.b16 %v4248
        %v4612 = vunpack.c.h.b16 %v4248
        %v4613 = vunpack.c.l.b16 %v4249
        %v4614 = vunpack.c.h.b16 %v4249
        %v4615 = vunpack.c.l.b16 %v4250
        %v4616 = vunpack.c.h.b16 %v4250
        %v4617 = vunpack.c.l.b16 %v4251
        %v4618 = vunpack.c.h.b16 %v4251
        %v4619 = vunpack.c.l.b16 %v4252
        %v4620 = vunpack.c.h.b16 %v4252
        %v4621 = vunpack.c.l.b16 %v4253
        %v4622 = vunpack.c.h.b16 %v4253
        %v4623 = vunpack.c.l.b16 %v4254
        %v4624 = vunpack.c.h.b16 %v4254
        %v4625 = vunpack.c.l.b16 %v4255
        %v4626 = vunpack.c.h.b16 %v4255
        %v4627 = vunpack.c.l.b16 %v4256
        %v4628 = vunpack.c.h.b16 %v4256
        %v4629 = vunpack.c.l.b16 %v4257
        %v4630 = vunpack.c.h.b16 %v4257
        %v4631 = vunpack.c.l.b16 %v4258
        %v4632 = vunpack.c.h.b16 %v4258
        %v4633 = vunpack.c.l.b16 %v4259
        %v4634 = vunpack.c.h.b16 %v4259
        %v4635 = vunpack.c.l.b16 %v4260
        %v4636 = vunpack.c.h.b16 %v4260
        %v4637 = vunpack.c.l.b16 %v4261
        %v4638 = vunpack.c.h.b16 %v4261
        %v4639 = vunpack.c.l.b16 %v4262
        %v4640 = vunpack.c.h.b16 %v4262
        %v4641 = vunpack.c.l.b16 %v4263
        %v4642 = vunpack.c.h.b16 %v4263
        %v4643 = vunpack.c.l.b16 %v4264
        %v4644 = vunpack.c.h.b16 %v4264
        %v4645 = vunpack.c.l.b16 %v4265
        %v4646 = vunpack.c.h.b16 %v4265
        %v4647 = vunpack.c.l.b16 %v4266
        %v4648 = vunpack.c.h.b16 %v4266
        %v4649 = vunpack.c.l.b16 %v4267
        %v4650 = vunpack.c.h.b16 %v4267
        %v4651 = vunpack.c.l.b16 %v4268
        %v4652 = vunpack.c.h.b16 %v4268
        %v4653 = vunpack.c.l.b16 %v4269
        %v4654 = vunpack.c.h.b16 %v4269
        %v4655 = vunpack.c.l.b16 %v4270
        %v4656 = vunpack.c.h.b16 %v4270
        %v4657 = vunpack.c.l.b16 %v4271
        %v4658 = vunpack.c.h.b16 %v4271
        %v4659 = vunpack.c.l.b16 %v4272
        %v4660 = vunpack.c.h.b16 %v4272
        %v4661 = vunpack.c.l.b16 %v4273
        %v4662 = vunpack.c.h.b16 %v4273
        %v4663 = vunpack.c.l.b16 %v4274
        %v4664 = vunpack.c.h.b16 %v4274
        %v4665 = vunpack.c.l.b16 %v4275
        %v4666 = vunpack.c.h.b16 %v4275
        %v4667 = vunpack.c.l.b16 %v4276
        %v4668 = vunpack.c.h.b16 %v4276
        %v4669 = vunpack.c.l.b16 %v4277
        %v4670 = vunpack.c.h.b16 %v4277
        %v4671 = vunpack.c.l.b16 %v4278
        %v4672 = vunpack.c.h.b16 %v4278
        %v4673 = vunpack.c.l.b16 %v4279
        %v4674 = vunpack.c.h.b16 %v4279
        %v4675 = vunpack.c.l.b16 %v4280
        %v4676 = vunpack.c.h.b16 %v4280
        %v4677 = vunpack.c.l.b16 %v4281
        %v4678 = vunpack.c.h.b16 %v4281
        %v4679 = vunpack.c.l.b16 %v4282
        %v4680 = vunpack.c.h.b16 %v4282
        %v4681 = vunpack.c.l.b16 %v4283
        %v4682 = vunpack.c.h.b16 %v4283
        %v4683 = vunpack.c.l.b16 %v4284
        %v4684 = vunpack.c.h.b16 %v4284
        %v4685 = vunpack.c.l.b16 %v4285
        %v4686 = vunpack.c.h.b16 %v4285
        %v4687 = vunpack.c.l.b16 %v4286
        %v4688 = vunpack.c.h.b16 %v4286
        %v4689 = vunpack.c.l.b16 %v4287
        %v4690 = vunpack.c.h.b16 %v4287
        %v4691 = vunpack.c.l.b16 %v4288
        %v4692 = vunpack.c.h.b16 %v4288
        %v4693 = vunpack.c.l.b16 %v4289
        %v4694 = vunpack.c.h.b16 %v4289
        %v4695 = vunpack.c.l.b16 %v4290
        %v4696 = vunpack.c.h.b16 %v4290
        %v4697 = vpack.c.b16 %v4445, %v4441
        %v4698 = vpack.c.b16 %v4446, %v4442
        %v4699 = vpack.c.b16 %v4447, %v4443
        %v4700 = vpack.c.b16 %v4448, %v4444
        %v4701 = vpack.c.b16 %v4453, %v4449
        %v4702 = vpack.c.b16 %v4454, %v4450
        %v4703 = vpack.c.b16 %v4455, %v4451
        %v4704 = vpack.c.b16 %v4456, %v4452
        %v4705 = vpack.c.b16 %v4461, %v4457
        %v4706 = vpack.c.b16 %v4462, %v4458
        %v4707 = vpack.c.b16 %v4463, %v4459
        %v4708 = vpack.c.b16 %v4464, %v4460
        %v4709 = vpack.c.b16 %v4469, %v4465
        %v4710 = vpack.c.b16 %v4470, %v4466
        %v4711 = vpack.c.b16 %v4471, %v4467
        %v4712 = vpack.c.b16 %v4472, %v4468
        %v4713 = vpack.c.b16 %v4477, %v4473
        %v4714 = vpack.c.b16 %v4478, %v4474
        %v4715 = vpack.c.b16 %v4479, %v4475
        %v4716 = vpack.c.b16 %v4480, %v4476
        %v4717 = vpack.c.b16 %v4485, %v4481
        %v4718 = vpack.c.b16 %v4486, %v4482
        %v4719 = vpack.c.b16 %v4487, %v4483
        %v4720 = vpack.c.b16 %v4488, %v4484
        %v4721 = vpack.c.b16 %v4493, %v4489
        %v4722 = vpack.c.b16 %v4494, %v4490
        %v4723 = vpack.c.b16 %v4495, %v4491
        %v4724 = vpack.c.b16 %v4496, %v4492
        %v4725 = vpack.c.b16 %v4501, %v4497
        %v4726 = vpack.c.b16 %v4502, %v4498
        %v4727 = vpack.c.b16 %v4503, %v4499
        %v4728 = vpack.c.b16 %v4504, %v4500
        %v4729 = vpack.c.b16 %v4509, %v4505
        %v4730 = vpack.c.b16 %v4510, %v4506
        %v4731 = vpack.c.b16 %v4511, %v4507
        %v4732 = vpack.c.b16 %v4512, %v4508
        %v4733 = vpack.c.b16 %v4517, %v4513
        %v4734 = vpack.c.b16 %v4518, %v4514
        %v4735 = vpack.c.b16 %v4519, %v4515
        %v4736 = vpack.c.b16 %v4520, %v4516
        %v4737 = vpack.c.b16 %v4525, %v4521
        %v4738 = vpack.c.b16 %v4526, %v4522
        %v4739 = vpack.c.b16 %v4527, %v4523
        %v4740 = vpack.c.b16 %v4528, %v4524
        %v4741 = vpack.c.b16 %v4533, %v4529
        %v4742 = vpack.c.b16 %v4534, %v4530
        %v4743 = vpack.c.b16 %v4535, %v4531
        %v4744 = vpack.c.b16 %v4536, %v4532
        %v4745 = vpack.c.b16 %v4541, %v4537
        %v4746 = vpack.c.b16 %v4542, %v4538
        %v4747 = vpack.c.b16 %v4543, %v4539
        %v4748 = vpack.c.b16 %v4544, %v4540
        %v4749 = vpack.c.b16 %v4549, %v4545
        %v4750 = vpack.c.b16 %v4550, %v4546
        %v4751 = vpack.c.b16 %v4551, %v4547
        %v4752 = vpack.c.b16 %v4552, %v4548
        %v4753 = vpack.c.b16 %v4557, %v4553
        %v4754 = vpack.c.b16 %v4558, %v4554
        %v4755 = vpack.c.b16 %v4559, %v4555
        %v4756 = vpack.c.b16 %v4560, %v4556
        %v4757 = vpack.c.b16 %v4565, %v4561
        %v4758 = vpack.c.b16 %v4566, %v4562
        %v4759 = vpack.c.b16 %v4567, %v4563
        %v4760 = vpack.c.b16 %v4568, %v4564
        %v4761 = vpack.c.b16 %v4573, %v4569
        %v4762 = vpack.c.b16 %v4574, %v4570
        %v4763 = vpack.c.b16 %v4575, %v4571
        %v4764 = vpack.c.b16 %v4576, %v4572
        %v4765 = vpack.c.b16 %v4581, %v4577
        %v4766 = vpack.c.b16 %v4582, %v4578
        %v4767 = vpack.c.b16 %v4583, %v4579
        %v4768 = vpack.c.b16 %v4584, %v4580
        %v4769 = vpack.c.b16 %v4589, %v4585
        %v4770 = vpack.c.b16 %v4590, %v4586
        %v4771 = vpack.c.b16 %v4591, %v4587
        %v4772 = vpack.c.b16 %v4592, %v4588
        %v4773 = vpack.c.b16 %v4597, %v4593
        %v4774 = vpack.c.b16 %v4598, %v4594
        %v4775 = vpack.c.b16 %v4599, %v4595
        %v4776 = vpack.c.b16 %v4600, %v4596
        %v4777 = vpack.c.b16 %v4605, %v4601
        %v4778 = vpack.c.b16 %v4606, %v4602
        %v4779 = vpack.c.b16 %v4607, %v4603
        %v4780 = vpack.c.b16 %v4608, %v4604
        %v4781 = vpack.c.b16 %v4613, %v4609
        %v4782 = vpack.c.b16 %v4614, %v4610
        %v4783 = vpack.c.b16 %v4615, %v4611
        %v4784 = vpack.c.b16 %v4616, %v4612
        %v4785 = vpack.c.b16 %v4621, %v4617
        %v4786 = vpack.c.b16 %v4622, %v4618
        %v4787 = vpack.c.b16 %v4623, %v4619
        %v4788 = vpack.c.b16 %v4624, %v4620
        %v4789 = vpack.c.b16 %v4629, %v4625
        %v4790 = vpack.c.b16 %v4630, %v4626
        %v4791 = vpack.c.b16 %v4631, %v4627
        %v4792 = vpack.c.b16 %v4632, %v4628
        %v4793 = vpack.c.b16 %v4637, %v4633
        %v4794 = vpack.c.b16 %v4638, %v4634
        %v4795 = vpack.c.b16 %v4639, %v4635
        %v4796 = vpack.c.b16 %v4640, %v4636
        %v4797 = vpack.c.b16 %v4645, %v4641
        %v4798 = vpack.c.b16 %v4646, %v4642
        %v4799 = vpack.c.b16 %v4647, %v4643
        %v4800 = vpack.c.b16 %v4648, %v4644
        %v4801 = vpack.c.b16 %v4653, %v4649
        %v4802 = vpack.c.b16 %v4654, %v4650
        %v4803 = vpack.c.b16 %v4655, %v4651
        %v4804 = vpack.c.b16 %v4656, %v4652
        %v4805 = vpack.c.b16 %v4661, %v4657
        %v4806 = vpack.c.b16 %v4662, %v4658
        %v4807 = vpack.c.b16 %v4663, %v4659
        %v4808 = vpack.c.b16 %v4664, %v4660
        %v4809 = vpack.c.b16 %v4669, %v4665
        %v4810 = vpack.c.b16 %v4670, %v4666
        %v4811 = vpack.c.b16 %v4671, %v4667
        %v4812 = vpack.c.b16 %v4672, %v4668
        %v4813 = vpack.c.b16 %v4677, %v4673
        %v4814 = vpack.c.b16 %v4678, %v4674
        %v4815 = vpack.c.b16 %v4679, %v4675
        %v4816 = vpack.c.b16 %v4680, %v4676
        %v4817 = vpack.c.b16 %v4685, %v4681
        %v4818 = vpack.c.b16 %v4686, %v4682
        %v4819 = vpack.c.b16 %v4687, %v4683
        %v4820 = vpack.c.b16 %v4688, %v4684
        %v4821 = vpack.c.b16 %v4693, %v4689
        %v4822 = vpack.c.b16 %v4694, %v4690
        %v4823 = vpack.c.b16 %v4695, %v4691
        %v4824 = vpack.c.b16 %v4696, %v4692
        %4953 = vmatprep.subr.bf16.mxu0 %v4726
        %4954 = vmatpush1.bf16.msra.mxu0 %v4725
        %4955 = vmatprep.subr.bf16.mxu0 %v4722
        %4956 = vmatpush1.bf16.msra.mxu0 %v4721
        %4957 = vmatprep.subr.bf16.mxu0 %v4718
        %4958 = vmatpush1.bf16.msra.mxu0 %v4717
        %4959 = vmatprep.subr.bf16.mxu0 %v4714
        %4960 = vmatpush1.bf16.msra.mxu0 %v4713
        %4961 = vmatprep.subr.bf16.mxu0 %v4710
        %4962 = vmatpush1.bf16.msra.mxu0 %v4709
        %4963 = vmatprep.subr.bf16.mxu0 %v4706
        %4964 = vmatpush1.bf16.msra.mxu0 %v4705
        %4965 = vmatprep.subr.bf16.mxu0 %v4702
        %4966 = vmatpush1.bf16.msra.mxu0 %v4701
        %4967 = vmatprep.subr.bf16.mxu0 %v4698
        %4968 = vmatpush1.bf16.msra.mxu0 %v4697
        %4969 = vmatprep.subr.bf16.mxu0 %v4758
        %4970 = vmatpush2.bf16.msra.mxu0 %v4757
        %4971 = vmatprep.subr.bf16.mxu0 %v4754
        %4972 = vmatpush2.bf16.msra.mxu0 %v4753
        %4973 = vmatprep.subr.bf16.mxu0 %v4750
        %4974 = vmatpush2.bf16.msra.mxu0 %v4749
        %4975 = vmatprep.subr.bf16.mxu0 %v4746
        %4976 = vmatpush2.bf16.msra.mxu0 %v4745
        %4977 = vmatprep.subr.bf16.mxu0 %v4742
        %4978 = vmatpush2.bf16.msra.mxu0 %v4741
        %4979 = vmatprep.subr.bf16.mxu0 %v4738
        %4980 = vmatpush2.bf16.msra.mxu0 %v4737
        %4981 = vmatprep.subr.bf16.mxu0 %v4734
        %4982 = vmatpush2.bf16.msra.mxu0 %v4733
        %4983 = vmatprep.subr.bf16.mxu0 %v4730
        %4984 = vmatpush2.bf16.msra.mxu0 %v4729
        %4985 = vmatprep.mubr.bf16.mxu0 %v4100
        %4986 = vmatmul.mubr.bf16.gmra.mxu0 %v4099
        %v4987 = vpop.f32.mrf.mxu0
        %v4988 = vadd.f32 %v4296, %v4987
        %v4989 = vpop.f32.mrf.mxu0
        %v4990 = vadd.f32 %v4300, %v4989
        %v4991 = vpop.f32.mrf.mxu0
        %v4992 = vadd.f32 %v4296, %v4991
        %v4993 = vpop.f32.mrf.mxu0
        %v4994 = vadd.f32 %v4300, %v4993
        %4995 = vmatprep.mubr.bf16.mxu0 %v4104
        %4996 = vmatmul.mubr.bf16.gmra.mxu0 %v4103
        %v4997 = vpop.f32.mrf.mxu0
        %v4998 = vadd.f32 %v4296, %v4997
        %v4999 = vpop.f32.mrf.mxu0
        %v5000 = vadd.f32 %v4300, %v4999
        %v5001 = vpop.f32.mrf.mxu0
        %v5002 = vadd.f32 %v4296, %v5001
        %v5003 = vpop.f32.mrf.mxu0
        %v5004 = vadd.f32 %v4300, %v5003
        %5005 = vmatprep.mubr.bf16.mxu0 %v4108
        %5006 = vmatmul.mubr.bf16.gmra.mxu0 %v4107
        %v5007 = vpop.f32.mrf.mxu0
        %v5008 = vadd.f32 %v4296, %v5007
        %v5009 = vpop.f32.mrf.mxu0
        %v5010 = vadd.f32 %v4300, %v5009
        %v5011 = vpop.f32.mrf.mxu0
        %v5012 = vadd.f32 %v4296, %v5011
        %v5013 = vpop.f32.mrf.mxu0
        %v5014 = vadd.f32 %v4300, %v5013
        %5015 = vmatprep.mubr.bf16.mxu0 %v4112
        %5016 = vmatmul.mubr.bf16.gmra.mxu0 %v4111
        %v5017 = vpop.f32.mrf.mxu0
        %v5018 = vadd.f32 %v4296, %v5017
        %v5019 = vpop.f32.mrf.mxu0
        %v5020 = vadd.f32 %v4300, %v5019
        %v5021 = vpop.f32.mrf.mxu0
        %v5022 = vadd.f32 %v4296, %v5021
        %v5023 = vpop.f32.mrf.mxu0
        %v5024 = vadd.f32 %v4300, %v5023
        %5025 = vmatprep.mubr.bf16.mxu0 %v4116
        %5026 = vmatmul.mubr.bf16.gmra.mxu0 %v4115
        %v5027 = vpop.f32.mrf.mxu0
        %v5028 = vadd.f32 %v4296, %v5027
        %v5029 = vpop.f32.mrf.mxu0
        %v5030 = vadd.f32 %v4300, %v5029
        %v5031 = vpop.f32.mrf.mxu0
        %v5032 = vadd.f32 %v4296, %v5031
        %v5033 = vpop.f32.mrf.mxu0
        %v5034 = vadd.f32 %v4300, %v5033
        %5035 = vmatprep.mubr.bf16.mxu0 %v4120
        %5036 = vmatmul.mubr.bf16.gmra.mxu0 %v4119
        %v5037 = vpop.f32.mrf.mxu0
        %v5038 = vadd.f32 %v4296, %v5037
        %v5039 = vpop.f32.mrf.mxu0
        %v5040 = vadd.f32 %v4300, %v5039
        %v5041 = vpop.f32.mrf.mxu0
        %v5042 = vadd.f32 %v4296, %v5041
        %v5043 = vpop.f32.mrf.mxu0
        %v5044 = vadd.f32 %v4300, %v5043
        %5045 = vmatprep.mubr.bf16.mxu0 %v4124
        %5046 = vmatmul.mubr.bf16.gmra.mxu0 %v4123
        %v5047 = vpop.f32.mrf.mxu0
        %v5048 = vadd.f32 %v4296, %v5047
        %v5049 = vpop.f32.mrf.mxu0
        %v5050 = vadd.f32 %v4300, %v5049
        %v5051 = vpop.f32.mrf.mxu0
        %v5052 = vadd.f32 %v4296, %v5051
        %v5053 = vpop.f32.mrf.mxu0
        %v5054 = vadd.f32 %v4300, %v5053
        %5055 = vmatprep.mubr.bf16.mxu0 %v4128
        %5056 = vmatmul.mubr.bf16.gmra.mxu0 %v4127
        %v5057 = vpop.f32.mrf.mxu0
        %v5058 = vadd.f32 %v4296, %v5057
        %v5059 = vpop.f32.mrf.mxu0
        %v5060 = vadd.f32 %v4300, %v5059
        %v5061 = vpop.f32.mrf.mxu0
        %v5062 = vadd.f32 %v4296, %v5061
        %v5063 = vpop.f32.mrf.mxu0
        %v5064 = vadd.f32 %v4300, %v5063
        %5065 = vmatprep.mubr.bf16.mxu0 %v4132
        %5066 = vmatmul.mubr.bf16.gmra.mxu0 %v4131
        %v5067 = vpop.f32.mrf.mxu0
        %v5068 = vadd.f32 %v4296, %v5067
        %v5069 = vpop.f32.mrf.mxu0
        %v5070 = vadd.f32 %v4300, %v5069
        %v5071 = vpop.f32.mrf.mxu0
        %v5072 = vadd.f32 %v4296, %v5071
        %v5073 = vpop.f32.mrf.mxu0
        %v5074 = vadd.f32 %v4300, %v5073
        %5075 = vmatprep.mubr.bf16.mxu0 %v4136
        %5076 = vmatmul.mubr.bf16.gmra.mxu0 %v4135
        %v5077 = vpop.f32.mrf.mxu0
        %v5078 = vadd.f32 %v4296, %v5077
        %v5079 = vpop.f32.mrf.mxu0
        %v5080 = vadd.f32 %v4300, %v5079
        %v5081 = vpop.f32.mrf.mxu0
        %v5082 = vadd.f32 %v4296, %v5081
        %v5083 = vpop.f32.mrf.mxu0
        %v5084 = vadd.f32 %v4300, %v5083
        %5085 = vmatprep.mubr.bf16.mxu0 %v4140
        %5086 = vmatmul.mubr.bf16.gmra.mxu0 %v4139
        %v5087 = vpop.f32.mrf.mxu0
        %v5088 = vadd.f32 %v4296, %v5087
        %v5089 = vpop.f32.mrf.mxu0
        %v5090 = vadd.f32 %v4300, %v5089
        %v5091 = vpop.f32.mrf.mxu0
        %v5092 = vadd.f32 %v4296, %v5091
        %v5093 = vpop.f32.mrf.mxu0
        %v5094 = vadd.f32 %v4300, %v5093
        %5095 = vmatprep.mubr.bf16.mxu0 %v4144
        %5096 = vmatmul.mubr.bf16.gmra.mxu0 %v4143
        %v5097 = vpop.f32.mrf.mxu0
        %v5098 = vadd.f32 %v4296, %v5097
        %v5099 = vpop.f32.mrf.mxu0
        %v5100 = vadd.f32 %v4300, %v5099
        %v5101 = vpop.f32.mrf.mxu0
        %v5102 = vadd.f32 %v4296, %v5101
        %v5103 = vpop.f32.mrf.mxu0
        %v5104 = vadd.f32 %v4300, %v5103
        %5105 = vmatprep.mubr.bf16.mxu0 %v4148
        %5106 = vmatmul.mubr.bf16.gmra.mxu0 %v4147
        %v5107 = vpop.f32.mrf.mxu0
        %v5108 = vadd.f32 %v4296, %v5107
        %v5109 = vpop.f32.mrf.mxu0
        %v5110 = vadd.f32 %v4300, %v5109
        %v5111 = vpop.f32.mrf.mxu0
        %v5112 = vadd.f32 %v4296, %v5111
        %v5113 = vpop.f32.mrf.mxu0
        %v5114 = vadd.f32 %v4300, %v5113
        %5115 = vmatprep.mubr.bf16.mxu0 %v4152
        %5116 = vmatmul.mubr.bf16.gmra.mxu0 %v4151
        %v5117 = vpop.f32.mrf.mxu0
        %v5118 = vadd.f32 %v4296, %v5117
        %v5119 = vpop.f32.mrf.mxu0
        %v5120 = vadd.f32 %v4300, %v5119
        %v5121 = vpop.f32.mrf.mxu0
        %v5122 = vadd.f32 %v4296, %v5121
        %v5123 = vpop.f32.mrf.mxu0
        %v5124 = vadd.f32 %v4300, %v5123
        %5125 = vmatprep.mubr.bf16.mxu0 %v4156
        %5126 = vmatmul.mubr.bf16.gmra.mxu0 %v4155
        %v5127 = vpop.f32.mrf.mxu0
        %v5128 = vadd.f32 %v4296, %v5127
        %v5129 = vpop.f32.mrf.mxu0
        %v5130 = vadd.f32 %v4300, %v5129
        %v5131 = vpop.f32.mrf.mxu0
        %v5132 = vadd.f32 %v4296, %v5131
        %v5133 = vpop.f32.mrf.mxu0
        %v5134 = vadd.f32 %v4300, %v5133
        %5135 = vmatprep.mubr.bf16.mxu0 %v4160
        %5136 = vmatmul.mubr.bf16.gmra.mxu0 %v4159
        %v5137 = vpop.f32.mrf.mxu0
        %v5138 = vadd.f32 %v4296, %v5137
        %v5139 = vpop.f32.mrf.mxu0
        %v5140 = vadd.f32 %v4300, %v5139
        %v5141 = vpop.f32.mrf.mxu0
        %v5142 = vadd.f32 %v4296, %v5141
        %v5143 = vpop.f32.mrf.mxu0
        %v5144 = vadd.f32 %v4300, %v5143
        %5145 = vdwg.mxu0
        %5146 = vmatprep.subr.bf16.mxu0 %v4790
        %5147 = vmatpush1.bf16.msra.mxu0 %v4789
        %5148 = vmatprep.subr.bf16.mxu0 %v4786
        %5149 = vmatpush1.bf16.msra.mxu0 %v4785
        %5150 = vmatprep.subr.bf16.mxu0 %v4782
        %5151 = vmatpush1.bf16.msra.mxu0 %v4781
        %5152 = vmatprep.subr.bf16.mxu0 %v4778
        %5153 = vmatpush1.bf16.msra.mxu0 %v4777
        %5154 = vmatprep.subr.bf16.mxu0 %v4774
        %5155 = vmatpush1.bf16.msra.mxu0 %v4773
        %5156 = vmatprep.subr.bf16.mxu0 %v4770
        %5157 = vmatpush1.bf16.msra.mxu0 %v4769
        %5158 = vmatprep.subr.bf16.mxu0 %v4766
        %5159 = vmatpush1.bf16.msra.mxu0 %v4765
        %5160 = vmatprep.subr.bf16.mxu0 %v4762
        %5161 = vmatpush1.bf16.msra.mxu0 %v4761
        %5162 = vmatprep.subr.bf16.mxu0 %v4822
        %5163 = vmatpush2.bf16.msra.mxu0 %v4821
        %5164 = vmatprep.subr.bf16.mxu0 %v4818
        %5165 = vmatpush2.bf16.msra.mxu0 %v4817
        %5166 = vmatprep.subr.bf16.mxu0 %v4814
        %5167 = vmatpush2.bf16.msra.mxu0 %v4813
        %5168 = vmatprep.subr.bf16.mxu0 %v4810
        %5169 = vmatpush2.bf16.msra.mxu0 %v4809
        %5170 = vmatprep.subr.bf16.mxu0 %v4806
        %5171 = vmatpush2.bf16.msra.mxu0 %v4805
        %5172 = vmatprep.subr.bf16.mxu0 %v4802
        %5173 = vmatpush2.bf16.msra.mxu0 %v4801
        %5174 = vmatprep.subr.bf16.mxu0 %v4798
        %5175 = vmatpush2.bf16.msra.mxu0 %v4797
        %5176 = vmatprep.subr.bf16.mxu0 %v4794
        %5177 = vmatpush2.bf16.msra.mxu0 %v4793
        %5178 = vmatprep.mubr.bf16.mxu0 %v4102
        %5179 = vmatmul.mubr.bf16.gmra.mxu0 %v4101
        %v5180 = vpop.f32.mrf.mxu0
        %v5181 = vadd.f32 %v4988, %v5180
        %v5182 = vpop.f32.mrf.mxu0
        %v5183 = vadd.f32 %v4990, %v5182
        %v5184 = vpop.f32.mrf.mxu0
        %v5185 = vadd.f32 %v4992, %v5184
        %v5186 = vpop.f32.mrf.mxu0
        %v5187 = vadd.f32 %v4994, %v5186
        %5188 = vmatprep.mubr.bf16.mxu0 %v4106
        %5189 = vmatmul.mubr.bf16.gmra.mxu0 %v4105
        %v5190 = vpop.f32.mrf.mxu0
        %v5191 = vadd.f32 %v4998, %v5190
        %v5192 = vpop.f32.mrf.mxu0
        %v5193 = vadd.f32 %v5000, %v5192
        %v5194 = vpop.f32.mrf.mxu0
        %v5195 = vadd.f32 %v5002, %v5194
        %v5196 = vpop.f32.mrf.mxu0
        %v5197 = vadd.f32 %v5004, %v5196
        %5198 = vmatprep.mubr.bf16.mxu0 %v4110
        %5199 = vmatmul.mubr.bf16.gmra.mxu0 %v4109
        %v5200 = vpop.f32.mrf.mxu0
        %v5201 = vadd.f32 %v5008, %v5200
        %v5202 = vpop.f32.mrf.mxu0
        %v5203 = vadd.f32 %v5010, %v5202
        %v5204 = vpop.f32.mrf.mxu0
        %v5205 = vadd.f32 %v5012, %v5204
        %v5206 = vpop.f32.mrf.mxu0
        %v5207 = vadd.f32 %v5014, %v5206
        %5208 = vmatprep.mubr.bf16.mxu0 %v4114
        %5209 = vmatmul.mubr.bf16.gmra.mxu0 %v4113
        %v5210 = vpop.f32.mrf.mxu0
        %v5211 = vadd.f32 %v5018, %v5210
        %v5212 = vpop.f32.mrf.mxu0
        %v5213 = vadd.f32 %v5020, %v5212
        %v5214 = vpop.f32.mrf.mxu0
        %v5215 = vadd.f32 %v5022, %v5214
        %v5216 = vpop.f32.mrf.mxu0
        %v5217 = vadd.f32 %v5024, %v5216
        %5218 = vmatprep.mubr.bf16.mxu0 %v4118
        %5219 = vmatmul.mubr.bf16.gmra.mxu0 %v4117
        %v5220 = vpop.f32.mrf.mxu0
        %v5221 = vadd.f32 %v5028, %v5220
        %v5222 = vpop.f32.mrf.mxu0
        %v5223 = vadd.f32 %v5030, %v5222
        %v5224 = vpop.f32.mrf.mxu0
        %v5225 = vadd.f32 %v5032, %v5224
        %v5226 = vpop.f32.mrf.mxu0
        %v5227 = vadd.f32 %v5034, %v5226
        %5228 = vmatprep.mubr.bf16.mxu0 %v4122
        %5229 = vmatmul.mubr.bf16.gmra.mxu0 %v4121
        %v5230 = vpop.f32.mrf.mxu0
        %v5231 = vadd.f32 %v5038, %v5230
        %v5232 = vpop.f32.mrf.mxu0
        %v5233 = vadd.f32 %v5040, %v5232
        %v5234 = vpop.f32.mrf.mxu0
        %v5235 = vadd.f32 %v5042, %v5234
        %v5236 = vpop.f32.mrf.mxu0
        %v5237 = vadd.f32 %v5044, %v5236
        %5238 = vmatprep.mubr.bf16.mxu0 %v4126
        %5239 = vmatmul.mubr.bf16.gmra.mxu0 %v4125
        %v5240 = vpop.f32.mrf.mxu0
        %v5241 = vadd.f32 %v5048, %v5240
        %v5242 = vpop.f32.mrf.mxu0
        %v5243 = vadd.f32 %v5050, %v5242
        %v5244 = vpop.f32.mrf.mxu0
        %v5245 = vadd.f32 %v5052, %v5244
        %v5246 = vpop.f32.mrf.mxu0
        %v5247 = vadd.f32 %v5054, %v5246
        %5248 = vmatprep.mubr.bf16.mxu0 %v4130
        %5249 = vmatmul.mubr.bf16.gmra.mxu0 %v4129
        %v5250 = vpop.f32.mrf.mxu0
        %v5251 = vadd.f32 %v5058, %v5250
        %v5252 = vpop.f32.mrf.mxu0
        %v5253 = vadd.f32 %v5060, %v5252
        %v5254 = vpop.f32.mrf.mxu0
        %v5255 = vadd.f32 %v5062, %v5254
        %v5256 = vpop.f32.mrf.mxu0
        %v5257 = vadd.f32 %v5064, %v5256
        %5258 = vmatprep.mubr.bf16.mxu0 %v4134
        %5259 = vmatmul.mubr.bf16.gmra.mxu0 %v4133
        %v5260 = vpop.f32.mrf.mxu0
        %v5261 = vadd.f32 %v5068, %v5260
        %v5262 = vpop.f32.mrf.mxu0
        %v5263 = vadd.f32 %v5070, %v5262
        %v5264 = vpop.f32.mrf.mxu0
        %v5265 = vadd.f32 %v5072, %v5264
        %v5266 = vpop.f32.mrf.mxu0
        %v5267 = vadd.f32 %v5074, %v5266
        %5268 = vmatprep.mubr.bf16.mxu0 %v4138
        %5269 = vmatmul.mubr.bf16.gmra.mxu0 %v4137
        %v5270 = vpop.f32.mrf.mxu0
        %v5271 = vadd.f32 %v5078, %v5270
        %v5272 = vpop.f32.mrf.mxu0
        %v5273 = vadd.f32 %v5080, %v5272
        %v5274 = vpop.f32.mrf.mxu0
        %v5275 = vadd.f32 %v5082, %v5274
        %v5276 = vpop.f32.mrf.mxu0
        %v5277 = vadd.f32 %v5084, %v5276
        %5278 = vmatprep.mubr.bf16.mxu0 %v4142
        %5279 = vmatmul.mubr.bf16.gmra.mxu0 %v4141
        %v5280 = vpop.f32.mrf.mxu0
        %v5281 = vadd.f32 %v5088, %v5280
        %v5282 = vpop.f32.mrf.mxu0
        %v5283 = vadd.f32 %v5090, %v5282
        %v5284 = vpop.f32.mrf.mxu0
        %v5285 = vadd.f32 %v5092, %v5284
        %v5286 = vpop.f32.mrf.mxu0
        %v5287 = vadd.f32 %v5094, %v5286
        %5288 = vmatprep.mubr.bf16.mxu0 %v4146
        %5289 = vmatmul.mubr.bf16.gmra.mxu0 %v4145
        %v5290 = vpop.f32.mrf.mxu0
        %v5291 = vadd.f32 %v5098, %v5290
        %v5292 = vpop.f32.mrf.mxu0
        %v5293 = vadd.f32 %v5100, %v5292
        %v5294 = vpop.f32.mrf.mxu0
        %v5295 = vadd.f32 %v5102, %v5294
        %v5296 = vpop.f32.mrf.mxu0
        %v5297 = vadd.f32 %v5104, %v5296
        %5298 = vmatprep.mubr.bf16.mxu0 %v4150
        %5299 = vmatmul.mubr.bf16.gmra.mxu0 %v4149
        %v5300 = vpop.f32.mrf.mxu0
        %v5301 = vadd.f32 %v5108, %v5300
        %v5302 = vpop.f32.mrf.mxu0
        %v5303 = vadd.f32 %v5110, %v5302
        %v5304 = vpop.f32.mrf.mxu0
        %v5305 = vadd.f32 %v5112, %v5304
        %v5306 = vpop.f32.mrf.mxu0
        %v5307 = vadd.f32 %v5114, %v5306
        %5308 = vmatprep.mubr.bf16.mxu0 %v4154
        %5309 = vmatmul.mubr.bf16.gmra.mxu0 %v4153
        %v5310 = vpop.f32.mrf.mxu0
        %v5311 = vadd.f32 %v5118, %v5310
        %v5312 = vpop.f32.mrf.mxu0
        %v5313 = vadd.f32 %v5120, %v5312
        %v5314 = vpop.f32.mrf.mxu0
        %v5315 = vadd.f32 %v5122, %v5314
        %v5316 = vpop.f32.mrf.mxu0
        %v5317 = vadd.f32 %v5124, %v5316
        %5318 = vmatprep.mubr.bf16.mxu0 %v4158
        %5319 = vmatmul.mubr.bf16.gmra.mxu0 %v4157
        %v5320 = vpop.f32.mrf.mxu0
        %v5321 = vadd.f32 %v5128, %v5320
        %v5322 = vpop.f32.mrf.mxu0
        %v5323 = vadd.f32 %v5130, %v5322
        %v5324 = vpop.f32.mrf.mxu0
        %v5325 = vadd.f32 %v5132, %v5324
        %v5326 = vpop.f32.mrf.mxu0
        %v5327 = vadd.f32 %v5134, %v5326
        %5328 = vmatprep.mubr.bf16.mxu0 %v4162
        %5329 = vmatmul.mubr.bf16.gmra.mxu0 %v4161
        %v5330 = vpop.f32.mrf.mxu0
        %v5331 = vadd.f32 %v5138, %v5330
        %v5332 = vpop.f32.mrf.mxu0
        %v5333 = vadd.f32 %v5140, %v5332
        %v5334 = vpop.f32.mrf.mxu0
        %v5335 = vadd.f32 %v5142, %v5334
        %v5336 = vpop.f32.mrf.mxu0
        %v5337 = vadd.f32 %v5144, %v5336
        %5338 = vdwg.mxu0
        %5339 = vmatprep.subr.bf16.mxu0 %v4728
        %5340 = vmatpush1.bf16.msra.mxu0 %v4727
        %5341 = vmatprep.subr.bf16.mxu0 %v4724
        %5342 = vmatpush1.bf16.msra.mxu0 %v4723
        %5343 = vmatprep.subr.bf16.mxu0 %v4720
        %5344 = vmatpush1.bf16.msra.mxu0 %v4719
        %5345 = vmatprep.subr.bf16.mxu0 %v4716
        %5346 = vmatpush1.bf16.msra.mxu0 %v4715
        %5347 = vmatprep.subr.bf16.mxu0 %v4712
        %5348 = vmatpush1.bf16.msra.mxu0 %v4711
        %5349 = vmatprep.subr.bf16.mxu0 %v4708
        %5350 = vmatpush1.bf16.msra.mxu0 %v4707
        %5351 = vmatprep.subr.bf16.mxu0 %v4704
        %5352 = vmatpush1.bf16.msra.mxu0 %v4703
        %5353 = vmatprep.subr.bf16.mxu0 %v4700
        %5354 = vmatpush1.bf16.msra.mxu0 %v4699
        %5355 = vmatprep.subr.bf16.mxu0 %v4760
        %5356 = vmatpush2.bf16.msra.mxu0 %v4759
        %5357 = vmatprep.subr.bf16.mxu0 %v4756
        %5358 = vmatpush2.bf16.msra.mxu0 %v4755
        %5359 = vmatprep.subr.bf16.mxu0 %v4752
        %5360 = vmatpush2.bf16.msra.mxu0 %v4751
        %5361 = vmatprep.subr.bf16.mxu0 %v4748
        %5362 = vmatpush2.bf16.msra.mxu0 %v4747
        %5363 = vmatprep.subr.bf16.mxu0 %v4744
        %5364 = vmatpush2.bf16.msra.mxu0 %v4743
        %5365 = vmatprep.subr.bf16.mxu0 %v4740
        %5366 = vmatpush2.bf16.msra.mxu0 %v4739
        %5367 = vmatprep.subr.bf16.mxu0 %v4736
        %5368 = vmatpush2.bf16.msra.mxu0 %v4735
        %5369 = vmatprep.subr.bf16.mxu0 %v4732
        %5370 = vmatpush2.bf16.msra.mxu0 %v4731
        %5371 = vmatprep.mubr.bf16.mxu0 %v4100
        %5372 = vmatmul.mubr.bf16.gmra.mxu0 %v4099
        %v5373 = vpop.f32.mrf.mxu0
        %v5374 = vadd.f32 %v4304, %v5373
        %v5375 = vpop.f32.mrf.mxu0
        %v5376 = vadd.f32 %v4308, %v5375
        %v5377 = vpop.f32.mrf.mxu0
        %v5378 = vadd.f32 %v4304, %v5377
        %v5379 = vpop.f32.mrf.mxu0
        %v5380 = vadd.f32 %v4308, %v5379
        %5381 = vmatprep.mubr.bf16.mxu0 %v4104
        %5382 = vmatmul.mubr.bf16.gmra.mxu0 %v4103
        %v5383 = vpop.f32.mrf.mxu0
        %v5384 = vadd.f32 %v4304, %v5383
        %v5385 = vpop.f32.mrf.mxu0
        %v5386 = vadd.f32 %v4308, %v5385
        %v5387 = vpop.f32.mrf.mxu0
        %v5388 = vadd.f32 %v4304, %v5387
        %v5389 = vpop.f32.mrf.mxu0
        %v5390 = vadd.f32 %v4308, %v5389
        %5391 = vmatprep.mubr.bf16.mxu0 %v4108
        %5392 = vmatmul.mubr.bf16.gmra.mxu0 %v4107
        %v5393 = vpop.f32.mrf.mxu0
        %v5394 = vadd.f32 %v4304, %v5393
        %v5395 = vpop.f32.mrf.mxu0
        %v5396 = vadd.f32 %v4308, %v5395
        %v5397 = vpop.f32.mrf.mxu0
        %v5398 = vadd.f32 %v4304, %v5397
        %v5399 = vpop.f32.mrf.mxu0
        %v5400 = vadd.f32 %v4308, %v5399
        %5401 = vmatprep.mubr.bf16.mxu0 %v4112
        %5402 = vmatmul.mubr.bf16.gmra.mxu0 %v4111
        %v5403 = vpop.f32.mrf.mxu0
        %v5404 = vadd.f32 %v4304, %v5403
        %v5405 = vpop.f32.mrf.mxu0
        %v5406 = vadd.f32 %v4308, %v5405
        %v5407 = vpop.f32.mrf.mxu0
        %v5408 = vadd.f32 %v4304, %v5407
        %v5409 = vpop.f32.mrf.mxu0
        %v5410 = vadd.f32 %v4308, %v5409
        %5411 = vmatprep.mubr.bf16.mxu0 %v4116
        %5412 = vmatmul.mubr.bf16.gmra.mxu0 %v4115
        %v5413 = vpop.f32.mrf.mxu0
        %v5414 = vadd.f32 %v4304, %v5413
        %v5415 = vpop.f32.mrf.mxu0
        %v5416 = vadd.f32 %v4308, %v5415
        %v5417 = vpop.f32.mrf.mxu0
        %v5418 = vadd.f32 %v4304, %v5417
        %v5419 = vpop.f32.mrf.mxu0
        %v5420 = vadd.f32 %v4308, %v5419
        %5421 = vmatprep.mubr.bf16.mxu0 %v4120
        %5422 = vmatmul.mubr.bf16.gmra.mxu0 %v4119
        %v5423 = vpop.f32.mrf.mxu0
        %v5424 = vadd.f32 %v4304, %v5423
        %v5425 = vpop.f32.mrf.mxu0
        %v5426 = vadd.f32 %v4308, %v5425
        %v5427 = vpop.f32.mrf.mxu0
        %v5428 = vadd.f32 %v4304, %v5427
        %v5429 = vpop.f32.mrf.mxu0
        %v5430 = vadd.f32 %v4308, %v5429
        %5431 = vmatprep.mubr.bf16.mxu0 %v4124
        %5432 = vmatmul.mubr.bf16.gmra.mxu0 %v4123
        %v5433 = vpop.f32.mrf.mxu0
        %v5434 = vadd.f32 %v4304, %v5433
        %v5435 = vpop.f32.mrf.mxu0
        %v5436 = vadd.f32 %v4308, %v5435
        %v5437 = vpop.f32.mrf.mxu0
        %v5438 = vadd.f32 %v4304, %v5437
        %v5439 = vpop.f32.mrf.mxu0
        %v5440 = vadd.f32 %v4308, %v5439
        %5441 = vmatprep.mubr.bf16.mxu0 %v4128
        %5442 = vmatmul.mubr.bf16.gmra.mxu0 %v4127
        %v5443 = vpop.f32.mrf.mxu0
        %v5444 = vadd.f32 %v4304, %v5443
        %v5445 = vpop.f32.mrf.mxu0
        %v5446 = vadd.f32 %v4308, %v5445
        %v5447 = vpop.f32.mrf.mxu0
        %v5448 = vadd.f32 %v4304, %v5447
        %v5449 = vpop.f32.mrf.mxu0
        %v5450 = vadd.f32 %v4308, %v5449
        %5451 = vmatprep.mubr.bf16.mxu0 %v4132
        %5452 = vmatmul.mubr.bf16.gmra.mxu0 %v4131
        %v5453 = vpop.f32.mrf.mxu0
        %v5454 = vadd.f32 %v4304, %v5453
        %v5455 = vpop.f32.mrf.mxu0
        %v5456 = vadd.f32 %v4308, %v5455
        %v5457 = vpop.f32.mrf.mxu0
        %v5458 = vadd.f32 %v4304, %v5457
        %v5459 = vpop.f32.mrf.mxu0
        %v5460 = vadd.f32 %v4308, %v5459
        %5461 = vmatprep.mubr.bf16.mxu0 %v4136
        %5462 = vmatmul.mubr.bf16.gmra.mxu0 %v4135
        %v5463 = vpop.f32.mrf.mxu0
        %v5464 = vadd.f32 %v4304, %v5463
        %v5465 = vpop.f32.mrf.mxu0
        %v5466 = vadd.f32 %v4308, %v5465
        %v5467 = vpop.f32.mrf.mxu0
        %v5468 = vadd.f32 %v4304, %v5467
        %v5469 = vpop.f32.mrf.mxu0
        %v5470 = vadd.f32 %v4308, %v5469
        %5471 = vmatprep.mubr.bf16.mxu0 %v4140
        %5472 = vmatmul.mubr.bf16.gmra.mxu0 %v4139
        %v5473 = vpop.f32.mrf.mxu0
        %v5474 = vadd.f32 %v4304, %v5473
        %v5475 = vpop.f32.mrf.mxu0
        %v5476 = vadd.f32 %v4308, %v5475
        %v5477 = vpop.f32.mrf.mxu0
        %v5478 = vadd.f32 %v4304, %v5477
        %v5479 = vpop.f32.mrf.mxu0
        %v5480 = vadd.f32 %v4308, %v5479
        %5481 = vmatprep.mubr.bf16.mxu0 %v4144
        %5482 = vmatmul.mubr.bf16.gmra.mxu0 %v4143
        %v5483 = vpop.f32.mrf.mxu0
        %v5484 = vadd.f32 %v4304, %v5483
        %v5485 = vpop.f32.mrf.mxu0
        %v5486 = vadd.f32 %v4308, %v5485
        %v5487 = vpop.f32.mrf.mxu0
        %v5488 = vadd.f32 %v4304, %v5487
        %v5489 = vpop.f32.mrf.mxu0
        %v5490 = vadd.f32 %v4308, %v5489
        %5491 = vmatprep.mubr.bf16.mxu0 %v4148
        %5492 = vmatmul.mubr.bf16.gmra.mxu0 %v4147
        %v5493 = vpop.f32.mrf.mxu0
        %v5494 = vadd.f32 %v4304, %v5493
        %v5495 = vpop.f32.mrf.mxu0
        %v5496 = vadd.f32 %v4308, %v5495
        %v5497 = vpop.f32.mrf.mxu0
        %v5498 = vadd.f32 %v4304, %v5497
        %v5499 = vpop.f32.mrf.mxu0
        %v5500 = vadd.f32 %v4308, %v5499
        %5501 = vmatprep.mubr.bf16.mxu0 %v4152
        %5502 = vmatmul.mubr.bf16.gmra.mxu0 %v4151
        %v5503 = vpop.f32.mrf.mxu0
        %v5504 = vadd.f32 %v4304, %v5503
        %v5505 = vpop.f32.mrf.mxu0
        %v5506 = vadd.f32 %v4308, %v5505
        %v5507 = vpop.f32.mrf.mxu0
        %v5508 = vadd.f32 %v4304, %v5507
        %v5509 = vpop.f32.mrf.mxu0
        %v5510 = vadd.f32 %v4308, %v5509
        %5511 = vmatprep.mubr.bf16.mxu0 %v4156
        %5512 = vmatmul.mubr.bf16.gmra.mxu0 %v4155
        %v5513 = vpop.f32.mrf.mxu0
        %v5514 = vadd.f32 %v4304, %v5513
        %v5515 = vpop.f32.mrf.mxu0
        %v5516 = vadd.f32 %v4308, %v5515
        %v5517 = vpop.f32.mrf.mxu0
        %v5518 = vadd.f32 %v4304, %v5517
        %v5519 = vpop.f32.mrf.mxu0
        %v5520 = vadd.f32 %v4308, %v5519
        %5521 = vmatprep.mubr.bf16.mxu0 %v4160
        %5522 = vmatmul.mubr.bf16.gmra.mxu0 %v4159
        %v5523 = vpop.f32.mrf.mxu0
        %v5524 = vadd.f32 %v4304, %v5523
        %v5525 = vpop.f32.mrf.mxu0
        %v5526 = vadd.f32 %v4308, %v5525
        %v5527 = vpop.f32.mrf.mxu0
        %v5528 = vadd.f32 %v4304, %v5527
        %v5529 = vpop.f32.mrf.mxu0
        %v5530 = vadd.f32 %v4308, %v5529
        %5531 = vdwg.mxu0
        %5532 = vmatprep.subr.bf16.mxu0 %v4792
        %5533 = vmatpush1.bf16.msra.mxu0 %v4791
        %5534 = vmatprep.subr.bf16.mxu0 %v4788
        %5535 = vmatpush1.bf16.msra.mxu0 %v4787
        %5536 = vmatprep.subr.bf16.mxu0 %v4784
        %5537 = vmatpush1.bf16.msra.mxu0 %v4783
        %5538 = vmatprep.subr.bf16.mxu0 %v4780
        %5539 = vmatpush1.bf16.msra.mxu0 %v4779
        %5540 = vmatprep.subr.bf16.mxu0 %v4776
        %5541 = vmatpush1.bf16.msra.mxu0 %v4775
        %5542 = vmatprep.subr.bf16.mxu0 %v4772
        %5543 = vmatpush1.bf16.msra.mxu0 %v4771
        %5544 = vmatprep.subr.bf16.mxu0 %v4768
        %5545 = vmatpush1.bf16.msra.mxu0 %v4767
        %5546 = vmatprep.subr.bf16.mxu0 %v4764
        %5547 = vmatpush1.bf16.msra.mxu0 %v4763
        %5548 = vmatprep.subr.bf16.mxu0 %v4824
        %5549 = vmatpush2.bf16.msra.mxu0 %v4823
        %5550 = vmatprep.subr.bf16.mxu0 %v4820
        %5551 = vmatpush2.bf16.msra.mxu0 %v4819
        %5552 = vmatprep.subr.bf16.mxu0 %v4816
        %5553 = vmatpush2.bf16.msra.mxu0 %v4815
        %5554 = vmatprep.subr.bf16.mxu0 %v4812
        %5555 = vmatpush2.bf16.msra.mxu0 %v4811
        %5556 = vmatprep.subr.bf16.mxu0 %v4808
        %5557 = vmatpush2.bf16.msra.mxu0 %v4807
        %5558 = vmatprep.subr.bf16.mxu0 %v4804
        %5559 = vmatpush2.bf16.msra.mxu0 %v4803
        %5560 = vmatprep.subr.bf16.mxu0 %v4800
        %5561 = vmatpush2.bf16.msra.mxu0 %v4799
        %5562 = vmatprep.subr.bf16.mxu0 %v4796
        %5563 = vmatpush2.bf16.msra.mxu0 %v4795
        %5564 = vmatprep.mubr.bf16.mxu0 %v4102
        %5565 = vmatmul.mubr.bf16.gmra.mxu0 %v4101
        %v5566 = vpop.f32.mrf.mxu0
        %v5567 = vadd.f32 %v5374, %v5566
        %v5568 = vpop.f32.mrf.mxu0
        %v5569 = vadd.f32 %v5376, %v5568
        %v5570 = vpop.f32.mrf.mxu0
        %v5571 = vadd.f32 %v5378, %v5570
        %v5572 = vpop.f32.mrf.mxu0
        %v5573 = vadd.f32 %v5380, %v5572
        %5574 = vmatprep.mubr.bf16.mxu0 %v4106
        %5575 = vmatmul.mubr.bf16.gmra.mxu0 %v4105
        %v5576 = vpop.f32.mrf.mxu0
        %v5577 = vadd.f32 %v5384, %v5576
        %v5578 = vpop.f32.mrf.mxu0
        %v5579 = vadd.f32 %v5386, %v5578
        %v5580 = vpop.f32.mrf.mxu0
        %v5581 = vadd.f32 %v5388, %v5580
        %v5582 = vpop.f32.mrf.mxu0
        %v5583 = vadd.f32 %v5390, %v5582
        %5584 = vmatprep.mubr.bf16.mxu0 %v4110
        %5585 = vmatmul.mubr.bf16.gmra.mxu0 %v4109
        %v5586 = vpop.f32.mrf.mxu0
        %v5587 = vadd.f32 %v5394, %v5586
        %v5588 = vpop.f32.mrf.mxu0
        %v5589 = vadd.f32 %v5396, %v5588
        %v5590 = vpop.f32.mrf.mxu0
        %v5591 = vadd.f32 %v5398, %v5590
        %v5592 = vpop.f32.mrf.mxu0
        %v5593 = vadd.f32 %v5400, %v5592
        %5594 = vmatprep.mubr.bf16.mxu0 %v4114
        %5595 = vmatmul.mubr.bf16.gmra.mxu0 %v4113
        %v5596 = vpop.f32.mrf.mxu0
        %v5597 = vadd.f32 %v5404, %v5596
        %v5598 = vpop.f32.mrf.mxu0
        %v5599 = vadd.f32 %v5406, %v5598
        %v5600 = vpop.f32.mrf.mxu0
        %v5601 = vadd.f32 %v5408, %v5600
        %v5602 = vpop.f32.mrf.mxu0
        %v5603 = vadd.f32 %v5410, %v5602
        %5604 = vmatprep.mubr.bf16.mxu0 %v4118
        %5605 = vmatmul.mubr.bf16.gmra.mxu0 %v4117
        %v5606 = vpop.f32.mrf.mxu0
        %v5607 = vadd.f32 %v5414, %v5606
        %v5608 = vpop.f32.mrf.mxu0
        %v5609 = vadd.f32 %v5416, %v5608
        %v5610 = vpop.f32.mrf.mxu0
        %v5611 = vadd.f32 %v5418, %v5610
        %v5612 = vpop.f32.mrf.mxu0
        %v5613 = vadd.f32 %v5420, %v5612
        %5614 = vmatprep.mubr.bf16.mxu0 %v4122
        %5615 = vmatmul.mubr.bf16.gmra.mxu0 %v4121
        %v5616 = vpop.f32.mrf.mxu0
        %v5617 = vadd.f32 %v5424, %v5616
        %v5618 = vpop.f32.mrf.mxu0
        %v5619 = vadd.f32 %v5426, %v5618
        %v5620 = vpop.f32.mrf.mxu0
        %v5621 = vadd.f32 %v5428, %v5620
        %v5622 = vpop.f32.mrf.mxu0
        %v5623 = vadd.f32 %v5430, %v5622
        %5624 = vmatprep.mubr.bf16.mxu0 %v4126
        %5625 = vmatmul.mubr.bf16.gmra.mxu0 %v4125
        %v5626 = vpop.f32.mrf.mxu0
        %v5627 = vadd.f32 %v5434, %v5626
        %v5628 = vpop.f32.mrf.mxu0
        %v5629 = vadd.f32 %v5436, %v5628
        %v5630 = vpop.f32.mrf.mxu0
        %v5631 = vadd.f32 %v5438, %v5630
        %v5632 = vpop.f32.mrf.mxu0
        %v5633 = vadd.f32 %v5440, %v5632
        %5634 = vmatprep.mubr.bf16.mxu0 %v4130
        %5635 = vmatmul.mubr.bf16.gmra.mxu0 %v4129
        %v5636 = vpop.f32.mrf.mxu0
        %v5637 = vadd.f32 %v5444, %v5636
        %v5638 = vpop.f32.mrf.mxu0
        %v5639 = vadd.f32 %v5446, %v5638
        %v5640 = vpop.f32.mrf.mxu0
        %v5641 = vadd.f32 %v5448, %v5640
        %v5642 = vpop.f32.mrf.mxu0
        %v5643 = vadd.f32 %v5450, %v5642
        %5644 = vmatprep.mubr.bf16.mxu0 %v4134
        %5645 = vmatmul.mubr.bf16.gmra.mxu0 %v4133
        %v5646 = vpop.f32.mrf.mxu0
        %v5647 = vadd.f32 %v5454, %v5646
        %v5648 = vpop.f32.mrf.mxu0
        %v5649 = vadd.f32 %v5456, %v5648
        %v5650 = vpop.f32.mrf.mxu0
        %v5651 = vadd.f32 %v5458, %v5650
        %v5652 = vpop.f32.mrf.mxu0
        %v5653 = vadd.f32 %v5460, %v5652
        %5654 = vmatprep.mubr.bf16.mxu0 %v4138
        %5655 = vmatmul.mubr.bf16.gmra.mxu0 %v4137
        %v5656 = vpop.f32.mrf.mxu0
        %v5657 = vadd.f32 %v5464, %v5656
        %v5658 = vpop.f32.mrf.mxu0
        %v5659 = vadd.f32 %v5466, %v5658
        %v5660 = vpop.f32.mrf.mxu0
        %v5661 = vadd.f32 %v5468, %v5660
        %v5662 = vpop.f32.mrf.mxu0
        %v5663 = vadd.f32 %v5470, %v5662
        %5664 = vmatprep.mubr.bf16.mxu0 %v4142
        %5665 = vmatmul.mubr.bf16.gmra.mxu0 %v4141
        %v5666 = vpop.f32.mrf.mxu0
        %v5667 = vadd.f32 %v5474, %v5666
        %v5668 = vpop.f32.mrf.mxu0
        %v5669 = vadd.f32 %v5476, %v5668
        %v5670 = vpop.f32.mrf.mxu0
        %v5671 = vadd.f32 %v5478, %v5670
        %v5672 = vpop.f32.mrf.mxu0
        %v5673 = vadd.f32 %v5480, %v5672
        %5674 = vmatprep.mubr.bf16.mxu0 %v4146
        %5675 = vmatmul.mubr.bf16.gmra.mxu0 %v4145
        %v5676 = vpop.f32.mrf.mxu0
        %v5677 = vadd.f32 %v5484, %v5676
        %v5678 = vpop.f32.mrf.mxu0
        %v5679 = vadd.f32 %v5486, %v5678
        %v5680 = vpop.f32.mrf.mxu0
        %v5681 = vadd.f32 %v5488, %v5680
        %v5682 = vpop.f32.mrf.mxu0
        %v5683 = vadd.f32 %v5490, %v5682
        %5684 = vmatprep.mubr.bf16.mxu0 %v4150
        %5685 = vmatmul.mubr.bf16.gmra.mxu0 %v4149
        %v5686 = vpop.f32.mrf.mxu0
        %v5687 = vadd.f32 %v5494, %v5686
        %v5688 = vpop.f32.mrf.mxu0
        %v5689 = vadd.f32 %v5496, %v5688
        %v5690 = vpop.f32.mrf.mxu0
        %v5691 = vadd.f32 %v5498, %v5690
        %v5692 = vpop.f32.mrf.mxu0
        %v5693 = vadd.f32 %v5500, %v5692
        %5694 = vmatprep.mubr.bf16.mxu0 %v4154
        %5695 = vmatmul.mubr.bf16.gmra.mxu0 %v4153
        %v5696 = vpop.f32.mrf.mxu0
        %v5697 = vadd.f32 %v5504, %v5696
        %v5698 = vpop.f32.mrf.mxu0
        %v5699 = vadd.f32 %v5506, %v5698
        %v5700 = vpop.f32.mrf.mxu0
        %v5701 = vadd.f32 %v5508, %v5700
        %v5702 = vpop.f32.mrf.mxu0
        %v5703 = vadd.f32 %v5510, %v5702
        %5704 = vmatprep.mubr.bf16.mxu0 %v4158
        %5705 = vmatmul.mubr.bf16.gmra.mxu0 %v4157
        %v5706 = vpop.f32.mrf.mxu0
        %v5707 = vadd.f32 %v5514, %v5706
        %v5708 = vpop.f32.mrf.mxu0
        %v5709 = vadd.f32 %v5516, %v5708
        %v5710 = vpop.f32.mrf.mxu0
        %v5711 = vadd.f32 %v5518, %v5710
        %v5712 = vpop.f32.mrf.mxu0
        %v5713 = vadd.f32 %v5520, %v5712
        %5714 = vmatprep.mubr.bf16.mxu0 %v4162
        %5715 = vmatmul.mubr.bf16.gmra.mxu0 %v4161
        %v5716 = vpop.f32.mrf.mxu0
        %v5717 = vadd.f32 %v5524, %v5716
        %v5718 = vpop.f32.mrf.mxu0
        %v5719 = vadd.f32 %v5526, %v5718
        %v5720 = vpop.f32.mrf.mxu0
        %v5721 = vadd.f32 %v5528, %v5720
        %v5722 = vpop.f32.mrf.mxu0
        %v5723 = vadd.f32 %v5530, %v5722
        %5724 = vdwg.mxu0
        %v5725 = vmax.f32 %v5181, 0.0
        %v5726 = vmax.f32 %v5183, 0.0
        %v5727 = vmax.f32 %v5567, 0.0
        %v5728 = vmax.f32 %v5569, 0.0
        %v5729 = vmax.f32 %v5185, 0.0
        %v5730 = vmax.f32 %v5187, 0.0
        %v5731 = vmax.f32 %v5571, 0.0
        %v5732 = vmax.f32 %v5573, 0.0
        %v5733 = vmax.f32 %v5191, 0.0
        %v5734 = vmax.f32 %v5193, 0.0
        %v5735 = vmax.f32 %v5577, 0.0
        %v5736 = vmax.f32 %v5579, 0.0
        %v5737 = vmax.f32 %v5195, 0.0
        %v5738 = vmax.f32 %v5197, 0.0
        %v5739 = vmax.f32 %v5581, 0.0
        %v5740 = vmax.f32 %v5583, 0.0
        %v5741 = vmax.f32 %v5201, 0.0
        %v5742 = vmax.f32 %v5203, 0.0
        %v5743 = vmax.f32 %v5587, 0.0
        %v5744 = vmax.f32 %v5589, 0.0
        %v5745 = vmax.f32 %v5205, 0.0
        %v5746 = vmax.f32 %v5207, 0.0
        %v5747 = vmax.f32 %v5591, 0.0
        %v5748 = vmax.f32 %v5593, 0.0
        %v5749 = vmax.f32 %v5211, 0.0
        %v5750 = vmax.f32 %v5213, 0.0
        %v5751 = vmax.f32 %v5597, 0.0
        %v5752 = vmax.f32 %v5599, 0.0
        %v5753 = vmax.f32 %v5215, 0.0
        %v5754 = vmax.f32 %v5217, 0.0
        %v5755 = vmax.f32 %v5601, 0.0
        %v5756 = vmax.f32 %v5603, 0.0
        %v5757 = vmax.f32 %v5221, 0.0
        %v5758 = vmax.f32 %v5223, 0.0
        %v5759 = vmax.f32 %v5607, 0.0
        %v5760 = vmax.f32 %v5609, 0.0
        %v5761 = vmax.f32 %v5225, 0.0
        %v5762 = vmax.f32 %v5227, 0.0
        %v5763 = vmax.f32 %v5611, 0.0
        %v5764 = vmax.f32 %v5613, 0.0
        %v5765 = vmax.f32 %v5231, 0.0
        %v5766 = vmax.f32 %v5233, 0.0
        %v5767 = vmax.f32 %v5617, 0.0
        %v5768 = vmax.f32 %v5619, 0.0
        %v5769 = vmax.f32 %v5235, 0.0
        %v5770 = vmax.f32 %v5237, 0.0
        %v5771 = vmax.f32 %v5621, 0.0
        %v5772 = vmax.f32 %v5623, 0.0
        %v5773 = vmax.f32 %v5241, 0.0
        %v5774 = vmax.f32 %v5243, 0.0
        %v5775 = vmax.f32 %v5627, 0.0
        %v5776 = vmax.f32 %v5629, 0.0
        %v5777 = vmax.f32 %v5245, 0.0
        %v5778 = vmax.f32 %v5247, 0.0
        %v5779 = vmax.f32 %v5631, 0.0
        %v5780 = vmax.f32 %v5633, 0.0
        %v5781 = vmax.f32 %v5251, 0.0
        %v5782 = vmax.f32 %v5253, 0.0
        %v5783 = vmax.f32 %v5637, 0.0
        %v5784 = vmax.f32 %v5639, 0.0
        %v5785 = vmax.f32 %v5255, 0.0
        %v5786 = vmax.f32 %v5257, 0.0
        %v5787 = vmax.f32 %v5641, 0.0
        %v5788 = vmax.f32 %v5643, 0.0
        %v5789 = vmax.f32 %v5261, 0.0
        %v5790 = vmax.f32 %v5263, 0.0
        %v5791 = vmax.f32 %v5647, 0.0
        %v5792 = vmax.f32 %v5649, 0.0
        %v5793 = vmax.f32 %v5265, 0.0
        %v5794 = vmax.f32 %v5267, 0.0
        %v5795 = vmax.f32 %v5651, 0.0
        %v5796 = vmax.f32 %v5653, 0.0
        %v5797 = vmax.f32 %v5271, 0.0
        %v5798 = vmax.f32 %v5273, 0.0
        %v5799 = vmax.f32 %v5657, 0.0
        %v5800 = vmax.f32 %v5659, 0.0
        %v5801 = vmax.f32 %v5275, 0.0
        %v5802 = vmax.f32 %v5277, 0.0
        %v5803 = vmax.f32 %v5661, 0.0
        %v5804 = vmax.f32 %v5663, 0.0
        %v5805 = vmax.f32 %v5281, 0.0
        %v5806 = vmax.f32 %v5283, 0.0
        %v5807 = vmax.f32 %v5667, 0.0
        %v5808 = vmax.f32 %v5669, 0.0
        %v5809 = vmax.f32 %v5285, 0.0
        %v5810 = vmax.f32 %v5287, 0.0
        %v5811 = vmax.f32 %v5671, 0.0
        %v5812 = vmax.f32 %v5673, 0.0
        %v5813 = vmax.f32 %v5291, 0.0
        %v5814 = vmax.f32 %v5293, 0.0
        %v5815 = vmax.f32 %v5677, 0.0
        %v5816 = vmax.f32 %v5679, 0.0
        %v5817 = vmax.f32 %v5295, 0.0
        %v5818 = vmax.f32 %v5297, 0.0
        %v5819 = vmax.f32 %v5681, 0.0
        %v5820 = vmax.f32 %v5683, 0.0
        %v5821 = vmax.f32 %v5301, 0.0
        %v5822 = vmax.f32 %v5303, 0.0
        %v5823 = vmax.f32 %v5687, 0.0
        %v5824 = vmax.f32 %v5689, 0.0
        %v5825 = vmax.f32 %v5305, 0.0
        %v5826 = vmax.f32 %v5307, 0.0
        %v5827 = vmax.f32 %v5691, 0.0
        %v5828 = vmax.f32 %v5693, 0.0
        %v5829 = vmax.f32 %v5311, 0.0
        %v5830 = vmax.f32 %v5313, 0.0
        %v5831 = vmax.f32 %v5697, 0.0
        %v5832 = vmax.f32 %v5699, 0.0
        %v5833 = vmax.f32 %v5315, 0.0
        %v5834 = vmax.f32 %v5317, 0.0
        %v5835 = vmax.f32 %v5701, 0.0
        %v5836 = vmax.f32 %v5703, 0.0
        %v5837 = vmax.f32 %v5321, 0.0
        %v5838 = vmax.f32 %v5323, 0.0
        %v5839 = vmax.f32 %v5707, 0.0
        %v5840 = vmax.f32 %v5709, 0.0
        %v5841 = vmax.f32 %v5325, 0.0
        %v5842 = vmax.f32 %v5327, 0.0
        %v5843 = vmax.f32 %v5711, 0.0
        %v5844 = vmax.f32 %v5713, 0.0
        %v5845 = vmax.f32 %v5331, 0.0
        %v5846 = vmax.f32 %v5333, 0.0
        %v5847 = vmax.f32 %v5717, 0.0
        %v5848 = vmax.f32 %v5719, 0.0
        %v5849 = vmax.f32 %v5335, 0.0
        %v5850 = vmax.f32 %v5337, 0.0
        %v5851 = vmax.f32 %v5721, 0.0
        %v5852 = vmax.f32 %v5723, 0.0
        %v5853 = vpack.c.bf16 %v5729, %v5725
        %v5854 = vpack.c.bf16 %v5730, %v5726
        %v5855 = vpack.c.bf16 %v5731, %v5727
        %v5856 = vpack.c.bf16 %v5732, %v5728
        %v5857 = vpack.c.bf16 %v5737, %v5733
        %v5858 = vpack.c.bf16 %v5738, %v5734
        %v5859 = vpack.c.bf16 %v5739, %v5735
        %v5860 = vpack.c.bf16 %v5740, %v5736
        %v5861 = vpack.c.bf16 %v5745, %v5741
        %v5862 = vpack.c.bf16 %v5746, %v5742
        %v5863 = vpack.c.bf16 %v5747, %v5743
        %v5864 = vpack.c.bf16 %v5748, %v5744
        %v5865 = vpack.c.bf16 %v5753, %v5749
        %v5866 = vpack.c.bf16 %v5754, %v5750
        %v5867 = vpack.c.bf16 %v5755, %v5751
        %v5868 = vpack.c.bf16 %v5756, %v5752
        %v5869 = vpack.c.bf16 %v5761, %v5757
        %v5870 = vpack.c.bf16 %v5762, %v5758
        %v5871 = vpack.c.bf16 %v5763, %v5759
        %v5872 = vpack.c.bf16 %v5764, %v5760
        %v5873 = vpack.c.bf16 %v5769, %v5765
        %v5874 = vpack.c.bf16 %v5770, %v5766
        %v5875 = vpack.c.bf16 %v5771, %v5767
        %v5876 = vpack.c.bf16 %v5772, %v5768
        %v5877 = vpack.c.bf16 %v5777, %v5773
        %v5878 = vpack.c.bf16 %v5778, %v5774
        %v5879 = vpack.c.bf16 %v5779, %v5775
        %v5880 = vpack.c.bf16 %v5780, %v5776
        %v5881 = vpack.c.bf16 %v5785, %v5781
        %v5882 = vpack.c.bf16 %v5786, %v5782
        %v5883 = vpack.c.bf16 %v5787, %v5783
        %v5884 = vpack.c.bf16 %v5788, %v5784
        %v5885 = vpack.c.bf16 %v5793, %v5789
        %v5886 = vpack.c.bf16 %v5794, %v5790
        %v5887 = vpack.c.bf16 %v5795, %v5791
        %v5888 = vpack.c.bf16 %v5796, %v5792
        %v5889 = vpack.c.bf16 %v5801, %v5797
        %v5890 = vpack.c.bf16 %v5802, %v5798
        %v5891 = vpack.c.bf16 %v5803, %v5799
        %v5892 = vpack.c.bf16 %v5804, %v5800
        %v5893 = vpack.c.bf16 %v5809, %v5805
        %v5894 = vpack.c.bf16 %v5810, %v5806
        %v5895 = vpack.c.bf16 %v5811, %v5807
        %v5896 = vpack.c.bf16 %v5812, %v5808
        %v5897 = vpack.c.bf16 %v5817, %v5813
        %v5898 = vpack.c.bf16 %v5818, %v5814
        %v5899 = vpack.c.bf16 %v5819, %v5815
        %v5900 = vpack.c.bf16 %v5820, %v5816
        %v5901 = vpack.c.bf16 %v5825, %v5821
        %v5902 = vpack.c.bf16 %v5826, %v5822
        %v5903 = vpack.c.bf16 %v5827, %v5823
        %v5904 = vpack.c.bf16 %v5828, %v5824
        %v5905 = vpack.c.bf16 %v5833, %v5829
        %v5906 = vpack.c.bf16 %v5834, %v5830
        %v5907 = vpack.c.bf16 %v5835, %v5831
        %v5908 = vpack.c.bf16 %v5836, %v5832
        %v5909 = vpack.c.bf16 %v5841, %v5837
        %v5910 = vpack.c.bf16 %v5842, %v5838
        %v5911 = vpack.c.bf16 %v5843, %v5839
        %v5912 = vpack.c.bf16 %v5844, %v5840
        %v5913 = vpack.c.bf16 %v5849, %v5845
        %v5914 = vpack.c.bf16 %v5850, %v5846
        %v5915 = vpack.c.bf16 %v5851, %v5847
        %v5916 = vpack.c.bf16 %v5852, %v5848
        %v5917 = vld [vmem:[#allocation10] sm:$0xf]
        %v5918 = vld [vmem:[#allocation10 + $0x4] sm:$0xf]
        %v5919 = vld [vmem:[#allocation10 + $0x8] sm:$0xf]
        %v5920 = vld [vmem:[#allocation10 + $0xc] sm:$0xf]
        %v5921 = vld [vmem:[#allocation10 + $0x10] sm:$0xf]
        %v5922 = vld [vmem:[#allocation10 + $0x14] sm:$0xf]
        %v5923 = vld [vmem:[#allocation10 + $0x18] sm:$0xf]
        %v5924 = vld [vmem:[#allocation10 + $0x1c] sm:$0xf]
        %v5925 = vld [vmem:[#allocation10 + $0x20] sm:$0xf]
        %v5926 = vld [vmem:[#allocation10 + $0x24] sm:$0xf]
        %v5927 = vld [vmem:[#allocation10 + $0x28] sm:$0xf]
        %v5928 = vld [vmem:[#allocation10 + $0x2c] sm:$0xf]
        %v5929 = vld [vmem:[#allocation10 + $0x30] sm:$0xf]
        %v5930 = vld [vmem:[#allocation10 + $0x34] sm:$0xf]
        %v5931 = vld [vmem:[#allocation10 + $0x38] sm:$0xf]
        %v5932 = vld [vmem:[#allocation10 + $0x3c] sm:$0xf]
        %v5933 = vld [vmem:[#allocation10 + $0x40] sm:$0xf]
        %v5934 = vld [vmem:[#allocation10 + $0x44] sm:$0xf]
        %v5935 = vld [vmem:[#allocation10 + $0x48] sm:$0xf]
        %v5936 = vld [vmem:[#allocation10 + $0x4c] sm:$0xf]
        %v5937 = vld [vmem:[#allocation10 + $0x50] sm:$0xf]
        %v5938 = vld [vmem:[#allocation10 + $0x54] sm:$0xf]
        %v5939 = vld [vmem:[#allocation10 + $0x58] sm:$0xf]
        %v5940 = vld [vmem:[#allocation10 + $0x5c] sm:$0xf]
        %v5941 = vld [vmem:[#allocation10 + $0x60] sm:$0xf]
        %v5942 = vld [vmem:[#allocation10 + $0x64] sm:$0xf]
        %v5943 = vld [vmem:[#allocation10 + $0x68] sm:$0xf]
        %v5944 = vld [vmem:[#allocation10 + $0x6c] sm:$0xf]
        %v5945 = vld [vmem:[#allocation10 + $0x70] sm:$0xf]
        %v5946 = vld [vmem:[#allocation10 + $0x74] sm:$0xf]
        %v5947 = vld [vmem:[#allocation10 + $0x78] sm:$0xf]
        %v5948 = vld [vmem:[#allocation10 + $0x7c] sm:$0xf]
        %v5949 = vld [vmem:[#allocation10 + $0x80] sm:$0xf]
        %v5950 = vld [vmem:[#allocation10 + $0x84] sm:$0xf]
        %v5951 = vld [vmem:[#allocation10 + $0x88] sm:$0xf]
        %v5952 = vld [vmem:[#allocation10 + $0x8c] sm:$0xf]
        %v5953 = vld [vmem:[#allocation10 + $0x90] sm:$0xf]
        %v5954 = vld [vmem:[#allocation10 + $0x94] sm:$0xf]
        %v5955 = vld [vmem:[#allocation10 + $0x98] sm:$0xf]
        %v5956 = vld [vmem:[#allocation10 + $0x9c] sm:$0xf]
        %v5957 = vld [vmem:[#allocation10 + $0xa0] sm:$0xf]
        %v5958 = vld [vmem:[#allocation10 + $0xa4] sm:$0xf]
        %v5959 = vld [vmem:[#allocation10 + $0xa8] sm:$0xf]
        %v5960 = vld [vmem:[#allocation10 + $0xac] sm:$0xf]
        %v5961 = vld [vmem:[#allocation10 + $0xb0] sm:$0xf]
        %v5962 = vld [vmem:[#allocation10 + $0xb4] sm:$0xf]
        %v5963 = vld [vmem:[#allocation10 + $0xb8] sm:$0xf]
        %v5964 = vld [vmem:[#allocation10 + $0xbc] sm:$0xf]
        %v5965 = vld [vmem:[#allocation10 + $0xc0] sm:$0xf]
        %v5966 = vld [vmem:[#allocation10 + $0xc4] sm:$0xf]
        %v5967 = vld [vmem:[#allocation10 + $0xc8] sm:$0xf]
        %v5968 = vld [vmem:[#allocation10 + $0xcc] sm:$0xf]
        %v5969 = vld [vmem:[#allocation10 + $0xd0] sm:$0xf]
        %v5970 = vld [vmem:[#allocation10 + $0xd4] sm:$0xf]
        %v5971 = vld [vmem:[#allocation10 + $0xd8] sm:$0xf]
        %v5972 = vld [vmem:[#allocation10 + $0xdc] sm:$0xf]
        %v5973 = vld [vmem:[#allocation10 + $0xe0] sm:$0xf]
        %v5974 = vld [vmem:[#allocation10 + $0xe4] sm:$0xf]
        %v5975 = vld [vmem:[#allocation10 + $0xe8] sm:$0xf]
        %v5976 = vld [vmem:[#allocation10 + $0xec] sm:$0xf]
        %v5977 = vld [vmem:[#allocation10 + $0xf0] sm:$0xf]
        %v5978 = vld [vmem:[#allocation10 + $0xf4] sm:$0xf]
        %v5979 = vld [vmem:[#allocation10 + $0xf8] sm:$0xf]
        %v5980 = vld [vmem:[#allocation10 + $0xfc] sm:$0xf]
        %v5981 = vld [vmem:[%s6] sm:$0x1]
        %v5983 = vlaneseq
        %v5984 = vshrl.u32 %v5983, 7
        %v5985 = vsub.s32 0, %v5984
        %v5986 = vrot.slane %v5981, %v5985
        %v6052 = vunpack.c.l.b16 %v5917
        %v6053 = vunpack.c.l.b16 %v5918
        %v6054 = vunpack.c.l.b16 %v5919
        %v6055 = vunpack.c.l.b16 %v5920
        %v6056 = vunpack.c.l.b16 %v5921
        %v6057 = vunpack.c.l.b16 %v5922
        %v6058 = vunpack.c.l.b16 %v5923
        %v6059 = vunpack.c.l.b16 %v5924
        %v6060 = vunpack.c.l.b16 %v5925
        %v6061 = vunpack.c.l.b16 %v5926
        %v6062 = vunpack.c.l.b16 %v5927
        %v6063 = vunpack.c.l.b16 %v5928
        %v6064 = vunpack.c.l.b16 %v5929
        %v6065 = vunpack.c.l.b16 %v5930
        %v6066 = vunpack.c.l.b16 %v5931
        %v6067 = vunpack.c.l.b16 %v5932
        %v6068 = vunpack.c.l.b16 %v5933
        %v6069 = vunpack.c.l.b16 %v5934
        %v6070 = vunpack.c.l.b16 %v5935
        %v6071 = vunpack.c.l.b16 %v5936
        %v6072 = vunpack.c.l.b16 %v5937
        %v6073 = vunpack.c.l.b16 %v5938
        %v6074 = vunpack.c.l.b16 %v5939
        %v6075 = vunpack.c.l.b16 %v5940
        %v6076 = vunpack.c.l.b16 %v5941
        %v6077 = vunpack.c.l.b16 %v5942
        %v6078 = vunpack.c.l.b16 %v5943
        %v6079 = vunpack.c.l.b16 %v5944
        %v6080 = vunpack.c.l.b16 %v5945
        %v6081 = vunpack.c.l.b16 %v5946
        %v6082 = vunpack.c.l.b16 %v5947
        %v6083 = vunpack.c.l.b16 %v5948
        %v6084 = vunpack.c.l.b16 %v5949
        %v6085 = vunpack.c.l.b16 %v5950
        %v6086 = vunpack.c.l.b16 %v5951
        %v6087 = vunpack.c.l.b16 %v5952
        %v6088 = vunpack.c.l.b16 %v5953
        %v6089 = vunpack.c.l.b16 %v5954
        %v6090 = vunpack.c.l.b16 %v5955
        %v6091 = vunpack.c.l.b16 %v5956
        %v6092 = vunpack.c.l.b16 %v5957
        %v6093 = vunpack.c.l.b16 %v5958
        %v6094 = vunpack.c.l.b16 %v5959
        %v6095 = vunpack.c.l.b16 %v5960
        %v6096 = vunpack.c.l.b16 %v5961
        %v6097 = vunpack.c.l.b16 %v5962
        %v6098 = vunpack.c.l.b16 %v5963
        %v6099 = vunpack.c.l.b16 %v5964
        %v6100 = vunpack.c.l.b16 %v5965
        %v6101 = vunpack.c.l.b16 %v5966
        %v6102 = vunpack.c.l.b16 %v5967
        %v6103 = vunpack.c.l.b16 %v5968
        %v6104 = vunpack.c.l.b16 %v5969
        %v6105 = vunpack.c.l.b16 %v5970
        %v6106 = vunpack.c.l.b16 %v5971
        %v6107 = vunpack.c.l.b16 %v5972
        %v6108 = vunpack.c.l.b16 %v5973
        %v6109 = vunpack.c.l.b16 %v5974
        %v6110 = vunpack.c.l.b16 %v5975
        %v6111 = vunpack.c.l.b16 %v5976
        %v6112 = vunpack.c.l.b16 %v5977
        %v6113 = vunpack.c.l.b16 %v5978
        %v6114 = vunpack.c.l.b16 %v5979
        %v6115 = vunpack.c.l.b16 %v5980
        %v6116 = vpack.c.b16 %v6053, %v6052
        %v6117 = vpack.c.b16 %v6055, %v6054
        %v6118 = vpack.c.b16 %v6057, %v6056
        %v6119 = vpack.c.b16 %v6059, %v6058
        %v6120 = vpack.c.b16 %v6061, %v6060
        %v6121 = vpack.c.b16 %v6063, %v6062
        %v6122 = vpack.c.b16 %v6065, %v6064
        %v6123 = vpack.c.b16 %v6067, %v6066
        %v6124 = vpack.c.b16 %v6069, %v6068
        %v6125 = vpack.c.b16 %v6071, %v6070
        %v6126 = vpack.c.b16 %v6073, %v6072
        %v6127 = vpack.c.b16 %v6075, %v6074
        %v6128 = vpack.c.b16 %v6077, %v6076
        %v6129 = vpack.c.b16 %v6079, %v6078
        %v6130 = vpack.c.b16 %v6081, %v6080
        %v6131 = vpack.c.b16 %v6083, %v6082
        %v6132 = vpack.c.b16 %v6085, %v6084
        %v6133 = vpack.c.b16 %v6087, %v6086
        %v6134 = vpack.c.b16 %v6089, %v6088
        %v6135 = vpack.c.b16 %v6091, %v6090
        %v6136 = vpack.c.b16 %v6093, %v6092
        %v6137 = vpack.c.b16 %v6095, %v6094
        %v6138 = vpack.c.b16 %v6097, %v6096
        %v6139 = vpack.c.b16 %v6099, %v6098
        %v6140 = vpack.c.b16 %v6101, %v6100
        %v6141 = vpack.c.b16 %v6103, %v6102
        %v6142 = vpack.c.b16 %v6105, %v6104
        %v6143 = vpack.c.b16 %v6107, %v6106
        %v6144 = vpack.c.b16 %v6109, %v6108
        %v6145 = vpack.c.b16 %v6111, %v6110
        %v6146 = vpack.c.b16 %v6113, %v6112
        %v6147 = vpack.c.b16 %v6115, %v6114
        %6180 = vmatprep.subr.bf16.mxu0 0
        %6181 = vmatpush1.bf16.msra.mxu0 %v6123
        %6182 = vmatprep.subr.bf16.mxu0 0
        %6183 = vmatpush1.bf16.msra.mxu0 %v6122
        %6184 = vmatprep.subr.bf16.mxu0 0
        %6185 = vmatpush1.bf16.msra.mxu0 %v6121
        %6186 = vmatprep.subr.bf16.mxu0 0
        %6187 = vmatpush1.bf16.msra.mxu0 %v6120
        %6188 = vmatprep.subr.bf16.mxu0 0
        %6189 = vmatpush1.bf16.msra.mxu0 %v6119
        %6190 = vmatprep.subr.bf16.mxu0 0
        %6191 = vmatpush1.bf16.msra.mxu0 %v6118
        %6192 = vmatprep.subr.bf16.mxu0 0
        %6193 = vmatpush1.bf16.msra.mxu0 %v6117
        %6194 = vmatprep.subr.bf16.mxu0 0
        %6195 = vmatpush1.bf16.msra.mxu0 %v6116
        %6196 = vmatprep.subr.bf16.mxu0 0
        %6197 = vmatpush2.bf16.msra.mxu0 %v6131
        %6198 = vmatprep.subr.bf16.mxu0 0
        %6199 = vmatpush2.bf16.msra.mxu0 %v6130
        %6200 = vmatprep.subr.bf16.mxu0 0
        %6201 = vmatpush2.bf16.msra.mxu0 %v6129
        %6202 = vmatprep.subr.bf16.mxu0 0
        %6203 = vmatpush2.bf16.msra.mxu0 %v6128
        %6204 = vmatprep.subr.bf16.mxu0 0
        %6205 = vmatpush2.bf16.msra.mxu0 %v6127
        %6206 = vmatprep.subr.bf16.mxu0 0
        %6207 = vmatpush2.bf16.msra.mxu0 %v6126
        %6208 = vmatprep.subr.bf16.mxu0 0
        %6209 = vmatpush2.bf16.msra.mxu0 %v6125
        %6210 = vmatprep.subr.bf16.mxu0 0
        %6211 = vmatpush2.bf16.msra.mxu0 %v6124
        %6212 = vmatprep.mubr.bf16.mxu0 %v5854
        %6213 = vmatmul.mubr.bf16.gmra.mxu0 %v5853
        %v6214 = vpop.f32.mrf.mxu0
        %v6215 = vadd.f32 %v5986, %v6214
        %v6216 = vpop.f32.mrf.mxu0
        %v6217 = vpop.f32.mrf.mxu0
        %v6218 = vadd.f32 %v5986, %v6217
        %v6219 = vpop.f32.mrf.mxu0
        %6220 = vmatprep.mubr.bf16.mxu0 %v5858
        %6221 = vmatmul.mubr.bf16.gmra.mxu0 %v5857
        %v6222 = vpop.f32.mrf.mxu0
        %v6223 = vadd.f32 %v5986, %v6222
        %v6224 = vpop.f32.mrf.mxu0
        %v6225 = vpop.f32.mrf.mxu0
        %v6226 = vadd.f32 %v5986, %v6225
        %v6227 = vpop.f32.mrf.mxu0
        %6228 = vmatprep.mubr.bf16.mxu0 %v5862
        %6229 = vmatmul.mubr.bf16.gmra.mxu0 %v5861
        %v6230 = vpop.f32.mrf.mxu0
        %v6231 = vadd.f32 %v5986, %v6230
        %v6232 = vpop.f32.mrf.mxu0
        %v6233 = vpop.f32.mrf.mxu0
        %v6234 = vadd.f32 %v5986, %v6233
        %v6235 = vpop.f32.mrf.mxu0
        %6236 = vmatprep.mubr.bf16.mxu0 %v5866
        %6237 = vmatmul.mubr.bf16.gmra.mxu0 %v5865
        %v6238 = vpop.f32.mrf.mxu0
        %v6239 = vadd.f32 %v5986, %v6238
        %v6240 = vpop.f32.mrf.mxu0
        %v6241 = vpop.f32.mrf.mxu0
        %v6242 = vadd.f32 %v5986, %v6241
        %v6243 = vpop.f32.mrf.mxu0
        %6244 = vmatprep.mubr.bf16.mxu0 %v5870
        %6245 = vmatmul.mubr.bf16.gmra.mxu0 %v5869
        %v6246 = vpop.f32.mrf.mxu0
        %v6247 = vadd.f32 %v5986, %v6246
        %v6248 = vpop.f32.mrf.mxu0
        %v6249 = vpop.f32.mrf.mxu0
        %v6250 = vadd.f32 %v5986, %v6249
        %v6251 = vpop.f32.mrf.mxu0
        %6252 = vmatprep.mubr.bf16.mxu0 %v5874
        %6253 = vmatmul.mubr.bf16.gmra.mxu0 %v5873
        %v6254 = vpop.f32.mrf.mxu0
        %v6255 = vadd.f32 %v5986, %v6254
        %v6256 = vpop.f32.mrf.mxu0
        %v6257 = vpop.f32.mrf.mxu0
        %v6258 = vadd.f32 %v5986, %v6257
        %v6259 = vpop.f32.mrf.mxu0
        %6260 = vmatprep.mubr.bf16.mxu0 %v5878
        %6261 = vmatmul.mubr.bf16.gmra.mxu0 %v5877
        %v6262 = vpop.f32.mrf.mxu0
        %v6263 = vadd.f32 %v5986, %v6262
        %v6264 = vpop.f32.mrf.mxu0
        %v6265 = vpop.f32.mrf.mxu0
        %v6266 = vadd.f32 %v5986, %v6265
        %v6267 = vpop.f32.mrf.mxu0
        %6268 = vmatprep.mubr.bf16.mxu0 %v5882
        %6269 = vmatmul.mubr.bf16.gmra.mxu0 %v5881
        %v6270 = vpop.f32.mrf.mxu0
        %v6271 = vadd.f32 %v5986, %v6270
        %v6272 = vpop.f32.mrf.mxu0
        %v6273 = vpop.f32.mrf.mxu0
        %v6274 = vadd.f32 %v5986, %v6273
        %v6275 = vpop.f32.mrf.mxu0
        %6276 = vmatprep.mubr.bf16.mxu0 %v5886
        %6277 = vmatmul.mubr.bf16.gmra.mxu0 %v5885
        %v6278 = vpop.f32.mrf.mxu0
        %v6279 = vadd.f32 %v5986, %v6278
        %v6280 = vpop.f32.mrf.mxu0
        %v6281 = vpop.f32.mrf.mxu0
        %v6282 = vadd.f32 %v5986, %v6281
        %v6283 = vpop.f32.mrf.mxu0
        %6284 = vmatprep.mubr.bf16.mxu0 %v5890
        %6285 = vmatmul.mubr.bf16.gmra.mxu0 %v5889
        %v6286 = vpop.f32.mrf.mxu0
        %v6287 = vadd.f32 %v5986, %v6286
        %v6288 = vpop.f32.mrf.mxu0
        %v6289 = vpop.f32.mrf.mxu0
        %v6290 = vadd.f32 %v5986, %v6289
        %v6291 = vpop.f32.mrf.mxu0
        %6292 = vmatprep.mubr.bf16.mxu0 %v5894
        %6293 = vmatmul.mubr.bf16.gmra.mxu0 %v5893
        %v6294 = vpop.f32.mrf.mxu0
        %v6295 = vadd.f32 %v5986, %v6294
        %v6296 = vpop.f32.mrf.mxu0
        %v6297 = vpop.f32.mrf.mxu0
        %v6298 = vadd.f32 %v5986, %v6297
        %v6299 = vpop.f32.mrf.mxu0
        %6300 = vmatprep.mubr.bf16.mxu0 %v5898
        %6301 = vmatmul.mubr.bf16.gmra.mxu0 %v5897
        %v6302 = vpop.f32.mrf.mxu0
        %v6303 = vadd.f32 %v5986, %v6302
        %v6304 = vpop.f32.mrf.mxu0
        %v6305 = vpop.f32.mrf.mxu0
        %v6306 = vadd.f32 %v5986, %v6305
        %v6307 = vpop.f32.mrf.mxu0
        %6308 = vmatprep.mubr.bf16.mxu0 %v5902
        %6309 = vmatmul.mubr.bf16.gmra.mxu0 %v5901
        %v6310 = vpop.f32.mrf.mxu0
        %v6311 = vadd.f32 %v5986, %v6310
        %v6312 = vpop.f32.mrf.mxu0
        %v6313 = vpop.f32.mrf.mxu0
        %v6314 = vadd.f32 %v5986, %v6313
        %v6315 = vpop.f32.mrf.mxu0
        %6316 = vmatprep.mubr.bf16.mxu0 %v5906
        %6317 = vmatmul.mubr.bf16.gmra.mxu0 %v5905
        %v6318 = vpop.f32.mrf.mxu0
        %v6319 = vadd.f32 %v5986, %v6318
        %v6320 = vpop.f32.mrf.mxu0
        %v6321 = vpop.f32.mrf.mxu0
        %v6322 = vadd.f32 %v5986, %v6321
        %v6323 = vpop.f32.mrf.mxu0
        %6324 = vmatprep.mubr.bf16.mxu0 %v5910
        %6325 = vmatmul.mubr.bf16.gmra.mxu0 %v5909
        %v6326 = vpop.f32.mrf.mxu0
        %v6327 = vadd.f32 %v5986, %v6326
        %v6328 = vpop.f32.mrf.mxu0
        %v6329 = vpop.f32.mrf.mxu0
        %v6330 = vadd.f32 %v5986, %v6329
        %v6331 = vpop.f32.mrf.mxu0
        %6332 = vmatprep.mubr.bf16.mxu0 %v5914
        %6333 = vmatmul.mubr.bf16.gmra.mxu0 %v5913
        %v6334 = vpop.f32.mrf.mxu0
        %v6335 = vadd.f32 %v5986, %v6334
        %v6336 = vpop.f32.mrf.mxu0
        %v6337 = vpop.f32.mrf.mxu0
        %v6338 = vadd.f32 %v5986, %v6337
        %v6339 = vpop.f32.mrf.mxu0
        %6340 = vdwg.mxu0
        %6341 = vmatprep.subr.bf16.mxu0 0
        %6342 = vmatpush1.bf16.msra.mxu0 %v6139
        %6343 = vmatprep.subr.bf16.mxu0 0
        %6344 = vmatpush1.bf16.msra.mxu0 %v6138
        %6345 = vmatprep.subr.bf16.mxu0 0
        %6346 = vmatpush1.bf16.msra.mxu0 %v6137
        %6347 = vmatprep.subr.bf16.mxu0 0
        %6348 = vmatpush1.bf16.msra.mxu0 %v6136
        %6349 = vmatprep.subr.bf16.mxu0 0
        %6350 = vmatpush1.bf16.msra.mxu0 %v6135
        %6351 = vmatprep.subr.bf16.mxu0 0
        %6352 = vmatpush1.bf16.msra.mxu0 %v6134
        %6353 = vmatprep.subr.bf16.mxu0 0
        %6354 = vmatpush1.bf16.msra.mxu0 %v6133
        %6355 = vmatprep.subr.bf16.mxu0 0
        %6356 = vmatpush1.bf16.msra.mxu0 %v6132
        %6357 = vmatprep.subr.bf16.mxu0 0
        %6358 = vmatpush2.bf16.msra.mxu0 %v6147
        %6359 = vmatprep.subr.bf16.mxu0 0
        %6360 = vmatpush2.bf16.msra.mxu0 %v6146
        %6361 = vmatprep.subr.bf16.mxu0 0
        %6362 = vmatpush2.bf16.msra.mxu0 %v6145
        %6363 = vmatprep.subr.bf16.mxu0 0
        %6364 = vmatpush2.bf16.msra.mxu0 %v6144
        %6365 = vmatprep.subr.bf16.mxu0 0
        %6366 = vmatpush2.bf16.msra.mxu0 %v6143
        %6367 = vmatprep.subr.bf16.mxu0 0
        %6368 = vmatpush2.bf16.msra.mxu0 %v6142
        %6369 = vmatprep.subr.bf16.mxu0 0
        %6370 = vmatpush2.bf16.msra.mxu0 %v6141
        %6371 = vmatprep.subr.bf16.mxu0 0
        %6372 = vmatpush2.bf16.msra.mxu0 %v6140
        %6373 = vmatprep.mubr.bf16.mxu0 %v5856
        %6374 = vmatmul.mubr.bf16.gmra.mxu0 %v5855
        %v6375 = vpop.f32.mrf.mxu0
        %v6376 = vadd.f32 %v6215, %v6375
        %v6377 = vpop.f32.mrf.mxu0
        %v6378 = vpop.f32.mrf.mxu0
        %v6379 = vadd.f32 %v6218, %v6378
        %v6380 = vpop.f32.mrf.mxu0
        %6381 = vmatprep.mubr.bf16.mxu0 %v5860
        %6382 = vmatmul.mubr.bf16.gmra.mxu0 %v5859
        %v6383 = vpop.f32.mrf.mxu0
        %v6384 = vadd.f32 %v6223, %v6383
        %v6385 = vpop.f32.mrf.mxu0
        %v6386 = vpop.f32.mrf.mxu0
        %v6387 = vadd.f32 %v6226, %v6386
        %v6388 = vpop.f32.mrf.mxu0
        %6389 = vmatprep.mubr.bf16.mxu0 %v5864
        %6390 = vmatmul.mubr.bf16.gmra.mxu0 %v5863
        %v6391 = vpop.f32.mrf.mxu0
        %v6392 = vadd.f32 %v6231, %v6391
        %v6393 = vpop.f32.mrf.mxu0
        %v6394 = vpop.f32.mrf.mxu0
        %v6395 = vadd.f32 %v6234, %v6394
        %v6396 = vpop.f32.mrf.mxu0
        %6397 = vmatprep.mubr.bf16.mxu0 %v5868
        %6398 = vmatmul.mubr.bf16.gmra.mxu0 %v5867
        %v6399 = vpop.f32.mrf.mxu0
        %v6400 = vadd.f32 %v6239, %v6399
        %v6401 = vpop.f32.mrf.mxu0
        %v6402 = vpop.f32.mrf.mxu0
        %v6403 = vadd.f32 %v6242, %v6402
        %v6404 = vpop.f32.mrf.mxu0
        %6405 = vmatprep.mubr.bf16.mxu0 %v5872
        %6406 = vmatmul.mubr.bf16.gmra.mxu0 %v5871
        %v6407 = vpop.f32.mrf.mxu0
        %v6408 = vadd.f32 %v6247, %v6407
        %v6409 = vpop.f32.mrf.mxu0
        %v6410 = vpop.f32.mrf.mxu0
        %v6411 = vadd.f32 %v6250, %v6410
        %v6412 = vpop.f32.mrf.mxu0
        %6413 = vmatprep.mubr.bf16.mxu0 %v5876
        %6414 = vmatmul.mubr.bf16.gmra.mxu0 %v5875
        %v6415 = vpop.f32.mrf.mxu0
        %v6416 = vadd.f32 %v6255, %v6415
        %v6417 = vpop.f32.mrf.mxu0
        %v6418 = vpop.f32.mrf.mxu0
        %v6419 = vadd.f32 %v6258, %v6418
        %v6420 = vpop.f32.mrf.mxu0
        %6421 = vmatprep.mubr.bf16.mxu0 %v5880
        %6422 = vmatmul.mubr.bf16.gmra.mxu0 %v5879
        %v6423 = vpop.f32.mrf.mxu0
        %v6424 = vadd.f32 %v6263, %v6423
        %v6425 = vpop.f32.mrf.mxu0
        %v6426 = vpop.f32.mrf.mxu0
        %v6427 = vadd.f32 %v6266, %v6426
        %v6428 = vpop.f32.mrf.mxu0
        %6429 = vmatprep.mubr.bf16.mxu0 %v5884
        %6430 = vmatmul.mubr.bf16.gmra.mxu0 %v5883
        %v6431 = vpop.f32.mrf.mxu0
        %v6432 = vadd.f32 %v6271, %v6431
        %v6433 = vpop.f32.mrf.mxu0
        %v6434 = vpop.f32.mrf.mxu0
        %v6435 = vadd.f32 %v6274, %v6434
        %v6436 = vpop.f32.mrf.mxu0
        %6437 = vmatprep.mubr.bf16.mxu0 %v5888
        %6438 = vmatmul.mubr.bf16.gmra.mxu0 %v5887
        %v6439 = vpop.f32.mrf.mxu0
        %v6440 = vadd.f32 %v6279, %v6439
        %v6441 = vpop.f32.mrf.mxu0
        %v6442 = vpop.f32.mrf.mxu0
        %v6443 = vadd.f32 %v6282, %v6442
        %v6444 = vpop.f32.mrf.mxu0
        %6445 = vmatprep.mubr.bf16.mxu0 %v5892
        %6446 = vmatmul.mubr.bf16.gmra.mxu0 %v5891
        %v6447 = vpop.f32.mrf.mxu0
        %v6448 = vadd.f32 %v6287, %v6447
        %v6449 = vpop.f32.mrf.mxu0
        %v6450 = vpop.f32.mrf.mxu0
        %v6451 = vadd.f32 %v6290, %v6450
        %v6452 = vpop.f32.mrf.mxu0
        %6453 = vmatprep.mubr.bf16.mxu0 %v5896
        %6454 = vmatmul.mubr.bf16.gmra.mxu0 %v5895
        %v6455 = vpop.f32.mrf.mxu0
        %v6456 = vadd.f32 %v6295, %v6455
        %v6457 = vpop.f32.mrf.mxu0
        %v6458 = vpop.f32.mrf.mxu0
        %v6459 = vadd.f32 %v6298, %v6458
        %v6460 = vpop.f32.mrf.mxu0
        %6461 = vmatprep.mubr.bf16.mxu0 %v5900
        %6462 = vmatmul.mubr.bf16.gmra.mxu0 %v5899
        %v6463 = vpop.f32.mrf.mxu0
        %v6464 = vadd.f32 %v6303, %v6463
        %v6465 = vpop.f32.mrf.mxu0
        %v6466 = vpop.f32.mrf.mxu0
        %v6467 = vadd.f32 %v6306, %v6466
        %v6468 = vpop.f32.mrf.mxu0
        %6469 = vmatprep.mubr.bf16.mxu0 %v5904
        %6470 = vmatmul.mubr.bf16.gmra.mxu0 %v5903
        %v6471 = vpop.f32.mrf.mxu0
        %v6472 = vadd.f32 %v6311, %v6471
        %v6473 = vpop.f32.mrf.mxu0
        %v6474 = vpop.f32.mrf.mxu0
        %v6475 = vadd.f32 %v6314, %v6474
        %v6476 = vpop.f32.mrf.mxu0
        %6477 = vmatprep.mubr.bf16.mxu0 %v5908
        %6478 = vmatmul.mubr.bf16.gmra.mxu0 %v5907
        %v6479 = vpop.f32.mrf.mxu0
        %v6480 = vadd.f32 %v6319, %v6479
        %v6481 = vpop.f32.mrf.mxu0
        %v6482 = vpop.f32.mrf.mxu0
        %v6483 = vadd.f32 %v6322, %v6482
        %v6484 = vpop.f32.mrf.mxu0
        %6485 = vmatprep.mubr.bf16.mxu0 %v5912
        %6486 = vmatmul.mubr.bf16.gmra.mxu0 %v5911
        %v6487 = vpop.f32.mrf.mxu0
        %v6488 = vadd.f32 %v6327, %v6487
        %v6489 = vpop.f32.mrf.mxu0
        %v6490 = vpop.f32.mrf.mxu0
        %v6491 = vadd.f32 %v6330, %v6490
        %v6492 = vpop.f32.mrf.mxu0
        %6493 = vmatprep.mubr.bf16.mxu0 %v5916
        %6494 = vmatmul.mubr.bf16.gmra.mxu0 %v5915
        %v6495 = vpop.f32.mrf.mxu0
        %v6496 = vadd.f32 %v6335, %v6495
        %v6497 = vpop.f32.mrf.mxu0
        %v6498 = vpop.f32.mrf.mxu0
        %v6499 = vadd.f32 %v6338, %v6498
        %v6500 = vpop.f32.mrf.mxu0
        %6501 = vdwg.mxu0
        %6502 = vst [vmem:[%s353] sm:$0xff] %v6376
        %6503 = vst [vmem:[%s353 + $0x8] sm:$0xff] %v6379
        %6504 = vst [vmem:[%s353 + $0x10] sm:$0xff] %v6384
        %6505 = vst [vmem:[%s353 + $0x18] sm:$0xff] %v6387
        %6506 = vst [vmem:[%s353 + $0x20] sm:$0xff] %v6392
        %6507 = vst [vmem:[%s353 + $0x28] sm:$0xff] %v6395
        %6508 = vst [vmem:[%s353 + $0x30] sm:$0xff] %v6400
        %6509 = vst [vmem:[%s353 + $0x38] sm:$0xff] %v6403
        %6510 = vst [vmem:[%s353 + $0x40] sm:$0xff] %v6408
        %6511 = vst [vmem:[%s353 + $0x48] sm:$0xff] %v6411
        %6512 = vst [vmem:[%s353 + $0x50] sm:$0xff] %v6416
        %6513 = vst [vmem:[%s353 + $0x58] sm:$0xff] %v6419
        %6514 = vst [vmem:[%s353 + $0x60] sm:$0xff] %v6424
        %6515 = vst [vmem:[%s353 + $0x68] sm:$0xff] %v6427
        %6516 = vst [vmem:[%s353 + $0x70] sm:$0xff] %v6432
        %6517 = vst [vmem:[%s353 + $0x78] sm:$0xff] %v6435
        %6518 = vst [vmem:[%s353 + $0x80] sm:$0xff] %v6440
        %6519 = vst [vmem:[%s353 + $0x88] sm:$0xff] %v6443
        %6520 = vst [vmem:[%s353 + $0x90] sm:$0xff] %v6448
        %6521 = vst [vmem:[%s353 + $0x98] sm:$0xff] %v6451
        %6522 = vst [vmem:[%s353 + $0xa0] sm:$0xff] %v6456
        %6523 = vst [vmem:[%s353 + $0xa8] sm:$0xff] %v6459
        %6524 = vst [vmem:[%s353 + $0xb0] sm:$0xff] %v6464
        %6525 = vst [vmem:[%s353 + $0xb8] sm:$0xff] %v6467
        %6526 = vst [vmem:[%s353 + $0xc0] sm:$0xff] %v6472
        %6527 = vst [vmem:[%s353 + $0xc8] sm:$0xff] %v6475
        %6528 = vst [vmem:[%s353 + $0xd0] sm:$0xff] %v6480
        %6529 = vst [vmem:[%s353 + $0xd8] sm:$0xff] %v6483
        %6530 = vst [vmem:[%s353 + $0xe0] sm:$0xff] %v6488
        %6531 = vst [vmem:[%s353 + $0xe8] sm:$0xff] %v6491
        %6532 = vst [vmem:[%s353 + $0xf0] sm:$0xff] %v6496
        %6533 = vst [vmem:[%s353 + $0xf8] sm:$0xff] %v6499
        %s6534 = sand.u32 %s186, 1
        %s6535 = scalar_lea.sflag [#allocation4], %s6534
        %s6536 = sand.u32 %s186, 1
        %s6537 = smul.addr %s6536, 256
        %s6538 = scalar_lea.vmem [#allocation11], %s6537
        // Predicated region
        $region69: #{tpu_custom_call.1} parent=47 // pred_check
          %p6539 = pneg %p196
        $region70: #{tpu_custom_call.1} parent=47 // pred_check_branch
          %6541 = sbr.rel (%p6539) target = $region72
        $region71: #{tpu_custom_call.1} parent=47 // pred_region
          %s6542 = smul.u32 32, %s26
          %s6544 = ssub.s32 4096, 4096
          %6545 = vsyncadd %s6535, %s6544
          %s6546 = smul.addr %s6542, 128
          %s6547 = scalar_lea.hbm %s7, %s6546
          %s6548 = sshll.u32 %s6538, 4
          %s6549 = int_to_ptr.vmem [resolvable:$true] %s6548
          %6554 = dma.vmem_to_hbm [thread:$0]  %s6549, 4096, %s6547, %s6535, 128, 128, 8
        $region72: #{tpu_custom_call.1} parent=47 // pred_fallthru
          _
      $region48: #{tpu_custom_call.1} parent=5 // pred_fallthru
        _
      %p6555 = scmp.le.s32.totalorder 2, %s21
      // Predicated region
      $region73: #{tpu_custom_call.1} parent=5 // pred_check
        %p6556 = pneg %p6555
      $region74: #{tpu_custom_call.1} parent=5 // pred_check_branch
        %6558 = sbr.rel (%p6556) target = $region76
      $region75: #{tpu_custom_call.1} parent=5 // pred_region
        %s6559 = ssub.s32 %s21, 2
        // Predicated region
        $region77: #{tpu_custom_call.1} parent=75 // pred_check
          %p6560 = pneg %p202
        $region78: #{tpu_custom_call.1} parent=75 // pred_check_branch
          %6562 = sbr.rel (%p6560) target = $region80
        $region79: #{tpu_custom_call.1} parent=75 // pred_region
          %s6563 = sand.u32 %s187, 1
          %s6564 = scalar_lea.sflag [#allocation4], %s6563
          %s6565 = sand.u32 %s187, 1
          %s6566 = smul.addr %s6565, 256
          %s6567 = scalar_lea.vmem [#allocation11], %s6566
          %6568 = dma.done %s6564, 4096
        $region80: #{tpu_custom_call.1} parent=75 // pred_fallthru
          _
      $region76: #{tpu_custom_call.1} parent=5 // pred_fallthru
        _
    $region6: #{tpu_custom_call.1} parent=1 // loop_footer
      %s25 = sadd.s32 1, %s21
    $region7: #{tpu_custom_call.1} parent=1 // loop_footer_branch
      %20 = sbr.rel target = $region3
    $region8: #{tpu_custom_call.1} parent=1 // loop_exit
      _
    %6569 = vsyncpa [#allocation3], 1
    %s6570 = scalar_lea.sflag [#allocation3], 1
    %6571 = vsyncpa %s6570, 1
    %6572 = vsyncpa [#allocation6], 1
    %6573 = vsyncpa [#allocation9], 1
    %6574 = vsyncpa [#allocation4], 1
    %s6575 = scalar_lea.sflag [#allocation4], 1
    %6576 = vsyncpa %s6575, 1

</llo_original>
